<compile_context>
chip_gen: v6e
topology: v6e:2x2x1
jax: 0.10.0
libtpu: 0.0.40
codegen_flags: <defaults>
</compile_context>

<pallas_src>
import functools

import jax
import jax.numpy as jnp
from jax.experimental import pallas as pl
from jax.experimental.pallas import tpu as pltpu


def _round_up(x, m):
    return ((x + m - 1) // m) * m


def _conv_out(h, k, s):
    return (h - k) // s + 1


def _choose_row_tile(M, block_m=256, multiple=16, min_tiles=2):
    """Row tile for the conv1 matmul: multiple of 16 (bf16 sublane packing),
    <= block_m, low padding waste, and >= `min_tiles` grid steps when M is
    large enough so both v7x TensorCores get work."""
    Mr = _round_up(max(M, 1), multiple)
    n_tiles = max(-(-Mr // block_m), 1)
    if Mr >= min_tiles * 4 * multiple:          # only split if tiles stay >= 64 rows
        n_tiles = max(n_tiles, min_tiles)
    tm = min(_round_up(-(-Mr // n_tiles), multiple), block_m)
    Mp = _round_up(Mr, tm)
    return tm, Mp


# ----------------------------------------------------------------------------
# Pallas kernel 1: fused  X @ W + b  (+ ReLU), bf16 inputs, f32 accumulation.
# Used for conv1's im2col matmul; emits bf16 activations.
# ----------------------------------------------------------------------------
def _matmul_bias_act_kernel(x_ref, w_ref, b_ref, o_ref, *, apply_relu):
    y = jnp.dot(x_ref[...], w_ref[...], preferred_element_type=jnp.float32)
    y = y + b_ref[...]
    if apply_relu:
        y = jnp.maximum(y, 0.0)
    o_ref[...] = y.astype(o_ref.dtype)


def matmul_bias_act(x, w, b, *, relu, out_dtype, block_m=256):
    """x: (M, K) bf16, w: (K, N) bf16, b: (1, N) f32 -> (M, N) out_dtype.
    Tiled over M with a parallel grid; weights/bias stay resident (blocks
    equal the full arrays, so no (8,128) divisibility constraints apply)."""
    M, K = x.shape
    N = w.shape[1]
    tm, Mp = _choose_row_tile(M, block_m)
    if Mp != M:
        x = jnp.pad(x, ((0, Mp - M), (0, 0)))
    out = pl.pallas_call(
        functools.partial(_matmul_bias_act_kernel, apply_relu=relu),
        out_shape=jax.ShapeDtypeStruct((Mp, N), out_dtype),
        grid_spec=pltpu.PrefetchScalarGridSpec(
            num_scalar_prefetch=0,
            grid=(Mp // tm,),
            in_specs=[
                pl.BlockSpec((tm, K), lambda i: (i, 0)),
                pl.BlockSpec((K, N), lambda i: (0, 0)),
                pl.BlockSpec((1, N), lambda i: (0, 0)),
            ],
            out_specs=pl.BlockSpec((tm, N), lambda i: (i, 0)),
        ),
        compiler_params=pltpu.CompilerParams(
            dimension_semantics=("parallel",)),
    )(x, w, b)
    return out[:M]


# ----------------------------------------------------------------------------
# Pallas kernel 2: fused tail  conv2 -> conv3 -> fc1 -> fc2  for one batch
# tile, everything resident in VMEM (no HBM round trips between layers).
# ----------------------------------------------------------------------------
def _fused_tail_kernel(p2_ref, w2_ref, b2_ref, w3_ref, b3_ref,
                       w1_ref, b1_ref, wq_ref, bq_ref, o_ref,
                       *, w2_out, h3_out, w3_out, kh3, kw3):
    n2 = p2_ref.shape[0]          # conv2 output spatial positions
    tb = p2_ref.shape[1]          # images in this batch tile
    w2m = w2_ref[...]
    b2 = b2_ref[...]
    b3 = b3_ref[...]

    # conv2: one (tb, K2) x (K2, 64) MXU matmul per output spatial position
    # over the pre-built im2col patches (no in-kernel reshapes/slices needed).
    y2 = []
    for p in range(n2):
        v = jnp.dot(p2_ref[p], w2m, preferred_element_type=jnp.float32)
        y2.append(jnp.maximum(v + b2, 0.0).astype(jnp.bfloat16))   # (tb, 64)

    # conv3 as kh3*kw3 shifted-tap matmuls (no materialized im2col), followed
    # directly by fc1 accumulation per conv3 output position.
    w3_taps = [w3_ref[k] for k in range(kh3 * kw3)]
    acc1 = jnp.zeros((tb, w1_ref.shape[-1]), jnp.float32)
    for oh in range(h3_out):
        for ow in range(w3_out):
            acc3 = jnp.zeros((tb, w3_ref.shape[-1]), jnp.float32)
            for ki in range(kh3):
                for kj in range(kw3):
                    acc3 = acc3 + jnp.dot(
                        y2[(oh + ki) * w2_out + (ow + kj)],
                        w3_taps[ki * kw3 + kj],
                        preferred_element_type=jnp.float32)
            y3 = jnp.maximum(acc3 + b3, 0.0).astype(jnp.bfloat16)   # (tb, 64)
            acc1 = acc1 + jnp.dot(y3, w1_ref[oh * w3_out + ow],
                                  preferred_element_type=jnp.float32)

    h = jnp.maximum(acc1 + b1_ref[...], 0.0).astype(jnp.bfloat16)   # (tb, 512)
    q = jnp.dot(h, wq_ref[...], preferred_element_type=jnp.float32) + bq_ref[...]
    o_ref[...] = q


def fused_tail(p2, pp, *, w2_out, h3_out, w3_out, batch_tile=16):
    """p2: (n2, B, K2) bf16 conv2 im2col patches, dim order (spatial, image, K).
    Returns (B, n_act_padded) f32 Q-values."""
    n2, B, K2 = p2.shape
    assert pp["fc1_w"].shape[0] == h3_out * w3_out, "fc1 prep / shape mismatch"
    assert pp["c2_w"].shape[0] == K2, "conv2 prep / patch mismatch"

    tb = max(16, _round_up(min(batch_tile, max(B, 1)), 16))
    Bp = _round_up(B, tb)
    if Bp != B:
        p2 = jnp.pad(p2, ((0, 0), (0, Bp - B), (0, 0)))
    nq = pp["fc2_w"].shape[1]

    kernel = functools.partial(_fused_tail_kernel, w2_out=w2_out,
                               h3_out=h3_out, w3_out=w3_out, kh3=3, kw3=3)
    out = pl.pallas_call(
        kernel,
        out_shape=jax.ShapeDtypeStruct((Bp, nq), jnp.float32),
        grid_spec=pltpu.PrefetchScalarGridSpec(
            num_scalar_prefetch=0,
            grid=(Bp // tb,),
            in_specs=[
                pl.BlockSpec((n2, tb, K2), lambda i: (0, i, 0)),
                pl.BlockSpec(pp["c2_w"].shape, lambda i: (0, 0)),
                pl.BlockSpec(pp["c2_b"].shape, lambda i: (0, 0)),
                pl.BlockSpec(pp["c3_w"].shape, lambda i: (0, 0, 0)),
                pl.BlockSpec(pp["c3_b"].shape, lambda i: (0, 0)),
                pl.BlockSpec(pp["fc1_w"].shape, lambda i: (0, 0, 0)),
                pl.BlockSpec(pp["fc1_b"].shape, lambda i: (0, 0)),
                pl.BlockSpec(pp["fc2_w"].shape, lambda i: (0, 0)),
                pl.BlockSpec(pp["fc2_b"].shape, lambda i: (0, 0)),
            ],
            out_specs=pl.BlockSpec((tb, nq), lambda i: (i, 0)),
        ),
        compiler_params=pltpu.CompilerParams(
            dimension_semantics=("parallel",)),
    )(p2, pp["c2_w"], pp["c2_b"], pp["c3_w"], pp["c3_b"],
      pp["fc1_w"], pp["fc1_b"], pp["fc2_w"], pp["fc2_b"])
    return out[:B]


# ----------------------------------------------------------------------------
# XLA wrapper glue (tiny tensors only): space-to-depth + im2col patching.
# ----------------------------------------------------------------------------
def space_to_depth(x, r):
    B, H, W, C = x.shape
    x = x.reshape(B, H // r, r, W // r, r, C)
    x = x.transpose(0, 1, 3, 2, 4, 5)
    return x.reshape(B, H // r, W // r, r * r * C)


def im2col_patches(x, kh, kw, stride):
    """x: (B, H, W, C) -> (B, Ho, Wo, kh*kw*C); columns ordered (ki, kj, c)."""
    B, H, W, C = x.shape
    Ho = _conv_out(H, kh, stride)
    Wo = _conv_out(W, kw, stride)
    slabs = []
    for i in range(kh):
        for j in range(kw):
            slabs.append(x[:, i:i + stride * (Ho - 1) + 1:stride,
                           j:j + stride * (Wo - 1) + 1:stride, :])
    p = jnp.stack(slabs, axis=3)                    # (B, Ho, Wo, kh*kw, C)
    return p.reshape(B, Ho, Wo, kh * kw * C), Ho, Wo


def conv1_forward(x_nhwc, w_mat, b, *, use_s2d, block_m):
    B = x_nhwc.shape[0]
    if use_s2d:
        xs = space_to_depth(x_nhwc, 4)              # stride-4 conv -> 2x2 stride-1
        p, Ho, Wo = im2col_patches(xs, 2, 2, 1)
    else:
        p, Ho, Wo = im2col_patches(x_nhwc, 8, 8, 4)
    p = p.reshape(B * Ho * Wo, -1)
    y = matmul_bias_act(p, w_mat, b, relu=True,
                        out_dtype=jnp.bfloat16, block_m=block_m)
    return y.reshape(B, Ho, Wo, w_mat.shape[1])


# ----------------------------------------------------------------------------
# Parameters: PyTorch-layout init + one-time layout prep (bf16, no K padding).
# ----------------------------------------------------------------------------
def dqn_init_params(key, input_shape, n_actions):
    """Deterministic init matching the PyTorch module's parameter shapes."""
    C, H, W = input_shape
    h1, w1 = _conv_out(H, 8, 4), _conv_out(W, 8, 4)
    h2, w2 = _conv_out(h1, 4, 2), _conv_out(w1, 4, 2)
    h3, w3 = _conv_out(h2, 3, 1), _conv_out(w2, 3, 1)
    flat = 64 * h3 * w3

    ks = jax.random.split(key, 10)
    std = 0.05
    return {
        "conv1_w": jax.random.normal(ks[0], (32, C, 8, 8), jnp.float32) * std,
        "conv1_b": jax.random.normal(ks[1], (32,), jnp.float32) * std,
        "conv2_w": jax.random.normal(ks[2], (64, 32, 4, 4), jnp.float32) * std,
        "conv2_b": jax.random.normal(ks[3], (64,), jnp.float32) * std,
        "conv3_w": jax.random.normal(ks[4], (64, 64, 3, 3), jnp.float32) * std,
        "conv3_b": jax.random.normal(ks[5], (64,), jnp.float32) * std,
        # fc weights stored already transposed to (in, out); fc1 row order is
        # the PyTorch NCHW-flatten order (c, h, w).
        "fc1_w": jax.random.normal(ks[6], (flat, 512), jnp.float32) * std,
        "fc1_b": jax.random.normal(ks[7], (512,), jnp.float32) * std,
        "fc2_w": jax.random.normal(ks[8], (512, n_actions), jnp.float32) * std,
        "fc2_b": jax.random.normal(ks[9], (n_actions,), jnp.float32) * std,
    }


def _prep_conv1_weight(w, b, *, scale, use_s2d):
    """(32, C, 8, 8) PyTorch weight -> (K, 32) bf16 matrix matching conv1's
    im2col column order; the x/255 scale is folded in here (in f32)."""
    O, C, KH, KW = w.shape
    w = w.astype(jnp.float32) * scale
    if use_s2d:
        # s2d channel index is (di*4 + dj)*C + c; im2col slab order is (qi, qj).
        w = w.reshape(O, C, KH // 4, 4, KW // 4, 4)      # (O, C, qi, di, qj, dj)
        w = w.transpose(2, 4, 3, 5, 1, 0)                # (qi, qj, di, dj, C, O)
        w_mat = w.reshape(-1, O)
    else:
        w_mat = w.transpose(2, 3, 1, 0).reshape(KH * KW * C, O)
    return w_mat.astype(jnp.bfloat16), b.astype(jnp.float32).reshape(1, O)


def prepare_params(params, input_shape):
    """One-time layout prep: fold x/255 into conv1 weights, match im2col and
    per-tap orderings, NO input-channel padding, bf16 matmul weights,
    f32 biases; only fc2's output N is padded to a multiple of 128."""
    C, H, W = input_shape
    h1, w1 = _conv_out(H, 8, 4), _conv_out(W, 8, 4)
    h2, w2 = _conv_out(h1, 4, 2), _conv_out(w1, 4, 2)
    h3, w3 = _conv_out(h2, 3, 1), _conv_out(w2, 3, 1)
    use_s2d = (H % 4 == 0) and (W % 4 == 0)

    c1_w, c1_b = _prep_conv1_weight(params["conv1_w"], params["conv1_b"],
                                    scale=1.0 / 255.0, use_s2d=use_s2d)

    # conv2: plain im2col weight matrix, K = 4*4*32 = 512 (no channel padding).
    w2p = params["conv2_w"].astype(jnp.float32)          # (64, 32, 4, 4)
    c2_w = w2p.transpose(2, 3, 1, 0).reshape(-1, w2p.shape[0]).astype(jnp.bfloat16)
    c2_b = params["conv2_b"].astype(jnp.float32).reshape(1, -1)

    # conv3: per-tap (kh*kw, Cin, Cout) blocks for in-kernel shifted-tap matmuls.
    w3p = params["conv3_w"].astype(jnp.float32)          # (64, 64, 3, 3)
    c3_w = w3p.transpose(2, 3, 1, 0).reshape(
        w3p.shape[2] * w3p.shape[3], w3p.shape[1], w3p.shape[0]).astype(jnp.bfloat16)
    c3_b = params["conv3_b"].astype(jnp.float32).reshape(1, -1)

    # fc1: regroup the NCHW-flatten rows (c, h3, w3) into per-(h3, w3) blocks
    # of 64 channel rows so the fused kernel consumes conv3's per-position
    # output directly (no in-kernel flatten/transpose).
    f1 = params["fc1_w"].astype(jnp.float32)             # (64*h3*w3, 512)
    f1 = f1.reshape(64, h3, w3, f1.shape[1]).transpose(1, 2, 0, 3)
    fc1_w = f1.reshape(h3 * w3, 64, f1.shape[-1]).astype(jnp.bfloat16)
    fc1_b = params["fc1_b"].astype(jnp.float32).reshape(1, -1)

    # fc2: only the final output N is padded to a lane-dense multiple of 128.
    n_act = params["fc2_w"].shape[1]
    n_pad = _round_up(n_act, 128)
    fc2_w = jnp.pad(params["fc2_w"],
                    ((0, 0), (0, n_pad - n_act))).astype(jnp.bfloat16)
    fc2_b = jnp.pad(params["fc2_b"],
                    (0, n_pad - n_act)).reshape(1, n_pad).astype(jnp.float32)

    return {"c1_w": c1_w, "c1_b": c1_b, "c2_w": c2_w, "c2_b": c2_b,
            "c3_w": c3_w, "c3_b": c3_b, "fc1_w": fc1_w, "fc1_b": fc1_b,
            "fc2_w": fc2_w, "fc2_b": fc2_b}


# ----------------------------------------------------------------------------
# Forward pass
# ----------------------------------------------------------------------------
def dqn_forward(prepped, x, *, n_actions, block_m=256, batch_tile=16):
    """x: (B, C, H, W) float32 in [0, 255] -> (B, n_actions) float32."""
    B, C, H, W = x.shape
    use_s2d = (H % 4 == 0) and (W % 4 == 0)
    # Single NCHW -> NHWC transpose; cast to bf16 right away (the /255 is
    # folded into the conv1 weights so the full 0..255 range is covered).
    x = jnp.transpose(x, (0, 2, 3, 1)).astype(jnp.bfloat16)

    # conv1: space-to-depth im2col + one Pallas matmul (bias+ReLU fused),
    # bf16 activations out, row-parallel grid.
    y1 = conv1_forward(x, prepped["c1_w"], prepped["c1_b"],
                       use_s2d=use_s2d, block_m=block_m)        # (B, h1, w1, 32)

    # conv2 im2col in the wrapper (tiny bf16 tensor), arranged (spatial,
    # image, K) so the fused kernel addresses one (tb, K) block per position.
    p2, h2, w2 = im2col_patches(y1, 4, 4, 2)                    # (B, h2, w2, 512)
    h3, w3 = _conv_out(h2, 3, 1), _conv_out(w2, 3, 1)
    p2 = jnp.transpose(p2.reshape(B, h2 * w2, -1), (1, 0, 2))   # (n2, B, 512)

    # conv2 + conv3 + fc1 + fc2 fused in one Pallas kernel over batch tiles.
    q = fused_tail(p2, prepped, w2_out=w2, h3_out=h3, w3_out=w3,
                   batch_tile=batch_tile)
    return q[:, :n_actions]


# Pure-JAX reference (f32) for a correctness sanity check.
def _reference_forward(params, x):
    y = x.astype(jnp.float32) / 255.0

    def conv(y, w, b, stride):
        out = jax.lax.conv_general_dilated(
            y, w, window_strides=(stride, stride), padding="VALID",
            dimension_numbers=("NCHW", "OIHW", "NCHW"))
        return jax.nn.relu(out + b.reshape(1, -1, 1, 1))

    y = conv(y, params["conv1_w"], params["conv1_b"], 4)
    y = conv(y, params["conv2_w"], params["conv2_b"], 2)
    y = conv(y, params["conv3_w"], params["conv3_b"], 1)
    y = y.reshape(y.shape[0], -1)
    y = jax.nn.relu(y @ params["fc1_w"] + params["fc1_b"])
    return y @ params["fc2_w"] + params["fc2_b"]


if __name__ == "__main__":
    # Small shapes consistent with the module: (C, H, W) = (4, 36, 36)
    #   conv1 (k8 s4): 36 -> 8 ; conv2 (k4 s2): 8 -> 3 ; conv3 (k3 s1): 3 -> 1
    B = 2
    input_shape = (4, 36, 36)
    n_actions = 6

    key = jax.random.PRNGKey(0)
    pkey, xkey = jax.random.split(key)
    params = dqn_init_params(pkey, input_shape, n_actions)
    prepped = prepare_params(params, input_shape)
    x = jax.random.uniform(xkey, (B,) + input_shape,
                           dtype=jnp.float32, minval=0.0, maxval=255.0)

    fwd = jax.jit(functools.partial(dqn_forward, n_actions=n_actions))
    q_values = fwd(prepped, x)
    jax.block_until_ready(q_values)

    assert q_values.shape == (B, n_actions), q_values.shape
    assert q_values.dtype == jnp.float32

    # Numerical sanity check vs. plain-JAX f32 reference (bf16 MXU inputs ->
    # generous tolerance).
    q_ref = _reference_forward(params, x)
    max_err = float(jnp.max(jnp.abs(q_values - q_ref)))
    assert max_err < 5e-2, f"max abs err vs reference: {max_err}"

    print("KERNEL_OK")
</pallas_src>

<mosaic_0001>
module attributes {stable_mosaic.version = 11 : i64} {
  func.func @_matmul_bias_act_kernel(%arg0: i32, %arg1: memref<64x256xbf16, #tpu.memory_space<vmem>>, %arg2: memref<256x32xbf16, #tpu.memory_space<vmem>>, %arg3: memref<1x32xf32, #tpu.memory_space<vmem>>, %arg4: memref<64x32xbf16, #tpu.memory_space<vmem>>) attributes {dimension_semantics = [#tpu.dimension_semantics<parallel>], iteration_bounds = array<i64: 2>, scalar_prefetch = 0 : i64, scratch_operands = 0 : i64, tpu.core_type = #tpu.core_type<tc>, window_params = [{transform_indices = @transform_0, window_bounds = array<i64: 64, 256>}, {pipeline_mode = #tpu.pipeline_mode<synchronous>, transform_indices = @transform_1, window_bounds = array<i64: 256, 32>}, {pipeline_mode = #tpu.pipeline_mode<synchronous>, transform_indices = @transform_2, window_bounds = array<i64: 1, 32>}, {transform_indices = @transform_3, window_bounds = array<i64: 64, 32>}]} {
    %c0 = arith.constant 0 : index
    %c0_0 = arith.constant 0 : index
    %0 = vector.load %arg1[%c0, %c0_0] : memref<64x256xbf16, #tpu.memory_space<vmem>>, vector<64x256xbf16>
    %c0_1 = arith.constant 0 : index
    %c0_2 = arith.constant 0 : index
    %1 = vector.load %arg2[%c0_1, %c0_2] : memref<256x32xbf16, #tpu.memory_space<vmem>>, vector<256x32xbf16>
    %cst = arith.constant dense<0.000000e+00> : vector<64x32xf32>
    %2 = tpu.matmul %0, %1, %cst {dimension_numbers = #tpu.dot_dimension_numbers<[1], [0], [0], [1], [0, 0, 1, 1], [], []>} : vector<64x256xbf16>, vector<256x32xbf16>, vector<64x32xf32> -> vector<64x32xf32>
    %c0_3 = arith.constant 0 : index
    %c0_4 = arith.constant 0 : index
    %3 = vector.load %arg3[%c0_3, %c0_4] : memref<1x32xf32, #tpu.memory_space<vmem>>, vector<1x32xf32>
    %4 = vector.broadcast %3 : vector<1x32xf32> to vector<64x32xf32>
    %5 = arith.addf %2, %4 : vector<64x32xf32>
    %cst_5 = arith.constant 0.000000e+00 : f32
    %6 = vector.broadcast %cst_5 : f32 to vector<64x32xf32>
    %7 = arith.maximumf %5, %6 : vector<64x32xf32>
    %8 = arith.truncf %7 : vector<64x32xf32> to vector<64x32xbf16>
    %c0_6 = arith.constant 0 : index
    %c0_7 = arith.constant 0 : index
    %9 = vector.load %arg4[%c0_6, %c0_7] : memref<64x32xbf16, #tpu.memory_space<vmem>>, vector<64x32xbf16>
    tpu.vector_store %arg4[%c0_6, %c0_7], %8 {strides = array<i32>} : memref<64x32xbf16, #tpu.memory_space<vmem>>, vector<64x32xbf16>,
    return
  }
  func.func @transform_0(%arg0: i32) -> (i32, i32) {
    %c0_i32 = arith.constant 0 : i32
    %c0_i32_0 = arith.constant 0 : i32
    return %arg0, %c0_i32 : i32, i32
  }
  func.func @transform_1(%arg0: i32) -> (i32, i32) {
    %c0_i32 = arith.constant 0 : i32
    %c0_i32_0 = arith.constant 0 : i32
    %c0_i32_1 = arith.constant 0 : i32
    return %c0_i32, %c0_i32_0 : i32, i32
  }
  func.func @transform_2(%arg0: i32) -> (i32, i32) {
    %c0_i32 = arith.constant 0 : i32
    %c0_i32_0 = arith.constant 0 : i32
    %c0_i32_1 = arith.constant 0 : i32
    return %c0_i32, %c0_i32_0 : i32, i32
  }
  func.func @transform_3(%arg0: i32) -> (i32, i32) {
    %c0_i32 = arith.constant 0 : i32
    %c0_i32_0 = arith.constant 0 : i32
    return %arg0, %c0_i32 : i32, i32
  }
}

module attributes {stable_mosaic.version = 11 : i64} {
  func.func @_fused_tail_kernel(%arg0: i32, %arg1: memref<9x16x512xbf16, #tpu.memory_space<vmem>>, %arg2: memref<512x64xbf16, #tpu.memory_space<vmem>>, %arg3: memref<1x64xf32, #tpu.memory_space<vmem>>, %arg4: memref<9x64x64xbf16, #tpu.memory_space<vmem>>, %arg5: memref<1x64xf32, #tpu.memory_space<vmem>>, %arg6: memref<1x64x512xbf16, #tpu.memory_space<vmem>>, %arg7: memref<1x512xf32, #tpu.memory_space<vmem>>, %arg8: memref<512x128xbf16, #tpu.memory_space<vmem>>, %arg9: memref<1x128xf32, #tpu.memory_space<vmem>>, %arg10: memref<16x128xf32, #tpu.memory_space<vmem>>) attributes {dimension_semantics = [#tpu.dimension_semantics<parallel>], iteration_bounds = array<i64: 1>, scalar_prefetch = 0 : i64, scratch_operands = 0 : i64, tpu.core_type = #tpu.core_type<tc>, window_params = [{transform_indices = @transform_0, window_bounds = array<i64: 9, 16, 512>}, {pipeline_mode = #tpu.pipeline_mode<synchronous>, transform_indices = @transform_1, window_bounds = array<i64: 512, 64>}, {pipeline_mode = #tpu.pipeline_mode<synchronous>, transform_indices = @transform_2, window_bounds = array<i64: 1, 64>}, {pipeline_mode = #tpu.pipeline_mode<synchronous>, transform_indices = @transform_3, window_bounds = array<i64: 9, 64, 64>}, {pipeline_mode = #tpu.pipeline_mode<synchronous>, transform_indices = @transform_4, window_bounds = array<i64: 1, 64>}, {pipeline_mode = #tpu.pipeline_mode<synchronous>, transform_indices = @transform_5, window_bounds = array<i64: 1, 64, 512>}, {pipeline_mode = #tpu.pipeline_mode<synchronous>, transform_indices = @transform_6, window_bounds = array<i64: 1, 512>}, {pipeline_mode = #tpu.pipeline_mode<synchronous>, transform_indices = @transform_7, window_bounds = array<i64: 512, 128>}, {pipeline_mode = #tpu.pipeline_mode<synchronous>, transform_indices = @transform_8, window_bounds = array<i64: 1, 128>}, {transform_indices = @transform_9, window_bounds = array<i64: 16, 128>}]} {
    %c0 = arith.constant 0 : index
    %c0_0 = arith.constant 0 : index
    %0 = vector.load %arg2[%c0, %c0_0] : memref<512x64xbf16, #tpu.memory_space<vmem>>, vector<512x64xbf16>
    %c0_1 = arith.constant 0 : index
    %c0_2 = arith.constant 0 : index
    %1 = vector.load %arg3[%c0_1, %c0_2] : memref<1x64xf32, #tpu.memory_space<vmem>>, vector<1x64xf32>
    %c0_3 = arith.constant 0 : index
    %c0_4 = arith.constant 0 : index
    %2 = vector.load %arg5[%c0_3, %c0_4] : memref<1x64xf32, #tpu.memory_space<vmem>>, vector<1x64xf32>
    %c0_5 = arith.constant 0 : index
    %c0_6 = arith.constant 0 : index
    %c0_7 = arith.constant 0 : index
    %3 = vector.load %arg1[%c0_5, %c0_6, %c0_7] : memref<9x16x512xbf16, #tpu.memory_space<vmem>>, vector<1x16x512xbf16>
    %4 = vector.shape_cast %3 : vector<1x16x512xbf16> to vector<16x512xbf16>
    %cst = arith.constant dense<0.000000e+00> : vector<16x64xf32>
    %5 = tpu.matmul %4, %0, %cst {dimension_numbers = #tpu.dot_dimension_numbers<[1], [0], [0], [1], [0, 0, 1, 1], [], []>} : vector<16x512xbf16>, vector<512x64xbf16>, vector<16x64xf32> -> vector<16x64xf32>
    %6 = vector.broadcast %1 : vector<1x64xf32> to vector<16x64xf32>
    %7 = arith.addf %5, %6 : vector<16x64xf32>
    %cst_8 = arith.constant 0.000000e+00 : f32
    %8 = vector.broadcast %cst_8 : f32 to vector<16x64xf32>
    %9 = arith.maximumf %7, %8 : vector<16x64xf32>
    %10 = arith.truncf %9 : vector<16x64xf32> to vector<16x64xbf16>
    %c1 = arith.constant 1 : index
    %c0_9 = arith.constant 0 : index
    %c0_10 = arith.constant 0 : index
    %11 = vector.load %arg1[%c1, %c0_9, %c0_10] : memref<9x16x512xbf16, #tpu.memory_space<vmem>>, vector<1x16x512xbf16>
    %12 = vector.shape_cast %11 : vector<1x16x512xbf16> to vector<16x512xbf16>
    %cst_11 = arith.constant dense<0.000000e+00> : vector<16x64xf32>
    %13 = tpu.matmul %12, %0, %cst_11 {dimension_numbers = #tpu.dot_dimension_numbers<[1], [0], [0], [1], [0, 0, 1, 1], [], []>} : vector<16x512xbf16>, vector<512x64xbf16>, vector<16x64xf32> -> vector<16x64xf32>
    %14 = vector.broadcast %1 : vector<1x64xf32> to vector<16x64xf32>
    %15 = arith.addf %13, %14 : vector<16x64xf32>
    %cst_12 = arith.constant 0.000000e+00 : f32
    %16 = vector.broadcast %cst_12 : f32 to vector<16x64xf32>
    %17 = arith.maximumf %15, %16 : vector<16x64xf32>
    %18 = arith.truncf %17 : vector<16x64xf32> to vector<16x64xbf16>
    %c2 = arith.constant 2 : index
    %c0_13 = arith.constant 0 : index
    %c0_14 = arith.constant 0 : index
    %19 = vector.load %arg1[%c2, %c0_13, %c0_14] : memref<9x16x512xbf16, #tpu.memory_space<vmem>>, vector<1x16x512xbf16>
    %20 = vector.shape_cast %19 : vector<1x16x512xbf16> to vector<16x512xbf16>
    %cst_15 = arith.constant dense<0.000000e+00> : vector<16x64xf32>
    %21 = tpu.matmul %20, %0, %cst_15 {dimension_numbers = #tpu.dot_dimension_numbers<[1], [0], [0], [1], [0, 0, 1, 1], [], []>} : vector<16x512xbf16>, vector<512x64xbf16>, vector<16x64xf32> -> vector<16x64xf32>
    %22 = vector.broadcast %1 : vector<1x64xf32> to vector<16x64xf32>
    %23 = arith.addf %21, %22 : vector<16x64xf32>
    %cst_16 = arith.constant 0.000000e+00 : f32
    %24 = vector.broadcast %cst_16 : f32 to vector<16x64xf32>
    %25 = arith.maximumf %23, %24 : vector<16x64xf32>
    %26 = arith.truncf %25 : vector<16x64xf32> to vector<16x64xbf16>
    %c3 = arith.constant 3 : index
    %c0_17 = arith.constant 0 : index
    %c0_18 = arith.constant 0 : index
    %27 = vector.load %arg1[%c3, %c0_17, %c0_18] : memref<9x16x512xbf16, #tpu.memory_space<vmem>>, vector<1x16x512xbf16>
    %28 = vector.shape_cast %27 : vector<1x16x512xbf16> to vector<16x512xbf16>
    %cst_19 = arith.constant dense<0.000000e+00> : vector<16x64xf32>
    %29 = tpu.matmul %28, %0, %cst_19 {dimension_numbers = #tpu.dot_dimension_numbers<[1], [0], [0], [1], [0, 0, 1, 1], [], []>} : vector<16x512xbf16>, vector<512x64xbf16>, vector<16x64xf32> -> vector<16x64xf32>
    %30 = vector.broadcast %1 : vector<1x64xf32> to vector<16x64xf32>
    %31 = arith.addf %29, %30 : vector<16x64xf32>
    %cst_20 = arith.constant 0.000000e+00 : f32
    %32 = vector.broadcast %cst_20 : f32 to vector<16x64xf32>
    %33 = arith.maximumf %31, %32 : vector<16x64xf32>
    %34 = arith.truncf %33 : vector<16x64xf32> to vector<16x64xbf16>
    %c4 = arith.constant 4 : index
    %c0_21 = arith.constant 0 : index
    %c0_22 = arith.constant 0 : index
    %35 = vector.load %arg1[%c4, %c0_21, %c0_22] : memref<9x16x512xbf16, #tpu.memory_space<vmem>>, vector<1x16x512xbf16>
    %36 = vector.shape_cast %35 : vector<1x16x512xbf16> to vector<16x512xbf16>
    %cst_23 = arith.constant dense<0.000000e+00> : vector<16x64xf32>
    %37 = tpu.matmul %36, %0, %cst_23 {dimension_numbers = #tpu.dot_dimension_numbers<[1], [0], [0], [1], [0, 0, 1, 1], [], []>} : vector<16x512xbf16>, vector<512x64xbf16>, vector<16x64xf32> -> vector<16x64xf32>
    %38 = vector.broadcast %1 : vector<1x64xf32> to vector<16x64xf32>
    %39 = arith.addf %37, %38 : vector<16x64xf32>
    %cst_24 = arith.constant 0.000000e+00 : f32
    %40 = vector.broadcast %cst_24 : f32 to vector<16x64xf32>
    %41 = arith.maximumf %39, %40 : vector<16x64xf32>
    %42 = arith.truncf %41 : vector<16x64xf32> to vector<16x64xbf16>
    %c5 = arith.constant 5 : index
    %c0_25 = arith.constant 0 : index
    %c0_26 = arith.constant 0 : index
    %43 = vector.load %arg1[%c5, %c0_25, %c0_26] : memref<9x16x512xbf16, #tpu.memory_space<vmem>>, vector<1x16x512xbf16>
    %44 = vector.shape_cast %43 : vector<1x16x512xbf16> to vector<16x512xbf16>
    %cst_27 = arith.constant dense<0.000000e+00> : vector<16x64xf32>
    %45 = tpu.matmul %44, %0, %cst_27 {dimension_numbers = #tpu.dot_dimension_numbers<[1], [0], [0], [1], [0, 0, 1, 1], [], []>} : vector<16x512xbf16>, vector<512x64xbf16>, vector<16x64xf32> -> vector<16x64xf32>
    %46 = vector.broadcast %1 : vector<1x64xf32> to vector<16x64xf32>
    %47 = arith.addf %45, %46 : vector<16x64xf32>
    %cst_28 = arith.constant 0.000000e+00 : f32
    %48 = vector.broadcast %cst_28 : f32 to vector<16x64xf32>
    %49 = arith.maximumf %47, %48 : vector<16x64xf32>
    %50 = arith.truncf %49 : vector<16x64xf32> to vector<16x64xbf16>
    %c6 = arith.constant 6 : index
    %c0_29 = arith.constant 0 : index
    %c0_30 = arith.constant 0 : index
    %51 = vector.load %arg1[%c6, %c0_29, %c0_30] : memref<9x16x512xbf16, #tpu.memory_space<vmem>>, vector<1x16x512xbf16>
    %52 = vector.shape_cast %51 : vector<1x16x512xbf16> to vector<16x512xbf16>
    %cst_31 = arith.constant dense<0.000000e+00> : vector<16x64xf32>
    %53 = tpu.matmul %52, %0, %cst_31 {dimension_numbers = #tpu.dot_dimension_numbers<[1], [0], [0], [1], [0, 0, 1, 1], [], []>} : vector<16x512xbf16>, vector<512x64xbf16>, vector<16x64xf32> -> vector<16x64xf32>
    %54 = vector.broadcast %1 : vector<1x64xf32> to vector<16x64xf32>
    %55 = arith.addf %53, %54 : vector<16x64xf32>
    %cst_32 = arith.constant 0.000000e+00 : f32
    %56 = vector.broadcast %cst_32 : f32 to vector<16x64xf32>
    %57 = arith.maximumf %55, %56 : vector<16x64xf32>
    %58 = arith.truncf %57 : vector<16x64xf32> to vector<16x64xbf16>
    %c7 = arith.constant 7 : index
    %c0_33 = arith.constant 0 : index
    %c0_34 = arith.constant 0 : index
    %59 = vector.load %arg1[%c7, %c0_33, %c0_34] : memref<9x16x512xbf16, #tpu.memory_space<vmem>>, vector<1x16x512xbf16>
    %60 = vector.shape_cast %59 : vector<1x16x512xbf16> to vector<16x512xbf16>
    %cst_35 = arith.constant dense<0.000000e+00> : vector<16x64xf32>
    %61 = tpu.matmul %60, %0, %cst_35 {dimension_numbers = #tpu.dot_dimension_numbers<[1], [0], [0], [1], [0, 0, 1, 1], [], []>} : vector<16x512xbf16>, vector<512x64xbf16>, vector<16x64xf32> -> vector<16x64xf32>
    %62 = vector.broadcast %1 : vector<1x64xf32> to vector<16x64xf32>
    %63 = arith.addf %61, %62 : vector<16x64xf32>
    %cst_36 = arith.constant 0.000000e+00 : f32
    %64 = vector.broadcast %cst_36 : f32 to vector<16x64xf32>
    %65 = arith.maximumf %63, %64 : vector<16x64xf32>
    %66 = arith.truncf %65 : vector<16x64xf32> to vector<16x64xbf16>
    %c8 = arith.constant 8 : index
    %c0_37 = arith.constant 0 : index
    %c0_38 = arith.constant 0 : index
    %67 = vector.load %arg1[%c8, %c0_37, %c0_38] : memref<9x16x512xbf16, #tpu.memory_space<vmem>>, vector<1x16x512xbf16>
    %68 = vector.shape_cast %67 : vector<1x16x512xbf16> to vector<16x512xbf16>
    %cst_39 = arith.constant dense<0.000000e+00> : vector<16x64xf32>
    %69 = tpu.matmul %68, %0, %cst_39 {dimension_numbers = #tpu.dot_dimension_numbers<[1], [0], [0], [1], [0, 0, 1, 1], [], []>} : vector<16x512xbf16>, vector<512x64xbf16>, vector<16x64xf32> -> vector<16x64xf32>
    %70 = vector.broadcast %1 : vector<1x64xf32> to vector<16x64xf32>
    %71 = arith.addf %69, %70 : vector<16x64xf32>
    %cst_40 = arith.constant 0.000000e+00 : f32
    %72 = vector.broadcast %cst_40 : f32 to vector<16x64xf32>
    %73 = arith.maximumf %71, %72 : vector<16x64xf32>
    %74 = arith.truncf %73 : vector<16x64xf32> to vector<16x64xbf16>
    %c0_41 = arith.constant 0 : index
    %c0_42 = arith.constant 0 : index
    %c0_43 = arith.constant 0 : index
    %75 = vector.load %arg4[%c0_41, %c0_42, %c0_43] : memref<9x64x64xbf16, #tpu.memory_space<vmem>>, vector<1x64x64xbf16>
    %76 = vector.shape_cast %75 : vector<1x64x64xbf16> to vector<64x64xbf16>
    %c1_44 = arith.constant 1 : index
    %c0_45 = arith.constant 0 : index
    %c0_46 = arith.constant 0 : index
    %77 = vector.load %arg4[%c1_44, %c0_45, %c0_46] : memref<9x64x64xbf16, #tpu.memory_space<vmem>>, vector<1x64x64xbf16>
    %78 = vector.shape_cast %77 : vector<1x64x64xbf16> to vector<64x64xbf16>
    %c2_47 = arith.constant 2 : index
    %c0_48 = arith.constant 0 : index
    %c0_49 = arith.constant 0 : index
    %79 = vector.load %arg4[%c2_47, %c0_48, %c0_49] : memref<9x64x64xbf16, #tpu.memory_space<vmem>>, vector<1x64x64xbf16>
    %80 = vector.shape_cast %79 : vector<1x64x64xbf16> to vector<64x64xbf16>
    %c3_50 = arith.constant 3 : index
    %c0_51 = arith.constant 0 : index
    %c0_52 = arith.constant 0 : index
    %81 = vector.load %arg4[%c3_50, %c0_51, %c0_52] : memref<9x64x64xbf16, #tpu.memory_space<vmem>>, vector<1x64x64xbf16>
    %82 = vector.shape_cast %81 : vector<1x64x64xbf16> to vector<64x64xbf16>
    %c4_53 = arith.constant 4 : index
    %c0_54 = arith.constant 0 : index
    %c0_55 = arith.constant 0 : index
    %83 = vector.load %arg4[%c4_53, %c0_54, %c0_55] : memref<9x64x64xbf16, #tpu.memory_space<vmem>>, vector<1x64x64xbf16>
    %84 = vector.shape_cast %83 : vector<1x64x64xbf16> to vector<64x64xbf16>
    %c5_56 = arith.constant 5 : index
    %c0_57 = arith.constant 0 : index
    %c0_58 = arith.constant 0 : index
    %85 = vector.load %arg4[%c5_56, %c0_57, %c0_58] : memref<9x64x64xbf16, #tpu.memory_space<vmem>>, vector<1x64x64xbf16>
    %86 = vector.shape_cast %85 : vector<1x64x64xbf16> to vector<64x64xbf16>
    %c6_59 = arith.constant 6 : index
    %c0_60 = arith.constant 0 : index
    %c0_61 = arith.constant 0 : index
    %87 = vector.load %arg4[%c6_59, %c0_60, %c0_61] : memref<9x64x64xbf16, #tpu.memory_space<vmem>>, vector<1x64x64xbf16>
    %88 = vector.shape_cast %87 : vector<1x64x64xbf16> to vector<64x64xbf16>
    %c7_62 = arith.constant 7 : index
    %c0_63 = arith.constant 0 : index
    %c0_64 = arith.constant 0 : index
    %89 = vector.load %arg4[%c7_62, %c0_63, %c0_64] : memref<9x64x64xbf16, #tpu.memory_space<vmem>>, vector<1x64x64xbf16>
    %90 = vector.shape_cast %89 : vector<1x64x64xbf16> to vector<64x64xbf16>
    %c8_65 = arith.constant 8 : index
    %c0_66 = arith.constant 0 : index
    %c0_67 = arith.constant 0 : index
    %91 = vector.load %arg4[%c8_65, %c0_66, %c0_67] : memref<9x64x64xbf16, #tpu.memory_space<vmem>>, vector<1x64x64xbf16>
    %92 = vector.shape_cast %91 : vector<1x64x64xbf16> to vector<64x64xbf16>
    %cst_68 = arith.constant 0.000000e+00 : f32
    %93 = vector.broadcast %cst_68 : f32 to vector<16x512xf32>
    %cst_69 = arith.constant 0.000000e+00 : f32
    %94 = vector.broadcast %cst_69 : f32 to vector<16x64xf32>
    %cst_70 = arith.constant dense<0.000000e+00> : vector<16x64xf32>
    %95 = tpu.matmul %10, %76, %cst_70 {dimension_numbers = #tpu.dot_dimension_numbers<[1], [0], [0], [1], [0, 0, 1, 1], [], []>} : vector<16x64xbf16>, vector<64x64xbf16>, vector<16x64xf32> -> vector<16x64xf32>
    %96 = arith.addf %94, %95 : vector<16x64xf32>
    %cst_71 = arith.constant dense<0.000000e+00> : vector<16x64xf32>
    %97 = tpu.matmul %18, %78, %cst_71 {dimension_numbers = #tpu.dot_dimension_numbers<[1], [0], [0], [1], [0, 0, 1, 1], [], []>} : vector<16x64xbf16>, vector<64x64xbf16>, vector<16x64xf32> -> vector<16x64xf32>
    %98 = arith.addf %96, %97 : vector<16x64xf32>
    %cst_72 = arith.constant dense<0.000000e+00> : vector<16x64xf32>
    %99 = tpu.matmul %26, %80, %cst_72 {dimension_numbers = #tpu.dot_dimension_numbers<[1], [0], [0], [1], [0, 0, 1, 1], [], []>} : vector<16x64xbf16>, vector<64x64xbf16>, vector<16x64xf32> -> vector<16x64xf32>
    %100 = arith.addf %98, %99 : vector<16x64xf32>
    %cst_73 = arith.constant dense<0.000000e+00> : vector<16x64xf32>
    %101 = tpu.matmul %34, %82, %cst_73 {dimension_numbers = #tpu.dot_dimension_numbers<[1], [0], [0], [1], [0, 0, 1, 1], [], []>} : vector<16x64xbf16>, vector<64x64xbf16>, vector<16x64xf32> -> vector<16x64xf32>
    %102 = arith.addf %100, %101 : vector<16x64xf32>
    %cst_74 = arith.constant dense<0.000000e+00> : vector<16x64xf32>
    %103 = tpu.matmul %42, %84, %cst_74 {dimension_numbers = #tpu.dot_dimension_numbers<[1], [0], [0], [1], [0, 0, 1, 1], [], []>} : vector<16x64xbf16>, vector<64x64xbf16>, vector<16x64xf32> -> vector<16x64xf32>
    %104 = arith.addf %102, %103 : vector<16x64xf32>
    %cst_75 = arith.constant dense<0.000000e+00> : vector<16x64xf32>
    %105 = tpu.matmul %50, %86, %cst_75 {dimension_numbers = #tpu.dot_dimension_numbers<[1], [0], [0], [1], [0, 0, 1, 1], [], []>} : vector<16x64xbf16>, vector<64x64xbf16>, vector<16x64xf32> -> vector<16x64xf32>
    %106 = arith.addf %104, %105 : vector<16x64xf32>
    %cst_76 = arith.constant dense<0.000000e+00> : vector<16x64xf32>
    %107 = tpu.matmul %58, %88, %cst_76 {dimension_numbers = #tpu.dot_dimension_numbers<[1], [0], [0], [1], [0, 0, 1, 1], [], []>} : vector<16x64xbf16>, vector<64x64xbf16>, vector<16x64xf32> -> vector<16x64xf32>
    %108 = arith.addf %106, %107 : vector<16x64xf32>
    %cst_77 = arith.constant dense<0.000000e+00> : vector<16x64xf32>
    %109 = tpu.matmul %66, %90, %cst_77 {dimension_numbers = #tpu.dot_dimension_numbers<[1], [0], [0], [1], [0, 0, 1, 1], [], []>} : vector<16x64xbf16>, vector<64x64xbf16>, vector<16x64xf32> -> vector<16x64xf32>
    %110 = arith.addf %108, %109 : vector<16x64xf32>
    %cst_78 = arith.constant dense<0.000000e+00> : vector<16x64xf32>
    %111 = tpu.matmul %74, %92, %cst_78 {dimension_numbers = #tpu.dot_dimension_numbers<[1], [0], [0], [1], [0, 0, 1, 1], [], []>} : vector<16x64xbf16>, vector<64x64xbf16>, vector<16x64xf32> -> vector<16x64xf32>
    %112 = arith.addf %110, %111 : vector<16x64xf32>
    %113 = vector.broadcast %2 : vector<1x64xf32> to vector<16x64xf32>
    %114 = arith.addf %112, %113 : vector<16x64xf32>
    %cst_79 = arith.constant 0.000000e+00 : f32
    %115 = vector.broadcast %cst_79 : f32 to vector<16x64xf32>
    %116 = arith.maximumf %114, %115 : vector<16x64xf32>
    %117 = arith.truncf %116 : vector<16x64xf32> to vector<16x64xbf16>
    %c0_80 = arith.constant 0 : index
    %c0_81 = arith.constant 0 : index
    %c0_82 = arith.constant 0 : index
    %118 = vector.load %arg6[%c0_80, %c0_81, %c0_82] : memref<1x64x512xbf16, #tpu.memory_space<vmem>>, vector<1x64x512xbf16>
    %119 = vector.shape_cast %118 : vector<1x64x512xbf16> to vector<64x512xbf16>
    %cst_83 = arith.constant dense<0.000000e+00> : vector<16x512xf32>
    %120 = tpu.matmul %117, %119, %cst_83 {dimension_numbers = #tpu.dot_dimension_numbers<[1], [0], [0], [1], [0, 0, 1, 1], [], []>} : vector<16x64xbf16>, vector<64x512xbf16>, vector<16x512xf32> -> vector<16x512xf32>
    %121 = arith.addf %93, %120 : vector<16x512xf32>
    %c0_84 = arith.constant 0 : index
    %c0_85 = arith.constant 0 : index
    %122 = vector.load %arg7[%c0_84, %c0_85] : memref<1x512xf32, #tpu.memory_space<vmem>>, vector<1x512xf32>
    %123 = vector.broadcast %122 : vector<1x512xf32> to vector<16x512xf32>
    %124 = arith.addf %121, %123 : vector<16x512xf32>
    %cst_86 = arith.constant 0.000000e+00 : f32
    %125 = vector.broadcast %cst_86 : f32 to vector<16x512xf32>
    %126 = arith.maximumf %124, %125 : vector<16x512xf32>
    %127 = arith.truncf %126 : vector<16x512xf32> to vector<16x512xbf16>
    %c0_87 = arith.constant 0 : index
    %c0_88 = arith.constant 0 : index
    %128 = vector.load %arg8[%c0_87, %c0_88] : memref<512x128xbf16, #tpu.memory_space<vmem>>, vector<512x128xbf16>
    %cst_89 = arith.constant dense<0.000000e+00> : vector<16x128xf32>
    %129 = tpu.matmul %127, %128, %cst_89 {dimension_numbers = #tpu.dot_dimension_numbers<[1], [0], [0], [1], [0, 0, 1, 1], [], []>} : vector<16x512xbf16>, vector<512x128xbf16>, vector<16x128xf32> -> vector<16x128xf32>
    %c0_90 = arith.constant 0 : index
    %c0_91 = arith.constant 0 : index
    %130 = vector.load %arg9[%c0_90, %c0_91] : memref<1x128xf32, #tpu.memory_space<vmem>>, vector<1x128xf32>
    %131 = vector.broadcast %130 : vector<1x128xf32> to vector<16x128xf32>
    %132 = arith.addf %129, %131 : vector<16x128xf32>
    %c0_92 = arith.constant 0 : index
    %c0_93 = arith.constant 0 : index
    %133 = vector.load %arg10[%c0_92, %c0_93] : memref<16x128xf32, #tpu.memory_space<vmem>>, vector<16x128xf32>
    tpu.vector_store %arg10[%c0_92, %c0_93], %132 {strides = array<i32>} : memref<16x128xf32, #tpu.memory_space<vmem>>, vector<16x128xf32>,
    return
  }
  func.func @transform_0(%arg0: i32) -> (i32, i32, i32) {
    %c0_i32 = arith.constant 0 : i32
    %c0_i32_0 = arith.constant 0 : i32
    %c0_i32_1 = arith.constant 0 : i32
    return %c0_i32, %arg0, %c0_i32_0 : i32, i32, i32
  }
  func.func @transform_1(%arg0: i32) -> (i32, i32) {
    %c0_i32 = arith.constant 0 : i32
    %c0_i32_0 = arith.constant 0 : i32
    %c0_i32_1 = arith.constant 0 : i32
    return %c0_i32, %c0_i32_0 : i32, i32
  }
  func.func @transform_2(%arg0: i32) -> (i32, i32) {
    %c0_i32 = arith.constant 0 : i32
    %c0_i32_0 = arith.constant 0 : i32
    %c0_i32_1 = arith.constant 0 : i32
    return %c0_i32, %c0_i32_0 : i32, i32
  }
  func.func @transform_3(%arg0: i32) -> (i32, i32, i32) {
    %c0_i32 = arith.constant 0 : i32
    %c0_i32_0 = arith.constant 0 : i32
    %c0_i32_1 = arith.constant 0 : i32
    %c0_i32_2 = arith.constant 0 : i32
    return %c0_i32, %c0_i32_0, %c0_i32_1 : i32, i32, i32
  }
  func.func @transform_4(%arg0: i32) -> (i32, i32) {
    %c0_i32 = arith.constant 0 : i32
    %c0_i32_0 = arith.constant 0 : i32
    %c0_i32_1 = arith.constant 0 : i32
    return %c0_i32, %c0_i32_0 : i32, i32
  }
  func.func @transform_5(%arg0: i32) -> (i32, i32, i32) {
    %c0_i32 = arith.constant 0 : i32
    %c0_i32_0 = arith.constant 0 : i32
    %c0_i32_1 = arith.constant 0 : i32
    %c0_i32_2 = arith.constant 0 : i32
    return %c0_i32, %c0_i32_0, %c0_i32_1 : i32, i32, i32
  }
  func.func @transform_6(%arg0: i32) -> (i32, i32) {
    %c0_i32 = arith.constant 0 : i32
    %c0_i32_0 = arith.constant 0 : i32
    %c0_i32_1 = arith.constant 0 : i32
    return %c0_i32, %c0_i32_0 : i32, i32
  }
  func.func @transform_7(%arg0: i32) -> (i32, i32) {
    %c0_i32 = arith.constant 0 : i32
    %c0_i32_0 = arith.constant 0 : i32
    %c0_i32_1 = arith.constant 0 : i32
    return %c0_i32, %c0_i32_0 : i32, i32
  }
  func.func @transform_8(%arg0: i32) -> (i32, i32) {
    %c0_i32 = arith.constant 0 : i32
    %c0_i32_0 = arith.constant 0 : i32
    %c0_i32_1 = arith.constant 0 : i32
    return %c0_i32, %c0_i32_0 : i32, i32
  }
  func.func @transform_9(%arg0: i32) -> (i32, i32) {
    %c0_i32 = arith.constant 0 : i32
    %c0_i32_0 = arith.constant 0 : i32
    return %arg0, %c0_i32 : i32, i32
  }
}

</mosaic_0001>

<llo_original>
// kernel: dqn_forward.2
$region0: #{dqn_forward.2}
  #allocation0 [shape = 'u32[]', space=smem, size = 0x4, offset = 0x4, fixed_abs, tag = 'smem constant byte address 0x4 - core index']
  #allocation1 [shape = 'u32[144,128]{1,0:T(1,128)}', space=vmem, size = 0x12000, scoped, tag = 'internal scratch']
  %s0 = inlined_call_operand.vmem [shape: bf16[128,256], index: 0, kind: input, shape index: {}]
  %s1 = inlined_call_operand.vmem [shape: bf16[256,32], index: 1, kind: input, shape index: {}]
  %s2 = inlined_call_operand.vmem [shape: f32[1,32], index: 2, kind: input, shape index: {}]
  %s3 = inlined_call_operand.vmem [shape: bf16[128,32], index: 3, kind: output, shape index: {}]
  %s4 = sld [smem:[#allocation0]]
  $region45: #{dqn_forward.2} parent=0
    _
  %s6 = ssub.s32 1, %s4
  %s7 = scalar_select 0, %s6, %s4
  loop: start=0, step=1, limit=4
  $region2: #{dqn_forward.2} parent=0 // loop_pre_header
    _
  $region3: #{dqn_forward.2} parent=0 // loop_header
    %s9 = sphi 0, %s13
    %p10 = scmp.ge.s32.totalorder %s9, 4
    %s19 = sphi 0, %s21
    %s22 = sphi 0, %s19
    %s23 = sphi 0, %s22
    %s39 = sphi 0, %s23
    %s43 = sphi 0, %s43
    %s45 = sphi 0, %s43
    %s46 = sphi 0, %s45
    %s60 = sphi 0, %s46
    %s64 = sphi 0, %s64
    %s66 = sphi 0, %s64
    %s67 = sphi 0, %s66
    %s81 = sphi 0, %s67
    %s87 = sphi 0, %s89
    %s90 = sphi 0, %s87
    %s91 = sphi 0, %s90
    %s107 = sphi 0, %s91
  $region4: #{dqn_forward.2} parent=0 // loop_header_branch
    %12 = sbr.rel (%p10) target = $region8
  $region5: #{dqn_forward.2} parent=0 // loop_body
    %s14 = ssub.s32 %s9, 1
    %s15 = ssub.s32 %s9, 2
    %s16 = sadd.s32 %s9, 1
    %s17 = ssub.s32 %s9, %s16
    %p18 = scmp.eq.s32.totalorder %s17, 0
    %s20 = sadd.s32 %s19, 1
    %s21 = scalar_select %p18, %s19, %s20
    %p24 = pneg %p18
    %p25 = scmp.eq.s32.totalorder %s9, 1
    %p26 = por %p24, %p25
    %p27 = scmp.ne.s32.totalorder %s19, %s22
    %p28 = scmp.eq.s32.totalorder %s9, 0
    %p29 = por %p27, %p28
    %p30 = scmp.ne.s32.totalorder %s19, %s22
    %p31 = scmp.eq.s32.totalorder %s14, 1
    %p32 = por %p30, %p31
    %p33 = scmp.ne.s32.totalorder %s22, %s23
    %p34 = scmp.eq.s32.totalorder %s14, 0
    %p35 = por %p33, %p34
    %p36 = scmp.ne.s32.totalorder %s22, %s23
    %p37 = scmp.eq.s32.totalorder %s15, 1
    %p38 = por %p36, %p37
    %p40 = scmp.ne.s32.totalorder %s23, %s39
    %p41 = scmp.eq.s32.totalorder %s15, 0
    %p42 = por %p40, %p41
    %s44 = sadd.s32 %s43, 1
    %p47 = scmp.eq.s32.totalorder %s9, 1
    %p48 = scmp.ne.s32.totalorder %s43, %s45
    %p49 = scmp.eq.s32.totalorder %s9, 0
    %p50 = por %p48, %p49
    %p51 = scmp.ne.s32.totalorder %s43, %s45
    %p52 = scmp.eq.s32.totalorder %s14, 1
    %p53 = por %p51, %p52
    %p54 = scmp.ne.s32.totalorder %s45, %s46
    %p55 = scmp.eq.s32.totalorder %s14, 0
    %p56 = por %p54, %p55
    %p57 = scmp.ne.s32.totalorder %s45, %s46
    %p58 = scmp.eq.s32.totalorder %s15, 1
    %p59 = por %p57, %p58
    %p61 = scmp.ne.s32.totalorder %s46, %s60
    %p62 = scmp.eq.s32.totalorder %s15, 0
    %p63 = por %p61, %p62
    %s65 = sadd.s32 %s64, 1
    %p68 = scmp.eq.s32.totalorder %s9, 1
    %p69 = scmp.ne.s32.totalorder %s64, %s66
    %p70 = scmp.eq.s32.totalorder %s9, 0
    %p71 = por %p69, %p70
    %p72 = scmp.ne.s32.totalorder %s64, %s66
    %p73 = scmp.eq.s32.totalorder %s14, 1
    %p74 = por %p72, %p73
    %p75 = scmp.ne.s32.totalorder %s66, %s67
    %p76 = scmp.eq.s32.totalorder %s14, 0
    %p77 = por %p75, %p76
    %p78 = scmp.ne.s32.totalorder %s66, %s67
    %p79 = scmp.eq.s32.totalorder %s15, 1
    %p80 = por %p78, %p79
    %p82 = scmp.ne.s32.totalorder %s67, %s81
    %p83 = scmp.eq.s32.totalorder %s15, 0
    %p84 = por %p82, %p83
    %s85 = ssub.s32 %s9, %s16
    %p86 = scmp.eq.s32.totalorder %s85, 0
    %s88 = sadd.s32 %s87, 1
    %s89 = scalar_select %p86, %s87, %s88
    %p92 = pneg %p86
    %p93 = scmp.eq.s32.totalorder %s9, 1
    %p94 = por %p92, %p93
    %p95 = scmp.ne.s32.totalorder %s87, %s90
    %p96 = scmp.eq.s32.totalorder %s9, 0
    %p97 = por %p95, %p96
    %p98 = scmp.ne.s32.totalorder %s87, %s90
    %p99 = scmp.eq.s32.totalorder %s14, 1
    %p100 = por %p98, %p99
    %p101 = scmp.ne.s32.totalorder %s90, %s91
    %p102 = scmp.eq.s32.totalorder %s14, 0
    %p103 = por %p101, %p102
    %p104 = scmp.ne.s32.totalorder %s90, %s91
    %p105 = scmp.eq.s32.totalorder %s15, 1
    %p106 = por %p104, %p105
    %p108 = scmp.ne.s32.totalorder %s91, %s107
    %p109 = scmp.eq.s32.totalorder %s15, 0
    %p110 = por %p108, %p109
    %p111 = scmp.le.s32.totalorder 1, %s9
    %p112 = scmp.lt.s32.totalorder %s9, 3
    %p113 = pnand %p111, %p112
    %p114 = pneg %p113
    // Predicated region
    $region9: #{dqn_forward.2} parent=5 // pred_check
      _
    $region10: #{dqn_forward.2} parent=5 // pred_check_branch
      %116 = sbr.rel (%p113) target = $region12
    $region11: #{dqn_forward.2} parent=5 // pred_region
      %s117 = ssub.s32 %s9, 1
      // Predicated region
      $region13: #{dqn_forward.2} parent=11 // pred_check
        %p118 = pneg %p56
      $region14: #{dqn_forward.2} parent=11 // pred_check_branch
        %120 = sbr.rel (%p118) target = $region16
      $region15: #{dqn_forward.2} parent=11 // pred_region
        _
      $region16: #{dqn_forward.2} parent=11 // pred_fallthru
        _
      // Predicated region
      $region17: #{dqn_forward.2} parent=11 // pred_check
        %p121 = pneg %p77
      $region18: #{dqn_forward.2} parent=11 // pred_check_branch
        %123 = sbr.rel (%p121) target = $region20
      $region19: #{dqn_forward.2} parent=11 // pred_region
        _
      $region20: #{dqn_forward.2} parent=11 // pred_fallthru
        _
    $region12: #{dqn_forward.2} parent=5 // pred_fallthru
      _
    %p124 = scmp.lt.s32.totalorder %s9, 2
    // Predicated region
    $region21: #{dqn_forward.2} parent=5 // pred_check
      %p125 = pneg %p124
    $region22: #{dqn_forward.2} parent=5 // pred_check_branch
      %127 = sbr.rel (%p125) target = $region24
    $region23: #{dqn_forward.2} parent=5 // pred_region
      // Predicated region
      $region25: #{dqn_forward.2} parent=23 // pred_check
        %p128 = pneg %p29
      $region26: #{dqn_forward.2} parent=23 // pred_check_branch
        %130 = sbr.rel (%p128) target = $region28
      $region27: #{dqn_forward.2} parent=23 // pred_region
        %s131 = smul.u32 8, %s9
        %p132 = scmp.lt.s32.totalorder %s131, 15
        %s133 = scalar_select %p132, %s131, 15
        %s134 = smul.addr %s133, 2
        %s135 = smul.addr %s134, 4
        %s136 = scalar_lea.vmem %s0, %s135
        %s137 = smul.u32 8, %s9
      $region28: #{dqn_forward.2} parent=23 // pred_fallthru
        _
    $region24: #{dqn_forward.2} parent=5 // pred_fallthru
      _
    %p138 = scmp.le.s32.totalorder 1, %s9
    %p139 = scmp.lt.s32.totalorder %s9, 3
    %p140 = pnand %p138, %p139
    %p141 = pneg %p140
    // Predicated region
    $region29: #{dqn_forward.2} parent=5 // pred_check
      _
    $region30: #{dqn_forward.2} parent=5 // pred_check_branch
      %143 = sbr.rel (%p140) target = $region32
    $region31: #{dqn_forward.2} parent=5 // pred_region
      %s144 = ssub.s32 %s9, 1
      %s145 = smul.u32 8, %s14
      %p146 = scmp.lt.s32.totalorder %s145, 15
      %s147 = scalar_select %p146, %s145, 15
      %s148 = smul.addr %s147, 2
      %s149 = smul.addr %s148, 4
      %s150 = scalar_lea.vmem %s0, %s149
      %p151 = pneg %p35
      %p152 = pneg %p32
      %p153 = pneg %p56
      %p154 = pneg %p53
      %p155 = pneg %p77
      %p156 = pneg %p74
      %p157 = pneg %p103
      %p158 = pneg %p100
      %s159 = smul.u32 8, %s14
      %p160 = scmp.lt.s32.totalorder %s159, 15
      %s161 = scalar_select %p160, %s159, 15
      %s162 = smul.addr %s161, 4
      %s163 = scalar_lea.vmem %s3, %s162
      %s164 = smul.u32 8, %s14
      %p165 = scmp.lt.s32.totalorder %s164, 15
      %s166 = scalar_select %p165, %s164, 15
      %s167 = smul.addr %s166, 2
      %s168 = smul.addr %s167, 4
      %s169 = scalar_lea.vmem %s0, %s168
      %s170 = smul.u32 8, %s14
      %s171 = smul.u32 8, %s14
      %p172 = scmp.lt.s32.totalorder %s171, 15
      %s173 = scalar_select %p172, %s171, 15
      %s174 = smul.addr %s173, 4
      %s175 = scalar_lea.vmem %s3, %s174
      %s176 = smul.u32 8, %s14
      %v178 = vld [vmem:[%s169] sm:$0xff]
      %v179 = vld [vmem:[%s169 + $0x8] sm:$0xff]
      %v180 = vld [vmem:[%s169 + $0x10] sm:$0xff]
      %v181 = vld [vmem:[%s169 + $0x18] sm:$0xff]
      %v182 = vld [vmem:[%s169 + $0x20] sm:$0xff]
      %v183 = vld [vmem:[%s169 + $0x28] sm:$0xff]
      %v184 = vld [vmem:[%s169 + $0x30] sm:$0xff]
      %v185 = vld [vmem:[%s169 + $0x38] sm:$0xff]
      %v186 = vld [vmem:[%s1] sm:$0xf]
      %v187 = vld [vmem:[%s1 + $0x4] sm:$0xf]
      %v188 = vld [vmem:[%s1 + $0x8] sm:$0xf]
      %v189 = vld [vmem:[%s1 + $0xc] sm:$0xf]
      %v190 = vld [vmem:[%s1 + $0x10] sm:$0xf]
      %v191 = vld [vmem:[%s1 + $0x14] sm:$0xf]
      %v192 = vld [vmem:[%s1 + $0x18] sm:$0xf]
      %v193 = vld [vmem:[%s1 + $0x1c] sm:$0xf]
      %v194 = vld [vmem:[%s1 + $0x20] sm:$0xf]
      %v195 = vld [vmem:[%s1 + $0x24] sm:$0xf]
      %v196 = vld [vmem:[%s1 + $0x28] sm:$0xf]
      %v197 = vld [vmem:[%s1 + $0x2c] sm:$0xf]
      %v198 = vld [vmem:[%s1 + $0x30] sm:$0xf]
      %v199 = vld [vmem:[%s1 + $0x34] sm:$0xf]
      %v200 = vld [vmem:[%s1 + $0x38] sm:$0xf]
      %v201 = vld [vmem:[%s1 + $0x3c] sm:$0xf]
      %v202 = vld [vmem:[%s1 + $0x40] sm:$0xf]
      %v203 = vld [vmem:[%s1 + $0x44] sm:$0xf]
      %v204 = vld [vmem:[%s1 + $0x48] sm:$0xf]
      %v205 = vld [vmem:[%s1 + $0x4c] sm:$0xf]
      %v206 = vld [vmem:[%s1 + $0x50] sm:$0xf]
      %v207 = vld [vmem:[%s1 + $0x54] sm:$0xf]
      %v208 = vld [vmem:[%s1 + $0x58] sm:$0xf]
      %v209 = vld [vmem:[%s1 + $0x5c] sm:$0xf]
      %v210 = vld [vmem:[%s1 + $0x60] sm:$0xf]
      %v211 = vld [vmem:[%s1 + $0x64] sm:$0xf]
      %v212 = vld [vmem:[%s1 + $0x68] sm:$0xf]
      %v213 = vld [vmem:[%s1 + $0x6c] sm:$0xf]
      %v214 = vld [vmem:[%s1 + $0x70] sm:$0xf]
      %v215 = vld [vmem:[%s1 + $0x74] sm:$0xf]
      %v216 = vld [vmem:[%s1 + $0x78] sm:$0xf]
      %v217 = vld [vmem:[%s1 + $0x7c] sm:$0xf]
      %v218 = vld [vmem:[%s2] sm:$0x1]
      %v220 = vlaneseq
      %v221 = vshrl.u32 %v220, 7
      %v222 = vsub.s32 0, %v221
      %v223 = vrot.slane %v218, %v222
      %v233 = vunpack.c.l.b16 %v178
      %v234 = vunpack.c.h.b16 %v178
      %v235 = vunpack.c.l.b16 %v179
      %v236 = vunpack.c.h.b16 %v179
      %v237 = vunpack.c.l.b16 %v180
      %v238 = vunpack.c.h.b16 %v180
      %v239 = vunpack.c.l.b16 %v181
      %v240 = vunpack.c.h.b16 %v181
      %v241 = vunpack.c.l.b16 %v182
      %v242 = vunpack.c.h.b16 %v182
      %v243 = vunpack.c.l.b16 %v183
      %v244 = vunpack.c.h.b16 %v183
      %v245 = vunpack.c.l.b16 %v184
      %v246 = vunpack.c.h.b16 %v184
      %v247 = vunpack.c.l.b16 %v185
      %v248 = vunpack.c.h.b16 %v185
      %v249 = vpack.c.b16 %v235, %v233
      %v250 = vpack.c.b16 %v236, %v234
      %v251 = vpack.c.b16 %v239, %v237
      %v252 = vpack.c.b16 %v240, %v238
      %v253 = vpack.c.b16 %v243, %v241
      %v254 = vpack.c.b16 %v244, %v242
      %v255 = vpack.c.b16 %v247, %v245
      %v256 = vpack.c.b16 %v248, %v246
      %v297 = vunpack.c.l.b16 %v186
      %v298 = vunpack.c.l.b16 %v187
      %v299 = vunpack.c.l.b16 %v188
      %v300 = vunpack.c.l.b16 %v189
      %v301 = vunpack.c.l.b16 %v190
      %v302 = vunpack.c.l.b16 %v191
      %v303 = vunpack.c.l.b16 %v192
      %v304 = vunpack.c.l.b16 %v193
      %v305 = vunpack.c.l.b16 %v194
      %v306 = vunpack.c.l.b16 %v195
      %v307 = vunpack.c.l.b16 %v196
      %v308 = vunpack.c.l.b16 %v197
      %v309 = vunpack.c.l.b16 %v198
      %v310 = vunpack.c.l.b16 %v199
      %v311 = vunpack.c.l.b16 %v200
      %v312 = vunpack.c.l.b16 %v201
      %v313 = vunpack.c.l.b16 %v202
      %v314 = vunpack.c.l.b16 %v203
      %v315 = vunpack.c.l.b16 %v204
      %v316 = vunpack.c.l.b16 %v205
      %v317 = vunpack.c.l.b16 %v206
      %v318 = vunpack.c.l.b16 %v207
      %v319 = vunpack.c.l.b16 %v208
      %v320 = vunpack.c.l.b16 %v209
      %v321 = vunpack.c.l.b16 %v210
      %v322 = vunpack.c.l.b16 %v211
      %v323 = vunpack.c.l.b16 %v212
      %v324 = vunpack.c.l.b16 %v213
      %v325 = vunpack.c.l.b16 %v214
      %v326 = vunpack.c.l.b16 %v215
      %v327 = vunpack.c.l.b16 %v216
      %v328 = vunpack.c.l.b16 %v217
      %v329 = vpack.c.b16 %v298, %v297
      %v330 = vpack.c.b16 %v300, %v299
      %v331 = vpack.c.b16 %v302, %v301
      %v332 = vpack.c.b16 %v304, %v303
      %v333 = vpack.c.b16 %v306, %v305
      %v334 = vpack.c.b16 %v308, %v307
      %v335 = vpack.c.b16 %v310, %v309
      %v336 = vpack.c.b16 %v312, %v311
      %v337 = vpack.c.b16 %v314, %v313
      %v338 = vpack.c.b16 %v316, %v315
      %v339 = vpack.c.b16 %v318, %v317
      %v340 = vpack.c.b16 %v320, %v319
      %v341 = vpack.c.b16 %v322, %v321
      %v342 = vpack.c.b16 %v324, %v323
      %v343 = vpack.c.b16 %v326, %v325
      %v344 = vpack.c.b16 %v328, %v327
      %361 = vmatprep.subr.bf16.mxu0 0
      %362 = vmatpush1.bf16.msra.mxu0 %v336
      %363 = vmatprep.subr.bf16.mxu0 0
      %364 = vmatpush1.bf16.msra.mxu0 %v335
      %365 = vmatprep.subr.bf16.mxu0 0
      %366 = vmatpush1.bf16.msra.mxu0 %v334
      %367 = vmatprep.subr.bf16.mxu0 0
      %368 = vmatpush1.bf16.msra.mxu0 %v333
      %369 = vmatprep.subr.bf16.mxu0 0
      %370 = vmatpush1.bf16.msra.mxu0 %v332
      %371 = vmatprep.subr.bf16.mxu0 0
      %372 = vmatpush1.bf16.msra.mxu0 %v331
      %373 = vmatprep.subr.bf16.mxu0 0
      %374 = vmatpush1.bf16.msra.mxu0 %v330
      %375 = vmatprep.subr.bf16.mxu0 0
      %376 = vmatpush1.bf16.msra.mxu0 %v329
      %377 = vmatprep.subr.bf16.mxu0 0
      %378 = vmatpush2.bf16.msra.mxu0 %v344
      %379 = vmatprep.subr.bf16.mxu0 0
      %380 = vmatpush2.bf16.msra.mxu0 %v343
      %381 = vmatprep.subr.bf16.mxu0 0
      %382 = vmatpush2.bf16.msra.mxu0 %v342
      %383 = vmatprep.subr.bf16.mxu0 0
      %384 = vmatpush2.bf16.msra.mxu0 %v341
      %385 = vmatprep.subr.bf16.mxu0 0
      %386 = vmatpush2.bf16.msra.mxu0 %v340
      %387 = vmatprep.subr.bf16.mxu0 0
      %388 = vmatpush2.bf16.msra.mxu0 %v339
      %389 = vmatprep.subr.bf16.mxu0 0
      %390 = vmatpush2.bf16.msra.mxu0 %v338
      %391 = vmatprep.subr.bf16.mxu0 0
      %392 = vmatpush2.bf16.msra.mxu0 %v337
      %393 = vmatprep.mubr.bf16.mxu0 %v250
      %394 = vmatmul.mubr.bf16.gmra.mxu0 %v249
      %v395 = vpop.f32.mrf.mxu0
      %v396 = vadd.f32 %v223, %v395
      %v397 = vpop.f32.mrf.mxu0
      %v398 = vpop.f32.mrf.mxu0
      %v399 = vadd.f32 %v223, %v398
      %v400 = vpop.f32.mrf.mxu0
      %401 = vmatprep.mubr.bf16.mxu0 %v252
      %402 = vmatmul.mubr.bf16.gmra.mxu0 %v251
      %v403 = vpop.f32.mrf.mxu0
      %v404 = vadd.f32 %v223, %v403
      %v405 = vpop.f32.mrf.mxu0
      %v406 = vpop.f32.mrf.mxu0
      %v407 = vadd.f32 %v223, %v406
      %v408 = vpop.f32.mrf.mxu0
      %409 = vmatprep.mubr.bf16.mxu0 %v254
      %410 = vmatmul.mubr.bf16.gmra.mxu0 %v253
      %v411 = vpop.f32.mrf.mxu0
      %v412 = vadd.f32 %v223, %v411
      %v413 = vpop.f32.mrf.mxu0
      %v414 = vpop.f32.mrf.mxu0
      %v415 = vadd.f32 %v223, %v414
      %v416 = vpop.f32.mrf.mxu0
      %417 = vmatprep.mubr.bf16.mxu0 %v256
      %418 = vmatmul.mubr.bf16.gmra.mxu0 %v255
      %v419 = vpop.f32.mrf.mxu0
      %v420 = vadd.f32 %v223, %v419
      %v421 = vpop.f32.mrf.mxu0
      %v422 = vpop.f32.mrf.mxu0
      %v423 = vadd.f32 %v223, %v422
      %v424 = vpop.f32.mrf.mxu0
      %425 = vdwg.mxu0
      %v426 = vmax.f32 %v396, 0.0
      %v427 = vmax.f32 %v399, 0.0
      %v428 = vmax.f32 %v404, 0.0
      %v429 = vmax.f32 %v407, 0.0
      %v430 = vmax.f32 %v412, 0.0
      %v431 = vmax.f32 %v415, 0.0
      %v432 = vmax.f32 %v420, 0.0
      %v433 = vmax.f32 %v423, 0.0
      %v434 = vpack.c.bf16 %v427, %v426
      %v435 = vpack.c.bf16 %v429, %v428
      %v436 = vpack.c.bf16 %v431, %v430
      %v437 = vpack.c.bf16 %v433, %v432
      %v442 = vunpack.c.l.b16 %v434
      %v443 = vunpack.c.h.b16 %v434
      %v444 = vunpack.c.l.b16 %v435
      %v445 = vunpack.c.h.b16 %v435
      %v446 = vunpack.c.l.b16 %v436
      %v447 = vunpack.c.h.b16 %v436
      %v448 = vunpack.c.l.b16 %v437
      %v449 = vunpack.c.h.b16 %v437
      %v450 = vpack.c.b16 %v442, %v442
      %v451 = vpack.c.b16 %v443, %v443
      %v452 = vpack.c.b16 %v444, %v444
      %v453 = vpack.c.b16 %v445, %v445
      %v454 = vpack.c.b16 %v446, %v446
      %v455 = vpack.c.b16 %v447, %v447
      %v456 = vpack.c.b16 %v448, %v448
      %v457 = vpack.c.b16 %v449, %v449
      %vm466 = vcmask 257024
      %467 = vst.msk [vmem:[%s175] sm:$0xf] %vm466, %v450
      %468 = vst.msk [vmem:[%s175 + $0x4] sm:$0xf] %vm466, %v451
      %469 = vst.msk [vmem:[%s175 + $0x8] sm:$0xf] %vm466, %v452
      %470 = vst.msk [vmem:[%s175 + $0xc] sm:$0xf] %vm466, %v453
      %471 = vst.msk [vmem:[%s175 + $0x10] sm:$0xf] %vm466, %v454
      %472 = vst.msk [vmem:[%s175 + $0x14] sm:$0xf] %vm466, %v455
      %473 = vst.msk [vmem:[%s175 + $0x18] sm:$0xf] %vm466, %v456
      %474 = vst.msk [vmem:[%s175 + $0x1c] sm:$0xf] %vm466, %v457
      %s475 = smul.u32 8, %s14
      %p476 = scmp.lt.s32.totalorder %s475, 15
      %s477 = scalar_select %p476, %s475, 15
      %s478 = smul.addr %s477, 4
      %s479 = scalar_lea.vmem %s3, %s478
      // Predicated region
      $region33: #{dqn_forward.2} parent=31 // pred_check
        %p480 = pneg %p100
      $region34: #{dqn_forward.2} parent=31 // pred_check_branch
        %482 = sbr.rel (%p480) target = $region36
      $region35: #{dqn_forward.2} parent=31 // pred_region
        %s483 = smul.u32 8, %s14
      $region36: #{dqn_forward.2} parent=31 // pred_fallthru
        _
    $region32: #{dqn_forward.2} parent=5 // pred_fallthru
      _
    %p484 = scmp.le.s32.totalorder 2, %s9
    // Predicated region
    $region37: #{dqn_forward.2} parent=5 // pred_check
      %p485 = pneg %p484
    $region38: #{dqn_forward.2} parent=5 // pred_check_branch
      %487 = sbr.rel (%p485) target = $region40
    $region39: #{dqn_forward.2} parent=5 // pred_region
      %s488 = ssub.s32 %s9, 2
      // Predicated region
      $region41: #{dqn_forward.2} parent=39 // pred_check
        %p489 = pneg %p106
      $region42: #{dqn_forward.2} parent=39 // pred_check_branch
        %491 = sbr.rel (%p489) target = $region44
      $region43: #{dqn_forward.2} parent=39 // pred_region
        %s492 = smul.u32 8, %s15
        %p493 = scmp.lt.s32.totalorder %s492, 15
        %s494 = scalar_select %p493, %s492, 15
        %s495 = smul.addr %s494, 4
        %s496 = scalar_lea.vmem %s3, %s495
      $region44: #{dqn_forward.2} parent=39 // pred_fallthru
        _
    $region40: #{dqn_forward.2} parent=5 // pred_fallthru
      _
  $region6: #{dqn_forward.2} parent=0 // loop_footer
    %s13 = sadd.s32 1, %s9
  $region7: #{dqn_forward.2} parent=0 // loop_footer_branch
    %8 = sbr.rel target = $region3
  $region8: #{dqn_forward.2} parent=0 // loop_exit
    _

// kernel: dqn_forward.3
$region0: #{dqn_forward.3}
  #allocation0 [shape = 'u32[]', space=smem, size = 0x4, offset = 0x4, fixed_abs, tag = 'smem constant byte address 0x4 - core index']
  #allocation1 [shape = 'u32[144,128]{1,0:T(1,128)}', space=vmem, size = 0x12000, scoped, tag = 'internal scratch']
  %s0 = inlined_call_operand.vmem [shape: bf16[9,16,512], index: 0, kind: input, shape index: {}]
  %s1 = inlined_call_operand.vmem [shape: bf16[512,64], index: 1, kind: input, shape index: {}]
  %s2 = inlined_call_operand.vmem [shape: f32[1,64], index: 2, kind: input, shape index: {}]
  %s3 = inlined_call_operand.vmem [shape: bf16[9,64,64], index: 3, kind: input, shape index: {}]
  %s4 = inlined_call_operand.vmem [shape: f32[1,64], index: 4, kind: input, shape index: {}]
  %s5 = inlined_call_operand.vmem [shape: bf16[1,64,512], index: 5, kind: input, shape index: {}]
  %s6 = inlined_call_operand.vmem [shape: f32[1,512], index: 6, kind: input, shape index: {}]
  %s7 = inlined_call_operand.vmem [shape: bf16[512,128], index: 7, kind: input, shape index: {}]
  %s8 = inlined_call_operand.vmem [shape: f32[1,128], index: 8, kind: input, shape index: {}]
  %s9 = inlined_call_operand.vmem [shape: f32[16,128], index: 9, kind: output, shape index: {}]
  %s10 = sld [smem:[#allocation0]]
  $region46: #{dqn_forward.3} parent=0
    _
  %s12 = ssub.s32 1, %s10
  %s13 = scalar_select 0, %s12, %s10
  // Predicated region
  $region2: #{dqn_forward.3} parent=0 // pred_check
    _
  $region3: #{dqn_forward.3} parent=0 // pred_check_branch
    %15 = sbr.rel (0) target = $region5
  $region4: #{dqn_forward.3} parent=0 // pred_region
    _
  $region5: #{dqn_forward.3} parent=0 // pred_fallthru
    _
  // Predicated region
  $region6: #{dqn_forward.3} parent=0 // pred_check
    _
  $region7: #{dqn_forward.3} parent=0 // pred_check_branch
    %17 = sbr.rel (0) target = $region9
  $region8: #{dqn_forward.3} parent=0 // pred_region
    _
  $region9: #{dqn_forward.3} parent=0 // pred_fallthru
    _
  // Predicated region
  $region10: #{dqn_forward.3} parent=0 // pred_check
    _
  $region11: #{dqn_forward.3} parent=0 // pred_check_branch
    %19 = sbr.rel (0) target = $region13
  $region12: #{dqn_forward.3} parent=0 // pred_region
    _
  $region13: #{dqn_forward.3} parent=0 // pred_fallthru
    _
  // Predicated region
  $region14: #{dqn_forward.3} parent=0 // pred_check
    _
  $region15: #{dqn_forward.3} parent=0 // pred_check_branch
    %21 = sbr.rel (0) target = $region17
  $region16: #{dqn_forward.3} parent=0 // pred_region
    _
  $region17: #{dqn_forward.3} parent=0 // pred_fallthru
    _
  // Predicated region
  $region18: #{dqn_forward.3} parent=0 // pred_check
    _
  $region19: #{dqn_forward.3} parent=0 // pred_check_branch
    %23 = sbr.rel (0) target = $region21
  $region20: #{dqn_forward.3} parent=0 // pred_region
    _
  $region21: #{dqn_forward.3} parent=0 // pred_fallthru
    _
  // Predicated region
  $region22: #{dqn_forward.3} parent=0 // pred_check
    _
  $region23: #{dqn_forward.3} parent=0 // pred_check_branch
    %25 = sbr.rel (0) target = $region25
  $region24: #{dqn_forward.3} parent=0 // pred_region
    _
  $region25: #{dqn_forward.3} parent=0 // pred_fallthru
    _
  // Predicated region
  $region26: #{dqn_forward.3} parent=0 // pred_check
    _
  $region27: #{dqn_forward.3} parent=0 // pred_check_branch
    %27 = sbr.rel (0) target = $region29
  $region28: #{dqn_forward.3} parent=0 // pred_region
    _
  $region29: #{dqn_forward.3} parent=0 // pred_fallthru
    _
  // Predicated region
  $region30: #{dqn_forward.3} parent=0 // pred_check
    _
  $region31: #{dqn_forward.3} parent=0 // pred_check_branch
    %29 = sbr.rel (0) target = $region33
  $region32: #{dqn_forward.3} parent=0 // pred_region
    _
  $region33: #{dqn_forward.3} parent=0 // pred_fallthru
    _
  // Predicated region
  $region34: #{dqn_forward.3} parent=0 // pred_check
    _
  $region35: #{dqn_forward.3} parent=0 // pred_check_branch
    %31 = sbr.rel (0) target = $region37
  $region36: #{dqn_forward.3} parent=0 // pred_region
    _
  $region37: #{dqn_forward.3} parent=0 // pred_fallthru
    _
  %v33 = vld [vmem:[%s1] sm:$0xf]
  %v34 = vld [vmem:[%s1 + $0x4] sm:$0xf]
  %v35 = vld [vmem:[%s1 + $0x8] sm:$0xf]
  %v36 = vld [vmem:[%s1 + $0xc] sm:$0xf]
  %v37 = vld [vmem:[%s1 + $0x10] sm:$0xf]
  %v38 = vld [vmem:[%s1 + $0x14] sm:$0xf]
  %v39 = vld [vmem:[%s1 + $0x18] sm:$0xf]
  %v40 = vld [vmem:[%s1 + $0x1c] sm:$0xf]
  %v41 = vld [vmem:[%s1 + $0x20] sm:$0xf]
  %v42 = vld [vmem:[%s1 + $0x24] sm:$0xf]
  %v43 = vld [vmem:[%s1 + $0x28] sm:$0xf]
  %v44 = vld [vmem:[%s1 + $0x2c] sm:$0xf]
  %v45 = vld [vmem:[%s1 + $0x30] sm:$0xf]
  %v46 = vld [vmem:[%s1 + $0x34] sm:$0xf]
  %v47 = vld [vmem:[%s1 + $0x38] sm:$0xf]
  %v48 = vld [vmem:[%s1 + $0x3c] sm:$0xf]
  %v49 = vld [vmem:[%s1 + $0x40] sm:$0xf]
  %v50 = vld [vmem:[%s1 + $0x44] sm:$0xf]
  %v51 = vld [vmem:[%s1 + $0x48] sm:$0xf]
  %v52 = vld [vmem:[%s1 + $0x4c] sm:$0xf]
  %v53 = vld [vmem:[%s1 + $0x50] sm:$0xf]
  %v54 = vld [vmem:[%s1 + $0x54] sm:$0xf]
  %v55 = vld [vmem:[%s1 + $0x58] sm:$0xf]
  %v56 = vld [vmem:[%s1 + $0x5c] sm:$0xf]
  %v57 = vld [vmem:[%s1 + $0x60] sm:$0xf]
  %v58 = vld [vmem:[%s1 + $0x64] sm:$0xf]
  %v59 = vld [vmem:[%s1 + $0x68] sm:$0xf]
  %v60 = vld [vmem:[%s1 + $0x6c] sm:$0xf]
  %v61 = vld [vmem:[%s1 + $0x70] sm:$0xf]
  %v62 = vld [vmem:[%s1 + $0x74] sm:$0xf]
  %v63 = vld [vmem:[%s1 + $0x78] sm:$0xf]
  %v64 = vld [vmem:[%s1 + $0x7c] sm:$0xf]
  %v65 = vld [vmem:[%s1 + $0x80] sm:$0xf]
  %v66 = vld [vmem:[%s1 + $0x84] sm:$0xf]
  %v67 = vld [vmem:[%s1 + $0x88] sm:$0xf]
  %v68 = vld [vmem:[%s1 + $0x8c] sm:$0xf]
  %v69 = vld [vmem:[%s1 + $0x90] sm:$0xf]
  %v70 = vld [vmem:[%s1 + $0x94] sm:$0xf]
  %v71 = vld [vmem:[%s1 + $0x98] sm:$0xf]
  %v72 = vld [vmem:[%s1 + $0x9c] sm:$0xf]
  %v73 = vld [vmem:[%s1 + $0xa0] sm:$0xf]
  %v74 = vld [vmem:[%s1 + $0xa4] sm:$0xf]
  %v75 = vld [vmem:[%s1 + $0xa8] sm:$0xf]
  %v76 = vld [vmem:[%s1 + $0xac] sm:$0xf]
  %v77 = vld [vmem:[%s1 + $0xb0] sm:$0xf]
  %v78 = vld [vmem:[%s1 + $0xb4] sm:$0xf]
  %v79 = vld [vmem:[%s1 + $0xb8] sm:$0xf]
  %v80 = vld [vmem:[%s1 + $0xbc] sm:$0xf]
  %v81 = vld [vmem:[%s1 + $0xc0] sm:$0xf]
  %v82 = vld [vmem:[%s1 + $0xc4] sm:$0xf]
  %v83 = vld [vmem:[%s1 + $0xc8] sm:$0xf]
  %v84 = vld [vmem:[%s1 + $0xcc] sm:$0xf]
  %v85 = vld [vmem:[%s1 + $0xd0] sm:$0xf]
  %v86 = vld [vmem:[%s1 + $0xd4] sm:$0xf]
  %v87 = vld [vmem:[%s1 + $0xd8] sm:$0xf]
  %v88 = vld [vmem:[%s1 + $0xdc] sm:$0xf]
  %v89 = vld [vmem:[%s1 + $0xe0] sm:$0xf]
  %v90 = vld [vmem:[%s1 + $0xe4] sm:$0xf]
  %v91 = vld [vmem:[%s1 + $0xe8] sm:$0xf]
  %v92 = vld [vmem:[%s1 + $0xec] sm:$0xf]
  %v93 = vld [vmem:[%s1 + $0xf0] sm:$0xf]
  %v94 = vld [vmem:[%s1 + $0xf4] sm:$0xf]
  %v95 = vld [vmem:[%s1 + $0xf8] sm:$0xf]
  %v96 = vld [vmem:[%s1 + $0xfc] sm:$0xf]
  %v97 = vld [vmem:[%s2] sm:$0x1]
  %v98 = vld [vmem:[%s4] sm:$0x1]
  %v99 = vld [vmem:[%s0] sm:$0xff]
  %v100 = vld [vmem:[%s0 + $0x8] sm:$0xff]
  %v101 = vld [vmem:[%s0 + $0x10] sm:$0xff]
  %v102 = vld [vmem:[%s0 + $0x18] sm:$0xff]
  %v104 = vlaneseq
  %v105 = vshrl.u32 %v104, 7
  %v106 = vsub.s32 0, %v105
  %v107 = vrot.slane %v97, %v106
  %v113 = vunpack.c.l.b16 %v99
  %v114 = vunpack.c.h.b16 %v99
  %v115 = vunpack.c.l.b16 %v100
  %v116 = vunpack.c.h.b16 %v100
  %v117 = vunpack.c.l.b16 %v101
  %v118 = vunpack.c.h.b16 %v101
  %v119 = vunpack.c.l.b16 %v102
  %v120 = vunpack.c.h.b16 %v102
  %v121 = vpack.c.b16 %v117, %v113
  %v122 = vpack.c.b16 %v118, %v114
  %v123 = vpack.c.b16 %v119, %v115
  %v124 = vpack.c.b16 %v120, %v116
  %v193 = vunpack.c.l.b16 %v33
  %v194 = vunpack.c.l.b16 %v34
  %v195 = vunpack.c.l.b16 %v35
  %v196 = vunpack.c.l.b16 %v36
  %v197 = vunpack.c.l.b16 %v37
  %v198 = vunpack.c.l.b16 %v38
  %v199 = vunpack.c.l.b16 %v39
  %v200 = vunpack.c.l.b16 %v40
  %v201 = vunpack.c.l.b16 %v41
  %v202 = vunpack.c.l.b16 %v42
  %v203 = vunpack.c.l.b16 %v43
  %v204 = vunpack.c.l.b16 %v44
  %v205 = vunpack.c.l.b16 %v45
  %v206 = vunpack.c.l.b16 %v46
  %v207 = vunpack.c.l.b16 %v47
  %v208 = vunpack.c.l.b16 %v48
  %v209 = vunpack.c.l.b16 %v49
  %v210 = vunpack.c.l.b16 %v50
  %v211 = vunpack.c.l.b16 %v51
  %v212 = vunpack.c.l.b16 %v52
  %v213 = vunpack.c.l.b16 %v53
  %v214 = vunpack.c.l.b16 %v54
  %v215 = vunpack.c.l.b16 %v55
  %v216 = vunpack.c.l.b16 %v56
  %v217 = vunpack.c.l.b16 %v57
  %v218 = vunpack.c.l.b16 %v58
  %v219 = vunpack.c.l.b16 %v59
  %v220 = vunpack.c.l.b16 %v60
  %v221 = vunpack.c.l.b16 %v61
  %v222 = vunpack.c.l.b16 %v62
  %v223 = vunpack.c.l.b16 %v63
  %v224 = vunpack.c.l.b16 %v64
  %v225 = vunpack.c.l.b16 %v65
  %v226 = vunpack.c.l.b16 %v66
  %v227 = vunpack.c.l.b16 %v67
  %v228 = vunpack.c.l.b16 %v68
  %v229 = vunpack.c.l.b16 %v69
  %v230 = vunpack.c.l.b16 %v70
  %v231 = vunpack.c.l.b16 %v71
  %v232 = vunpack.c.l.b16 %v72
  %v233 = vunpack.c.l.b16 %v73
  %v234 = vunpack.c.l.b16 %v74
  %v235 = vunpack.c.l.b16 %v75
  %v236 = vunpack.c.l.b16 %v76
  %v237 = vunpack.c.l.b16 %v77
  %v238 = vunpack.c.l.b16 %v78
  %v239 = vunpack.c.l.b16 %v79
  %v240 = vunpack.c.l.b16 %v80
  %v241 = vunpack.c.l.b16 %v81
  %v242 = vunpack.c.l.b16 %v82
  %v243 = vunpack.c.l.b16 %v83
  %v244 = vunpack.c.l.b16 %v84
  %v245 = vunpack.c.l.b16 %v85
  %v246 = vunpack.c.l.b16 %v86
  %v247 = vunpack.c.l.b16 %v87
  %v248 = vunpack.c.l.b16 %v88
  %v249 = vunpack.c.l.b16 %v89
  %v250 = vunpack.c.l.b16 %v90
  %v251 = vunpack.c.l.b16 %v91
  %v252 = vunpack.c.l.b16 %v92
  %v253 = vunpack.c.l.b16 %v93
  %v254 = vunpack.c.l.b16 %v94
  %v255 = vunpack.c.l.b16 %v95
  %v256 = vunpack.c.l.b16 %v96
  %v257 = vpack.c.b16 %v194, %v193
  %v258 = vpack.c.b16 %v196, %v195
  %v259 = vpack.c.b16 %v198, %v197
  %v260 = vpack.c.b16 %v200, %v199
  %v261 = vpack.c.b16 %v202, %v201
  %v262 = vpack.c.b16 %v204, %v203
  %v263 = vpack.c.b16 %v206, %v205
  %v264 = vpack.c.b16 %v208, %v207
  %v265 = vpack.c.b16 %v210, %v209
  %v266 = vpack.c.b16 %v212, %v211
  %v267 = vpack.c.b16 %v214, %v213
  %v268 = vpack.c.b16 %v216, %v215
  %v269 = vpack.c.b16 %v218, %v217
  %v270 = vpack.c.b16 %v220, %v219
  %v271 = vpack.c.b16 %v222, %v221
  %v272 = vpack.c.b16 %v224, %v223
  %v273 = vpack.c.b16 %v226, %v225
  %v274 = vpack.c.b16 %v228, %v227
  %v275 = vpack.c.b16 %v230, %v229
  %v276 = vpack.c.b16 %v232, %v231
  %v277 = vpack.c.b16 %v234, %v233
  %v278 = vpack.c.b16 %v236, %v235
  %v279 = vpack.c.b16 %v238, %v237
  %v280 = vpack.c.b16 %v240, %v239
  %v281 = vpack.c.b16 %v242, %v241
  %v282 = vpack.c.b16 %v244, %v243
  %v283 = vpack.c.b16 %v246, %v245
  %v284 = vpack.c.b16 %v248, %v247
  %v285 = vpack.c.b16 %v250, %v249
  %v286 = vpack.c.b16 %v252, %v251
  %v287 = vpack.c.b16 %v254, %v253
  %v288 = vpack.c.b16 %v256, %v255
  %321 = vmatprep.subr.bf16.mxu0 0
  %322 = vmatpush1.bf16.msra.mxu0 %v264
  %323 = vmatprep.subr.bf16.mxu0 0
  %324 = vmatpush1.bf16.msra.mxu0 %v263
  %325 = vmatprep.subr.bf16.mxu0 0
  %326 = vmatpush1.bf16.msra.mxu0 %v262
  %327 = vmatprep.subr.bf16.mxu0 0
  %328 = vmatpush1.bf16.msra.mxu0 %v261
  %329 = vmatprep.subr.bf16.mxu0 0
  %330 = vmatpush1.bf16.msra.mxu0 %v260
  %331 = vmatprep.subr.bf16.mxu0 0
  %332 = vmatpush1.bf16.msra.mxu0 %v259
  %333 = vmatprep.subr.bf16.mxu0 0
  %334 = vmatpush1.bf16.msra.mxu0 %v258
  %335 = vmatprep.subr.bf16.mxu0 0
  %336 = vmatpush1.bf16.msra.mxu0 %v257
  %337 = vmatprep.subr.bf16.mxu0 0
  %338 = vmatpush2.bf16.msra.mxu0 %v272
  %339 = vmatprep.subr.bf16.mxu0 0
  %340 = vmatpush2.bf16.msra.mxu0 %v271
  %341 = vmatprep.subr.bf16.mxu0 0
  %342 = vmatpush2.bf16.msra.mxu0 %v270
  %343 = vmatprep.subr.bf16.mxu0 0
  %344 = vmatpush2.bf16.msra.mxu0 %v269
  %345 = vmatprep.subr.bf16.mxu0 0
  %346 = vmatpush2.bf16.msra.mxu0 %v268
  %347 = vmatprep.subr.bf16.mxu0 0
  %348 = vmatpush2.bf16.msra.mxu0 %v267
  %349 = vmatprep.subr.bf16.mxu0 0
  %350 = vmatpush2.bf16.msra.mxu0 %v266
  %351 = vmatprep.subr.bf16.mxu0 0
  %352 = vmatpush2.bf16.msra.mxu0 %v265
  %353 = vmatprep.mubr.bf16.mxu0 %v122
  %354 = vmatmul.mubr.bf16.gmra.mxu0 %v121
  %v355 = vpop.f32.mrf.mxu0
  %v356 = vadd.f32 %v107, %v355
  %v357 = vpop.f32.mrf.mxu0
  %v358 = vpop.f32.mrf.mxu0
  %v359 = vadd.f32 %v107, %v358
  %v360 = vpop.f32.mrf.mxu0
  %361 = vdwg.mxu0
  %362 = vmatprep.subr.bf16.mxu0 0
  %363 = vmatpush1.bf16.msra.mxu0 %v280
  %364 = vmatprep.subr.bf16.mxu0 0
  %365 = vmatpush1.bf16.msra.mxu0 %v279
  %366 = vmatprep.subr.bf16.mxu0 0
  %367 = vmatpush1.bf16.msra.mxu0 %v278
  %368 = vmatprep.subr.bf16.mxu0 0
  %369 = vmatpush1.bf16.msra.mxu0 %v277
  %370 = vmatprep.subr.bf16.mxu0 0
  %371 = vmatpush1.bf16.msra.mxu0 %v276
  %372 = vmatprep.subr.bf16.mxu0 0
  %373 = vmatpush1.bf16.msra.mxu0 %v275
  %374 = vmatprep.subr.bf16.mxu0 0
  %375 = vmatpush1.bf16.msra.mxu0 %v274
  %376 = vmatprep.subr.bf16.mxu0 0
  %377 = vmatpush1.bf16.msra.mxu0 %v273
  %378 = vmatprep.subr.bf16.mxu0 0
  %379 = vmatpush2.bf16.msra.mxu0 %v288
  %380 = vmatprep.subr.bf16.mxu0 0
  %381 = vmatpush2.bf16.msra.mxu0 %v287
  %382 = vmatprep.subr.bf16.mxu0 0
  %383 = vmatpush2.bf16.msra.mxu0 %v286
  %384 = vmatprep.subr.bf16.mxu0 0
  %385 = vmatpush2.bf16.msra.mxu0 %v285
  %386 = vmatprep.subr.bf16.mxu0 0
  %387 = vmatpush2.bf16.msra.mxu0 %v284
  %388 = vmatprep.subr.bf16.mxu0 0
  %389 = vmatpush2.bf16.msra.mxu0 %v283
  %390 = vmatprep.subr.bf16.mxu0 0
  %391 = vmatpush2.bf16.msra.mxu0 %v282
  %392 = vmatprep.subr.bf16.mxu0 0
  %393 = vmatpush2.bf16.msra.mxu0 %v281
  %394 = vmatprep.mubr.bf16.mxu0 %v124
  %395 = vmatmul.mubr.bf16.gmra.mxu0 %v123
  %v396 = vpop.f32.mrf.mxu0
  %v397 = vadd.f32 %v356, %v396
  %v398 = vpop.f32.mrf.mxu0
  %v399 = vpop.f32.mrf.mxu0
  %v400 = vadd.f32 %v359, %v399
  %v401 = vpop.f32.mrf.mxu0
  %402 = vdwg.mxu0
  %v403 = vmax.f32 %v397, 0.0
  %v404 = vmax.f32 %v400, 0.0
  %v405 = vpack.c.bf16 %v404, %v403
  %s406 = scalar_lea.vmem %s0, 32
  %v407 = vld [vmem:[%s406] sm:$0xff]
  %v408 = vld [vmem:[%s406 + $0x8] sm:$0xff]
  %v409 = vld [vmem:[%s406 + $0x10] sm:$0xff]
  %v410 = vld [vmem:[%s406 + $0x18] sm:$0xff]
  %v415 = vunpack.c.l.b16 %v407
  %v416 = vunpack.c.h.b16 %v407
  %v417 = vunpack.c.l.b16 %v408
  %v418 = vunpack.c.h.b16 %v408
  %v419 = vunpack.c.l.b16 %v409
  %v420 = vunpack.c.h.b16 %v409
  %v421 = vunpack.c.l.b16 %v410
  %v422 = vunpack.c.h.b16 %v410
  %v423 = vpack.c.b16 %v419, %v415
  %v424 = vpack.c.b16 %v420, %v416
  %v425 = vpack.c.b16 %v421, %v417
  %v426 = vpack.c.b16 %v422, %v418
  %431 = vmatprep.subr.bf16.mxu0 0
  %432 = vmatpush1.bf16.msra.mxu0 %v264
  %433 = vmatprep.subr.bf16.mxu0 0
  %434 = vmatpush1.bf16.msra.mxu0 %v263
  %435 = vmatprep.subr.bf16.mxu0 0
  %436 = vmatpush1.bf16.msra.mxu0 %v262
  %437 = vmatprep.subr.bf16.mxu0 0
  %438 = vmatpush1.bf16.msra.mxu0 %v261
  %439 = vmatprep.subr.bf16.mxu0 0
  %440 = vmatpush1.bf16.msra.mxu0 %v260
  %441 = vmatprep.subr.bf16.mxu0 0
  %442 = vmatpush1.bf16.msra.mxu0 %v259
  %443 = vmatprep.subr.bf16.mxu0 0
  %444 = vmatpush1.bf16.msra.mxu0 %v258
  %445 = vmatprep.subr.bf16.mxu0 0
  %446 = vmatpush1.bf16.msra.mxu0 %v257
  %447 = vmatprep.subr.bf16.mxu0 0
  %448 = vmatpush2.bf16.msra.mxu0 %v272
  %449 = vmatprep.subr.bf16.mxu0 0
  %450 = vmatpush2.bf16.msra.mxu0 %v271
  %451 = vmatprep.subr.bf16.mxu0 0
  %452 = vmatpush2.bf16.msra.mxu0 %v270
  %453 = vmatprep.subr.bf16.mxu0 0
  %454 = vmatpush2.bf16.msra.mxu0 %v269
  %455 = vmatprep.subr.bf16.mxu0 0
  %456 = vmatpush2.bf16.msra.mxu0 %v268
  %457 = vmatprep.subr.bf16.mxu0 0
  %458 = vmatpush2.bf16.msra.mxu0 %v267
  %459 = vmatprep.subr.bf16.mxu0 0
  %460 = vmatpush2.bf16.msra.mxu0 %v266
  %461 = vmatprep.subr.bf16.mxu0 0
  %462 = vmatpush2.bf16.msra.mxu0 %v265
  %463 = vmatprep.mubr.bf16.mxu0 %v424
  %464 = vmatmul.mubr.bf16.gmra.mxu0 %v423
  %v465 = vpop.f32.mrf.mxu0
  %v466 = vadd.f32 %v107, %v465
  %v467 = vpop.f32.mrf.mxu0
  %v468 = vpop.f32.mrf.mxu0
  %v469 = vadd.f32 %v107, %v468
  %v470 = vpop.f32.mrf.mxu0
  %471 = vdwg.mxu0
  %472 = vmatprep.subr.bf16.mxu0 0
  %473 = vmatpush1.bf16.msra.mxu0 %v280
  %474 = vmatprep.subr.bf16.mxu0 0
  %475 = vmatpush1.bf16.msra.mxu0 %v279
  %476 = vmatprep.subr.bf16.mxu0 0
  %477 = vmatpush1.bf16.msra.mxu0 %v278
  %478 = vmatprep.subr.bf16.mxu0 0
  %479 = vmatpush1.bf16.msra.mxu0 %v277
  %480 = vmatprep.subr.bf16.mxu0 0
  %481 = vmatpush1.bf16.msra.mxu0 %v276
  %482 = vmatprep.subr.bf16.mxu0 0
  %483 = vmatpush1.bf16.msra.mxu0 %v275
  %484 = vmatprep.subr.bf16.mxu0 0
  %485 = vmatpush1.bf16.msra.mxu0 %v274
  %486 = vmatprep.subr.bf16.mxu0 0
  %487 = vmatpush1.bf16.msra.mxu0 %v273
  %488 = vmatprep.subr.bf16.mxu0 0
  %489 = vmatpush2.bf16.msra.mxu0 %v288
  %490 = vmatprep.subr.bf16.mxu0 0
  %491 = vmatpush2.bf16.msra.mxu0 %v287
  %492 = vmatprep.subr.bf16.mxu0 0
  %493 = vmatpush2.bf16.msra.mxu0 %v286
  %494 = vmatprep.subr.bf16.mxu0 0
  %495 = vmatpush2.bf16.msra.mxu0 %v285
  %496 = vmatprep.subr.bf16.mxu0 0
  %497 = vmatpush2.bf16.msra.mxu0 %v284
  %498 = vmatprep.subr.bf16.mxu0 0
  %499 = vmatpush2.bf16.msra.mxu0 %v283
  %500 = vmatprep.subr.bf16.mxu0 0
  %501 = vmatpush2.bf16.msra.mxu0 %v282
  %502 = vmatprep.subr.bf16.mxu0 0
  %503 = vmatpush2.bf16.msra.mxu0 %v281
  %504 = vmatprep.mubr.bf16.mxu0 %v426
  %505 = vmatmul.mubr.bf16.gmra.mxu0 %v425
  %v506 = vpop.f32.mrf.mxu0
  %v507 = vadd.f32 %v466, %v506
  %v508 = vpop.f32.mrf.mxu0
  %v509 = vpop.f32.mrf.mxu0
  %v510 = vadd.f32 %v469, %v509
  %v511 = vpop.f32.mrf.mxu0
  %512 = vdwg.mxu0
  %v513 = vmax.f32 %v507, 0.0
  %v514 = vmax.f32 %v510, 0.0
  %v515 = vpack.c.bf16 %v514, %v513
  %s516 = scalar_lea.vmem %s0, 64
  %v517 = vld [vmem:[%s516] sm:$0xff]
  %v518 = vld [vmem:[%s516 + $0x8] sm:$0xff]
  %v519 = vld [vmem:[%s516 + $0x10] sm:$0xff]
  %v520 = vld [vmem:[%s516 + $0x18] sm:$0xff]
  %v525 = vunpack.c.l.b16 %v517
  %v526 = vunpack.c.h.b16 %v517
  %v527 = vunpack.c.l.b16 %v518
  %v528 = vunpack.c.h.b16 %v518
  %v529 = vunpack.c.l.b16 %v519
  %v530 = vunpack.c.h.b16 %v519
  %v531 = vunpack.c.l.b16 %v520
  %v532 = vunpack.c.h.b16 %v520
  %v533 = vpack.c.b16 %v529, %v525
  %v534 = vpack.c.b16 %v530, %v526
  %v535 = vpack.c.b16 %v531, %v527
  %v536 = vpack.c.b16 %v532, %v528
  %541 = vmatprep.subr.bf16.mxu0 0
  %542 = vmatpush1.bf16.msra.mxu0 %v264
  %543 = vmatprep.subr.bf16.mxu0 0
  %544 = vmatpush1.bf16.msra.mxu0 %v263
  %545 = vmatprep.subr.bf16.mxu0 0
  %546 = vmatpush1.bf16.msra.mxu0 %v262
  %547 = vmatprep.subr.bf16.mxu0 0
  %548 = vmatpush1.bf16.msra.mxu0 %v261
  %549 = vmatprep.subr.bf16.mxu0 0
  %550 = vmatpush1.bf16.msra.mxu0 %v260
  %551 = vmatprep.subr.bf16.mxu0 0
  %552 = vmatpush1.bf16.msra.mxu0 %v259
  %553 = vmatprep.subr.bf16.mxu0 0
  %554 = vmatpush1.bf16.msra.mxu0 %v258
  %555 = vmatprep.subr.bf16.mxu0 0
  %556 = vmatpush1.bf16.msra.mxu0 %v257
  %557 = vmatprep.subr.bf16.mxu0 0
  %558 = vmatpush2.bf16.msra.mxu0 %v272
  %559 = vmatprep.subr.bf16.mxu0 0
  %560 = vmatpush2.bf16.msra.mxu0 %v271
  %561 = vmatprep.subr.bf16.mxu0 0
  %562 = vmatpush2.bf16.msra.mxu0 %v270
  %563 = vmatprep.subr.bf16.mxu0 0
  %564 = vmatpush2.bf16.msra.mxu0 %v269
  %565 = vmatprep.subr.bf16.mxu0 0
  %566 = vmatpush2.bf16.msra.mxu0 %v268
  %567 = vmatprep.subr.bf16.mxu0 0
  %568 = vmatpush2.bf16.msra.mxu0 %v267
  %569 = vmatprep.subr.bf16.mxu0 0
  %570 = vmatpush2.bf16.msra.mxu0 %v266
  %571 = vmatprep.subr.bf16.mxu0 0
  %572 = vmatpush2.bf16.msra.mxu0 %v265
  %573 = vmatprep.mubr.bf16.mxu0 %v534
  %574 = vmatmul.mubr.bf16.gmra.mxu0 %v533
  %v575 = vpop.f32.mrf.mxu0
  %v576 = vadd.f32 %v107, %v575
  %v577 = vpop.f32.mrf.mxu0
  %v578 = vpop.f32.mrf.mxu0
  %v579 = vadd.f32 %v107, %v578
  %v580 = vpop.f32.mrf.mxu0
  %581 = vdwg.mxu0
  %582 = vmatprep.subr.bf16.mxu0 0
  %583 = vmatpush1.bf16.msra.mxu0 %v280
  %584 = vmatprep.subr.bf16.mxu0 0
  %585 = vmatpush1.bf16.msra.mxu0 %v279
  %586 = vmatprep.subr.bf16.mxu0 0
  %587 = vmatpush1.bf16.msra.mxu0 %v278
  %588 = vmatprep.subr.bf16.mxu0 0
  %589 = vmatpush1.bf16.msra.mxu0 %v277
  %590 = vmatprep.subr.bf16.mxu0 0
  %591 = vmatpush1.bf16.msra.mxu0 %v276
  %592 = vmatprep.subr.bf16.mxu0 0
  %593 = vmatpush1.bf16.msra.mxu0 %v275
  %594 = vmatprep.subr.bf16.mxu0 0
  %595 = vmatpush1.bf16.msra.mxu0 %v274
  %596 = vmatprep.subr.bf16.mxu0 0
  %597 = vmatpush1.bf16.msra.mxu0 %v273
  %598 = vmatprep.subr.bf16.mxu0 0
  %599 = vmatpush2.bf16.msra.mxu0 %v288
  %600 = vmatprep.subr.bf16.mxu0 0
  %601 = vmatpush2.bf16.msra.mxu0 %v287
  %602 = vmatprep.subr.bf16.mxu0 0
  %603 = vmatpush2.bf16.msra.mxu0 %v286
  %604 = vmatprep.subr.bf16.mxu0 0
  %605 = vmatpush2.bf16.msra.mxu0 %v285
  %606 = vmatprep.subr.bf16.mxu0 0
  %607 = vmatpush2.bf16.msra.mxu0 %v284
  %608 = vmatprep.subr.bf16.mxu0 0
  %609 = vmatpush2.bf16.msra.mxu0 %v283
  %610 = vmatprep.subr.bf16.mxu0 0
  %611 = vmatpush2.bf16.msra.mxu0 %v282
  %612 = vmatprep.subr.bf16.mxu0 0
  %613 = vmatpush2.bf16.msra.mxu0 %v281
  %614 = vmatprep.mubr.bf16.mxu0 %v536
  %615 = vmatmul.mubr.bf16.gmra.mxu0 %v535
  %v616 = vpop.f32.mrf.mxu0
  %v617 = vadd.f32 %v576, %v616
  %v618 = vpop.f32.mrf.mxu0
  %v619 = vpop.f32.mrf.mxu0
  %v620 = vadd.f32 %v579, %v619
  %v621 = vpop.f32.mrf.mxu0
  %622 = vdwg.mxu0
  %v623 = vmax.f32 %v617, 0.0
  %v624 = vmax.f32 %v620, 0.0
  %v625 = vpack.c.bf16 %v624, %v623
  %s626 = scalar_lea.vmem %s0, 96
  %v627 = vld [vmem:[%s626] sm:$0xff]
  %v628 = vld [vmem:[%s626 + $0x8] sm:$0xff]
  %v629 = vld [vmem:[%s626 + $0x10] sm:$0xff]
  %v630 = vld [vmem:[%s626 + $0x18] sm:$0xff]
  %v635 = vunpack.c.l.b16 %v627
  %v636 = vunpack.c.h.b16 %v627
  %v637 = vunpack.c.l.b16 %v628
  %v638 = vunpack.c.h.b16 %v628
  %v639 = vunpack.c.l.b16 %v629
  %v640 = vunpack.c.h.b16 %v629
  %v641 = vunpack.c.l.b16 %v630
  %v642 = vunpack.c.h.b16 %v630
  %v643 = vpack.c.b16 %v639, %v635
  %v644 = vpack.c.b16 %v640, %v636
  %v645 = vpack.c.b16 %v641, %v637
  %v646 = vpack.c.b16 %v642, %v638
  %651 = vmatprep.subr.bf16.mxu0 0
  %652 = vmatpush1.bf16.msra.mxu0 %v264
  %653 = vmatprep.subr.bf16.mxu0 0
  %654 = vmatpush1.bf16.msra.mxu0 %v263
  %655 = vmatprep.subr.bf16.mxu0 0
  %656 = vmatpush1.bf16.msra.mxu0 %v262
  %657 = vmatprep.subr.bf16.mxu0 0
  %658 = vmatpush1.bf16.msra.mxu0 %v261
  %659 = vmatprep.subr.bf16.mxu0 0
  %660 = vmatpush1.bf16.msra.mxu0 %v260
  %661 = vmatprep.subr.bf16.mxu0 0
  %662 = vmatpush1.bf16.msra.mxu0 %v259
  %663 = vmatprep.subr.bf16.mxu0 0
  %664 = vmatpush1.bf16.msra.mxu0 %v258
  %665 = vmatprep.subr.bf16.mxu0 0
  %666 = vmatpush1.bf16.msra.mxu0 %v257
  %667 = vmatprep.subr.bf16.mxu0 0
  %668 = vmatpush2.bf16.msra.mxu0 %v272
  %669 = vmatprep.subr.bf16.mxu0 0
  %670 = vmatpush2.bf16.msra.mxu0 %v271
  %671 = vmatprep.subr.bf16.mxu0 0
  %672 = vmatpush2.bf16.msra.mxu0 %v270
  %673 = vmatprep.subr.bf16.mxu0 0
  %674 = vmatpush2.bf16.msra.mxu0 %v269
  %675 = vmatprep.subr.bf16.mxu0 0
  %676 = vmatpush2.bf16.msra.mxu0 %v268
  %677 = vmatprep.subr.bf16.mxu0 0
  %678 = vmatpush2.bf16.msra.mxu0 %v267
  %679 = vmatprep.subr.bf16.mxu0 0
  %680 = vmatpush2.bf16.msra.mxu0 %v266
  %681 = vmatprep.subr.bf16.mxu0 0
  %682 = vmatpush2.bf16.msra.mxu0 %v265
  %683 = vmatprep.mubr.bf16.mxu0 %v644
  %684 = vmatmul.mubr.bf16.gmra.mxu0 %v643
  %v685 = vpop.f32.mrf.mxu0
  %v686 = vadd.f32 %v107, %v685
  %v687 = vpop.f32.mrf.mxu0
  %v688 = vpop.f32.mrf.mxu0
  %v689 = vadd.f32 %v107, %v688
  %v690 = vpop.f32.mrf.mxu0
  %691 = vdwg.mxu0
  %692 = vmatprep.subr.bf16.mxu0 0
  %693 = vmatpush1.bf16.msra.mxu0 %v280
  %694 = vmatprep.subr.bf16.mxu0 0
  %695 = vmatpush1.bf16.msra.mxu0 %v279
  %696 = vmatprep.subr.bf16.mxu0 0
  %697 = vmatpush1.bf16.msra.mxu0 %v278
  %698 = vmatprep.subr.bf16.mxu0 0
  %699 = vmatpush1.bf16.msra.mxu0 %v277
  %700 = vmatprep.subr.bf16.mxu0 0
  %701 = vmatpush1.bf16.msra.mxu0 %v276
  %702 = vmatprep.subr.bf16.mxu0 0
  %703 = vmatpush1.bf16.msra.mxu0 %v275
  %704 = vmatprep.subr.bf16.mxu0 0
  %705 = vmatpush1.bf16.msra.mxu0 %v274
  %706 = vmatprep.subr.bf16.mxu0 0
  %707 = vmatpush1.bf16.msra.mxu0 %v273
  %708 = vmatprep.subr.bf16.mxu0 0
  %709 = vmatpush2.bf16.msra.mxu0 %v288
  %710 = vmatprep.subr.bf16.mxu0 0
  %711 = vmatpush2.bf16.msra.mxu0 %v287
  %712 = vmatprep.subr.bf16.mxu0 0
  %713 = vmatpush2.bf16.msra.mxu0 %v286
  %714 = vmatprep.subr.bf16.mxu0 0
  %715 = vmatpush2.bf16.msra.mxu0 %v285
  %716 = vmatprep.subr.bf16.mxu0 0
  %717 = vmatpush2.bf16.msra.mxu0 %v284
  %718 = vmatprep.subr.bf16.mxu0 0
  %719 = vmatpush2.bf16.msra.mxu0 %v283
  %720 = vmatprep.subr.bf16.mxu0 0
  %721 = vmatpush2.bf16.msra.mxu0 %v282
  %722 = vmatprep.subr.bf16.mxu0 0
  %723 = vmatpush2.bf16.msra.mxu0 %v281
  %724 = vmatprep.mubr.bf16.mxu0 %v646
  %725 = vmatmul.mubr.bf16.gmra.mxu0 %v645
  %v726 = vpop.f32.mrf.mxu0
  %v727 = vadd.f32 %v686, %v726
  %v728 = vpop.f32.mrf.mxu0
  %v729 = vpop.f32.mrf.mxu0
  %v730 = vadd.f32 %v689, %v729
  %v731 = vpop.f32.mrf.mxu0
  %732 = vdwg.mxu0
  %v733 = vmax.f32 %v727, 0.0
  %v734 = vmax.f32 %v730, 0.0
  %v735 = vpack.c.bf16 %v734, %v733
  %s736 = scalar_lea.vmem %s0, 128
  %v737 = vld [vmem:[%s736] sm:$0xff]
  %v738 = vld [vmem:[%s736 + $0x8] sm:$0xff]
  %v739 = vld [vmem:[%s736 + $0x10] sm:$0xff]
  %v740 = vld [vmem:[%s736 + $0x18] sm:$0xff]
  %v745 = vunpack.c.l.b16 %v737
  %v746 = vunpack.c.h.b16 %v737
  %v747 = vunpack.c.l.b16 %v738
  %v748 = vunpack.c.h.b16 %v738
  %v749 = vunpack.c.l.b16 %v739
  %v750 = vunpack.c.h.b16 %v739
  %v751 = vunpack.c.l.b16 %v740
  %v752 = vunpack.c.h.b16 %v740
  %v753 = vpack.c.b16 %v749, %v745
  %v754 = vpack.c.b16 %v750, %v746
  %v755 = vpack.c.b16 %v751, %v747
  %v756 = vpack.c.b16 %v752, %v748
  %761 = vmatprep.subr.bf16.mxu0 0
  %762 = vmatpush1.bf16.msra.mxu0 %v264
  %763 = vmatprep.subr.bf16.mxu0 0
  %764 = vmatpush1.bf16.msra.mxu0 %v263
  %765 = vmatprep.subr.bf16.mxu0 0
  %766 = vmatpush1.bf16.msra.mxu0 %v262
  %767 = vmatprep.subr.bf16.mxu0 0
  %768 = vmatpush1.bf16.msra.mxu0 %v261
  %769 = vmatprep.subr.bf16.mxu0 0
  %770 = vmatpush1.bf16.msra.mxu0 %v260
  %771 = vmatprep.subr.bf16.mxu0 0
  %772 = vmatpush1.bf16.msra.mxu0 %v259
  %773 = vmatprep.subr.bf16.mxu0 0
  %774 = vmatpush1.bf16.msra.mxu0 %v258
  %775 = vmatprep.subr.bf16.mxu0 0
  %776 = vmatpush1.bf16.msra.mxu0 %v257
  %777 = vmatprep.subr.bf16.mxu0 0
  %778 = vmatpush2.bf16.msra.mxu0 %v272
  %779 = vmatprep.subr.bf16.mxu0 0
  %780 = vmatpush2.bf16.msra.mxu0 %v271
  %781 = vmatprep.subr.bf16.mxu0 0
  %782 = vmatpush2.bf16.msra.mxu0 %v270
  %783 = vmatprep.subr.bf16.mxu0 0
  %784 = vmatpush2.bf16.msra.mxu0 %v269
  %785 = vmatprep.subr.bf16.mxu0 0
  %786 = vmatpush2.bf16.msra.mxu0 %v268
  %787 = vmatprep.subr.bf16.mxu0 0
  %788 = vmatpush2.bf16.msra.mxu0 %v267
  %789 = vmatprep.subr.bf16.mxu0 0
  %790 = vmatpush2.bf16.msra.mxu0 %v266
  %791 = vmatprep.subr.bf16.mxu0 0
  %792 = vmatpush2.bf16.msra.mxu0 %v265
  %793 = vmatprep.mubr.bf16.mxu0 %v754
  %794 = vmatmul.mubr.bf16.gmra.mxu0 %v753
  %v795 = vpop.f32.mrf.mxu0
  %v796 = vadd.f32 %v107, %v795
  %v797 = vpop.f32.mrf.mxu0
  %v798 = vpop.f32.mrf.mxu0
  %v799 = vadd.f32 %v107, %v798
  %v800 = vpop.f32.mrf.mxu0
  %801 = vdwg.mxu0
  %802 = vmatprep.subr.bf16.mxu0 0
  %803 = vmatpush1.bf16.msra.mxu0 %v280
  %804 = vmatprep.subr.bf16.mxu0 0
  %805 = vmatpush1.bf16.msra.mxu0 %v279
  %806 = vmatprep.subr.bf16.mxu0 0
  %807 = vmatpush1.bf16.msra.mxu0 %v278
  %808 = vmatprep.subr.bf16.mxu0 0
  %809 = vmatpush1.bf16.msra.mxu0 %v277
  %810 = vmatprep.subr.bf16.mxu0 0
  %811 = vmatpush1.bf16.msra.mxu0 %v276
  %812 = vmatprep.subr.bf16.mxu0 0
  %813 = vmatpush1.bf16.msra.mxu0 %v275
  %814 = vmatprep.subr.bf16.mxu0 0
  %815 = vmatpush1.bf16.msra.mxu0 %v274
  %816 = vmatprep.subr.bf16.mxu0 0
  %817 = vmatpush1.bf16.msra.mxu0 %v273
  %818 = vmatprep.subr.bf16.mxu0 0
  %819 = vmatpush2.bf16.msra.mxu0 %v288
  %820 = vmatprep.subr.bf16.mxu0 0
  %821 = vmatpush2.bf16.msra.mxu0 %v287
  %822 = vmatprep.subr.bf16.mxu0 0
  %823 = vmatpush2.bf16.msra.mxu0 %v286
  %824 = vmatprep.subr.bf16.mxu0 0
  %825 = vmatpush2.bf16.msra.mxu0 %v285
  %826 = vmatprep.subr.bf16.mxu0 0
  %827 = vmatpush2.bf16.msra.mxu0 %v284
  %828 = vmatprep.subr.bf16.mxu0 0
  %829 = vmatpush2.bf16.msra.mxu0 %v283
  %830 = vmatprep.subr.bf16.mxu0 0
  %831 = vmatpush2.bf16.msra.mxu0 %v282
  %832 = vmatprep.subr.bf16.mxu0 0
  %833 = vmatpush2.bf16.msra.mxu0 %v281
  %834 = vmatprep.mubr.bf16.mxu0 %v756
  %835 = vmatmul.mubr.bf16.gmra.mxu0 %v755
  %v836 = vpop.f32.mrf.mxu0
  %v837 = vadd.f32 %v796, %v836
  %v838 = vpop.f32.mrf.mxu0
  %v839 = vpop.f32.mrf.mxu0
  %v840 = vadd.f32 %v799, %v839
  %v841 = vpop.f32.mrf.mxu0
  %842 = vdwg.mxu0
  %v843 = vmax.f32 %v837, 0.0
  %v844 = vmax.f32 %v840, 0.0
  %v845 = vpack.c.bf16 %v844, %v843
  %s846 = scalar_lea.vmem %s0, 160
  %v847 = vld [vmem:[%s846] sm:$0xff]
  %v848 = vld [vmem:[%s846 + $0x8] sm:$0xff]
  %v849 = vld [vmem:[%s846 + $0x10] sm:$0xff]
  %v850 = vld [vmem:[%s846 + $0x18] sm:$0xff]
  %v855 = vunpack.c.l.b16 %v847
  %v856 = vunpack.c.h.b16 %v847
  %v857 = vunpack.c.l.b16 %v848
  %v858 = vunpack.c.h.b16 %v848
  %v859 = vunpack.c.l.b16 %v849
  %v860 = vunpack.c.h.b16 %v849
  %v861 = vunpack.c.l.b16 %v850
  %v862 = vunpack.c.h.b16 %v850
  %v863 = vpack.c.b16 %v859, %v855
  %v864 = vpack.c.b16 %v860, %v856
  %v865 = vpack.c.b16 %v861, %v857
  %v866 = vpack.c.b16 %v862, %v858
  %871 = vmatprep.subr.bf16.mxu0 0
  %872 = vmatpush1.bf16.msra.mxu0 %v264
  %873 = vmatprep.subr.bf16.mxu0 0
  %874 = vmatpush1.bf16.msra.mxu0 %v263
  %875 = vmatprep.subr.bf16.mxu0 0
  %876 = vmatpush1.bf16.msra.mxu0 %v262
  %877 = vmatprep.subr.bf16.mxu0 0
  %878 = vmatpush1.bf16.msra.mxu0 %v261
  %879 = vmatprep.subr.bf16.mxu0 0
  %880 = vmatpush1.bf16.msra.mxu0 %v260
  %881 = vmatprep.subr.bf16.mxu0 0
  %882 = vmatpush1.bf16.msra.mxu0 %v259
  %883 = vmatprep.subr.bf16.mxu0 0
  %884 = vmatpush1.bf16.msra.mxu0 %v258
  %885 = vmatprep.subr.bf16.mxu0 0
  %886 = vmatpush1.bf16.msra.mxu0 %v257
  %887 = vmatprep.subr.bf16.mxu0 0
  %888 = vmatpush2.bf16.msra.mxu0 %v272
  %889 = vmatprep.subr.bf16.mxu0 0
  %890 = vmatpush2.bf16.msra.mxu0 %v271
  %891 = vmatprep.subr.bf16.mxu0 0
  %892 = vmatpush2.bf16.msra.mxu0 %v270
  %893 = vmatprep.subr.bf16.mxu0 0
  %894 = vmatpush2.bf16.msra.mxu0 %v269
  %895 = vmatprep.subr.bf16.mxu0 0
  %896 = vmatpush2.bf16.msra.mxu0 %v268
  %897 = vmatprep.subr.bf16.mxu0 0
  %898 = vmatpush2.bf16.msra.mxu0 %v267
  %899 = vmatprep.subr.bf16.mxu0 0
  %900 = vmatpush2.bf16.msra.mxu0 %v266
  %901 = vmatprep.subr.bf16.mxu0 0
  %902 = vmatpush2.bf16.msra.mxu0 %v265
  %903 = vmatprep.mubr.bf16.mxu0 %v864
  %904 = vmatmul.mubr.bf16.gmra.mxu0 %v863
  %v905 = vpop.f32.mrf.mxu0
  %v906 = vadd.f32 %v107, %v905
  %v907 = vpop.f32.mrf.mxu0
  %v908 = vpop.f32.mrf.mxu0
  %v909 = vadd.f32 %v107, %v908
  %v910 = vpop.f32.mrf.mxu0
  %911 = vdwg.mxu0
  %912 = vmatprep.subr.bf16.mxu0 0
  %913 = vmatpush1.bf16.msra.mxu0 %v280
  %914 = vmatprep.subr.bf16.mxu0 0
  %915 = vmatpush1.bf16.msra.mxu0 %v279
  %916 = vmatprep.subr.bf16.mxu0 0
  %917 = vmatpush1.bf16.msra.mxu0 %v278
  %918 = vmatprep.subr.bf16.mxu0 0
  %919 = vmatpush1.bf16.msra.mxu0 %v277
  %920 = vmatprep.subr.bf16.mxu0 0
  %921 = vmatpush1.bf16.msra.mxu0 %v276
  %922 = vmatprep.subr.bf16.mxu0 0
  %923 = vmatpush1.bf16.msra.mxu0 %v275
  %924 = vmatprep.subr.bf16.mxu0 0
  %925 = vmatpush1.bf16.msra.mxu0 %v274
  %926 = vmatprep.subr.bf16.mxu0 0
  %927 = vmatpush1.bf16.msra.mxu0 %v273
  %928 = vmatprep.subr.bf16.mxu0 0
  %929 = vmatpush2.bf16.msra.mxu0 %v288
  %930 = vmatprep.subr.bf16.mxu0 0
  %931 = vmatpush2.bf16.msra.mxu0 %v287
  %932 = vmatprep.subr.bf16.mxu0 0
  %933 = vmatpush2.bf16.msra.mxu0 %v286
  %934 = vmatprep.subr.bf16.mxu0 0
  %935 = vmatpush2.bf16.msra.mxu0 %v285
  %936 = vmatprep.subr.bf16.mxu0 0
  %937 = vmatpush2.bf16.msra.mxu0 %v284
  %938 = vmatprep.subr.bf16.mxu0 0
  %939 = vmatpush2.bf16.msra.mxu0 %v283
  %940 = vmatprep.subr.bf16.mxu0 0
  %941 = vmatpush2.bf16.msra.mxu0 %v282
  %942 = vmatprep.subr.bf16.mxu0 0
  %943 = vmatpush2.bf16.msra.mxu0 %v281
  %944 = vmatprep.mubr.bf16.mxu0 %v866
  %945 = vmatmul.mubr.bf16.gmra.mxu0 %v865
  %v946 = vpop.f32.mrf.mxu0
  %v947 = vadd.f32 %v906, %v946
  %v948 = vpop.f32.mrf.mxu0
  %v949 = vpop.f32.mrf.mxu0
  %v950 = vadd.f32 %v909, %v949
  %v951 = vpop.f32.mrf.mxu0
  %952 = vdwg.mxu0
  %v953 = vmax.f32 %v947, 0.0
  %v954 = vmax.f32 %v950, 0.0
  %v955 = vpack.c.bf16 %v954, %v953
  %s956 = scalar_lea.vmem %s0, 192
  %v957 = vld [vmem:[%s956] sm:$0xff]
  %v958 = vld [vmem:[%s956 + $0x8] sm:$0xff]
  %v959 = vld [vmem:[%s956 + $0x10] sm:$0xff]
  %v960 = vld [vmem:[%s956 + $0x18] sm:$0xff]
  %v965 = vunpack.c.l.b16 %v957
  %v966 = vunpack.c.h.b16 %v957
  %v967 = vunpack.c.l.b16 %v958
  %v968 = vunpack.c.h.b16 %v958
  %v969 = vunpack.c.l.b16 %v959
  %v970 = vunpack.c.h.b16 %v959
  %v971 = vunpack.c.l.b16 %v960
  %v972 = vunpack.c.h.b16 %v960
  %v973 = vpack.c.b16 %v969, %v965
  %v974 = vpack.c.b16 %v970, %v966
  %v975 = vpack.c.b16 %v971, %v967
  %v976 = vpack.c.b16 %v972, %v968
  %981 = vmatprep.subr.bf16.mxu0 0
  %982 = vmatpush1.bf16.msra.mxu0 %v264
  %983 = vmatprep.subr.bf16.mxu0 0
  %984 = vmatpush1.bf16.msra.mxu0 %v263
  %985 = vmatprep.subr.bf16.mxu0 0
  %986 = vmatpush1.bf16.msra.mxu0 %v262
  %987 = vmatprep.subr.bf16.mxu0 0
  %988 = vmatpush1.bf16.msra.mxu0 %v261
  %989 = vmatprep.subr.bf16.mxu0 0
  %990 = vmatpush1.bf16.msra.mxu0 %v260
  %991 = vmatprep.subr.bf16.mxu0 0
  %992 = vmatpush1.bf16.msra.mxu0 %v259
  %993 = vmatprep.subr.bf16.mxu0 0
  %994 = vmatpush1.bf16.msra.mxu0 %v258
  %995 = vmatprep.subr.bf16.mxu0 0
  %996 = vmatpush1.bf16.msra.mxu0 %v257
  %997 = vmatprep.subr.bf16.mxu0 0
  %998 = vmatpush2.bf16.msra.mxu0 %v272
  %999 = vmatprep.subr.bf16.mxu0 0
  %1000 = vmatpush2.bf16.msra.mxu0 %v271
  %1001 = vmatprep.subr.bf16.mxu0 0
  %1002 = vmatpush2.bf16.msra.mxu0 %v270
  %1003 = vmatprep.subr.bf16.mxu0 0
  %1004 = vmatpush2.bf16.msra.mxu0 %v269
  %1005 = vmatprep.subr.bf16.mxu0 0
  %1006 = vmatpush2.bf16.msra.mxu0 %v268
  %1007 = vmatprep.subr.bf16.mxu0 0
  %1008 = vmatpush2.bf16.msra.mxu0 %v267
  %1009 = vmatprep.subr.bf16.mxu0 0
  %1010 = vmatpush2.bf16.msra.mxu0 %v266
  %1011 = vmatprep.subr.bf16.mxu0 0
  %1012 = vmatpush2.bf16.msra.mxu0 %v265
  %1013 = vmatprep.mubr.bf16.mxu0 %v974
  %1014 = vmatmul.mubr.bf16.gmra.mxu0 %v973
  %v1015 = vpop.f32.mrf.mxu0
  %v1016 = vadd.f32 %v107, %v1015
  %v1017 = vpop.f32.mrf.mxu0
  %v1018 = vpop.f32.mrf.mxu0
  %v1019 = vadd.f32 %v107, %v1018
  %v1020 = vpop.f32.mrf.mxu0
  %1021 = vdwg.mxu0
  %1022 = vmatprep.subr.bf16.mxu0 0
  %1023 = vmatpush1.bf16.msra.mxu0 %v280
  %1024 = vmatprep.subr.bf16.mxu0 0
  %1025 = vmatpush1.bf16.msra.mxu0 %v279
  %1026 = vmatprep.subr.bf16.mxu0 0
  %1027 = vmatpush1.bf16.msra.mxu0 %v278
  %1028 = vmatprep.subr.bf16.mxu0 0
  %1029 = vmatpush1.bf16.msra.mxu0 %v277
  %1030 = vmatprep.subr.bf16.mxu0 0
  %1031 = vmatpush1.bf16.msra.mxu0 %v276
  %1032 = vmatprep.subr.bf16.mxu0 0
  %1033 = vmatpush1.bf16.msra.mxu0 %v275
  %1034 = vmatprep.subr.bf16.mxu0 0
  %1035 = vmatpush1.bf16.msra.mxu0 %v274
  %1036 = vmatprep.subr.bf16.mxu0 0
  %1037 = vmatpush1.bf16.msra.mxu0 %v273
  %1038 = vmatprep.subr.bf16.mxu0 0
  %1039 = vmatpush2.bf16.msra.mxu0 %v288
  %1040 = vmatprep.subr.bf16.mxu0 0
  %1041 = vmatpush2.bf16.msra.mxu0 %v287
  %1042 = vmatprep.subr.bf16.mxu0 0
  %1043 = vmatpush2.bf16.msra.mxu0 %v286
  %1044 = vmatprep.subr.bf16.mxu0 0
  %1045 = vmatpush2.bf16.msra.mxu0 %v285
  %1046 = vmatprep.subr.bf16.mxu0 0
  %1047 = vmatpush2.bf16.msra.mxu0 %v284
  %1048 = vmatprep.subr.bf16.mxu0 0
  %1049 = vmatpush2.bf16.msra.mxu0 %v283
  %1050 = vmatprep.subr.bf16.mxu0 0
  %1051 = vmatpush2.bf16.msra.mxu0 %v282
  %1052 = vmatprep.subr.bf16.mxu0 0
  %1053 = vmatpush2.bf16.msra.mxu0 %v281
  %1054 = vmatprep.mubr.bf16.mxu0 %v976
  %1055 = vmatmul.mubr.bf16.gmra.mxu0 %v975
  %v1056 = vpop.f32.mrf.mxu0
  %v1057 = vadd.f32 %v1016, %v1056
  %v1058 = vpop.f32.mrf.mxu0
  %v1059 = vpop.f32.mrf.mxu0
  %v1060 = vadd.f32 %v1019, %v1059
  %v1061 = vpop.f32.mrf.mxu0
  %1062 = vdwg.mxu0
  %v1063 = vmax.f32 %v1057, 0.0
  %v1064 = vmax.f32 %v1060, 0.0
  %v1065 = vpack.c.bf16 %v1064, %v1063
  %s1066 = scalar_lea.vmem %s0, 224
  %v1067 = vld [vmem:[%s1066] sm:$0xff]
  %v1068 = vld [vmem:[%s1066 + $0x8] sm:$0xff]
  %v1069 = vld [vmem:[%s1066 + $0x10] sm:$0xff]
  %v1070 = vld [vmem:[%s1066 + $0x18] sm:$0xff]
  %v1075 = vunpack.c.l.b16 %v1067
  %v1076 = vunpack.c.h.b16 %v1067
  %v1077 = vunpack.c.l.b16 %v1068
  %v1078 = vunpack.c.h.b16 %v1068
  %v1079 = vunpack.c.l.b16 %v1069
  %v1080 = vunpack.c.h.b16 %v1069
  %v1081 = vunpack.c.l.b16 %v1070
  %v1082 = vunpack.c.h.b16 %v1070
  %v1083 = vpack.c.b16 %v1079, %v1075
  %v1084 = vpack.c.b16 %v1080, %v1076
  %v1085 = vpack.c.b16 %v1081, %v1077
  %v1086 = vpack.c.b16 %v1082, %v1078
  %1091 = vmatprep.subr.bf16.mxu0 0
  %1092 = vmatpush1.bf16.msra.mxu0 %v264
  %1093 = vmatprep.subr.bf16.mxu0 0
  %1094 = vmatpush1.bf16.msra.mxu0 %v263
  %1095 = vmatprep.subr.bf16.mxu0 0
  %1096 = vmatpush1.bf16.msra.mxu0 %v262
  %1097 = vmatprep.subr.bf16.mxu0 0
  %1098 = vmatpush1.bf16.msra.mxu0 %v261
  %1099 = vmatprep.subr.bf16.mxu0 0
  %1100 = vmatpush1.bf16.msra.mxu0 %v260
  %1101 = vmatprep.subr.bf16.mxu0 0
  %1102 = vmatpush1.bf16.msra.mxu0 %v259
  %1103 = vmatprep.subr.bf16.mxu0 0
  %1104 = vmatpush1.bf16.msra.mxu0 %v258
  %1105 = vmatprep.subr.bf16.mxu0 0
  %1106 = vmatpush1.bf16.msra.mxu0 %v257
  %1107 = vmatprep.subr.bf16.mxu0 0
  %1108 = vmatpush2.bf16.msra.mxu0 %v272
  %1109 = vmatprep.subr.bf16.mxu0 0
  %1110 = vmatpush2.bf16.msra.mxu0 %v271
  %1111 = vmatprep.subr.bf16.mxu0 0
  %1112 = vmatpush2.bf16.msra.mxu0 %v270
  %1113 = vmatprep.subr.bf16.mxu0 0
  %1114 = vmatpush2.bf16.msra.mxu0 %v269
  %1115 = vmatprep.subr.bf16.mxu0 0
  %1116 = vmatpush2.bf16.msra.mxu0 %v268
  %1117 = vmatprep.subr.bf16.mxu0 0
  %1118 = vmatpush2.bf16.msra.mxu0 %v267
  %1119 = vmatprep.subr.bf16.mxu0 0
  %1120 = vmatpush2.bf16.msra.mxu0 %v266
  %1121 = vmatprep.subr.bf16.mxu0 0
  %1122 = vmatpush2.bf16.msra.mxu0 %v265
  %1123 = vmatprep.mubr.bf16.mxu0 %v1084
  %1124 = vmatmul.mubr.bf16.gmra.mxu0 %v1083
  %v1125 = vpop.f32.mrf.mxu0
  %v1126 = vadd.f32 %v107, %v1125
  %v1127 = vpop.f32.mrf.mxu0
  %v1128 = vpop.f32.mrf.mxu0
  %v1129 = vadd.f32 %v107, %v1128
  %v1130 = vpop.f32.mrf.mxu0
  %1131 = vdwg.mxu0
  %1132 = vmatprep.subr.bf16.mxu0 0
  %1133 = vmatpush1.bf16.msra.mxu0 %v280
  %1134 = vmatprep.subr.bf16.mxu0 0
  %1135 = vmatpush1.bf16.msra.mxu0 %v279
  %1136 = vmatprep.subr.bf16.mxu0 0
  %1137 = vmatpush1.bf16.msra.mxu0 %v278
  %1138 = vmatprep.subr.bf16.mxu0 0
  %1139 = vmatpush1.bf16.msra.mxu0 %v277
  %1140 = vmatprep.subr.bf16.mxu0 0
  %1141 = vmatpush1.bf16.msra.mxu0 %v276
  %1142 = vmatprep.subr.bf16.mxu0 0
  %1143 = vmatpush1.bf16.msra.mxu0 %v275
  %1144 = vmatprep.subr.bf16.mxu0 0
  %1145 = vmatpush1.bf16.msra.mxu0 %v274
  %1146 = vmatprep.subr.bf16.mxu0 0
  %1147 = vmatpush1.bf16.msra.mxu0 %v273
  %1148 = vmatprep.subr.bf16.mxu0 0
  %1149 = vmatpush2.bf16.msra.mxu0 %v288
  %1150 = vmatprep.subr.bf16.mxu0 0
  %1151 = vmatpush2.bf16.msra.mxu0 %v287
  %1152 = vmatprep.subr.bf16.mxu0 0
  %1153 = vmatpush2.bf16.msra.mxu0 %v286
  %1154 = vmatprep.subr.bf16.mxu0 0
  %1155 = vmatpush2.bf16.msra.mxu0 %v285
  %1156 = vmatprep.subr.bf16.mxu0 0
  %1157 = vmatpush2.bf16.msra.mxu0 %v284
  %1158 = vmatprep.subr.bf16.mxu0 0
  %1159 = vmatpush2.bf16.msra.mxu0 %v283
  %1160 = vmatprep.subr.bf16.mxu0 0
  %1161 = vmatpush2.bf16.msra.mxu0 %v282
  %1162 = vmatprep.subr.bf16.mxu0 0
  %1163 = vmatpush2.bf16.msra.mxu0 %v281
  %1164 = vmatprep.mubr.bf16.mxu0 %v1086
  %1165 = vmatmul.mubr.bf16.gmra.mxu0 %v1085
  %v1166 = vpop.f32.mrf.mxu0
  %v1167 = vadd.f32 %v1126, %v1166
  %v1168 = vpop.f32.mrf.mxu0
  %v1169 = vpop.f32.mrf.mxu0
  %v1170 = vadd.f32 %v1129, %v1169
  %v1171 = vpop.f32.mrf.mxu0
  %1172 = vdwg.mxu0
  %v1173 = vmax.f32 %v1167, 0.0
  %v1174 = vmax.f32 %v1170, 0.0
  %v1175 = vpack.c.bf16 %v1174, %v1173
  %s1176 = scalar_lea.vmem %s0, 256
  %v1177 = vld [vmem:[%s1176] sm:$0xff]
  %v1178 = vld [vmem:[%s1176 + $0x8] sm:$0xff]
  %v1179 = vld [vmem:[%s1176 + $0x10] sm:$0xff]
  %v1180 = vld [vmem:[%s1176 + $0x18] sm:$0xff]
  %v1185 = vunpack.c.l.b16 %v1177
  %v1186 = vunpack.c.h.b16 %v1177
  %v1187 = vunpack.c.l.b16 %v1178
  %v1188 = vunpack.c.h.b16 %v1178
  %v1189 = vunpack.c.l.b16 %v1179
  %v1190 = vunpack.c.h.b16 %v1179
  %v1191 = vunpack.c.l.b16 %v1180
  %v1192 = vunpack.c.h.b16 %v1180
  %v1193 = vpack.c.b16 %v1189, %v1185
  %v1194 = vpack.c.b16 %v1190, %v1186
  %v1195 = vpack.c.b16 %v1191, %v1187
  %v1196 = vpack.c.b16 %v1192, %v1188
  %1201 = vmatprep.subr.bf16.mxu0 0
  %1202 = vmatpush1.bf16.msra.mxu0 %v264
  %1203 = vmatprep.subr.bf16.mxu0 0
  %1204 = vmatpush1.bf16.msra.mxu0 %v263
  %1205 = vmatprep.subr.bf16.mxu0 0
  %1206 = vmatpush1.bf16.msra.mxu0 %v262
  %1207 = vmatprep.subr.bf16.mxu0 0
  %1208 = vmatpush1.bf16.msra.mxu0 %v261
  %1209 = vmatprep.subr.bf16.mxu0 0
  %1210 = vmatpush1.bf16.msra.mxu0 %v260
  %1211 = vmatprep.subr.bf16.mxu0 0
  %1212 = vmatpush1.bf16.msra.mxu0 %v259
  %1213 = vmatprep.subr.bf16.mxu0 0
  %1214 = vmatpush1.bf16.msra.mxu0 %v258
  %1215 = vmatprep.subr.bf16.mxu0 0
  %1216 = vmatpush1.bf16.msra.mxu0 %v257
  %1217 = vmatprep.subr.bf16.mxu0 0
  %1218 = vmatpush2.bf16.msra.mxu0 %v272
  %1219 = vmatprep.subr.bf16.mxu0 0
  %1220 = vmatpush2.bf16.msra.mxu0 %v271
  %1221 = vmatprep.subr.bf16.mxu0 0
  %1222 = vmatpush2.bf16.msra.mxu0 %v270
  %1223 = vmatprep.subr.bf16.mxu0 0
  %1224 = vmatpush2.bf16.msra.mxu0 %v269
  %1225 = vmatprep.subr.bf16.mxu0 0
  %1226 = vmatpush2.bf16.msra.mxu0 %v268
  %1227 = vmatprep.subr.bf16.mxu0 0
  %1228 = vmatpush2.bf16.msra.mxu0 %v267
  %1229 = vmatprep.subr.bf16.mxu0 0
  %1230 = vmatpush2.bf16.msra.mxu0 %v266
  %1231 = vmatprep.subr.bf16.mxu0 0
  %1232 = vmatpush2.bf16.msra.mxu0 %v265
  %1233 = vmatprep.mubr.bf16.mxu0 %v1194
  %1234 = vmatmul.mubr.bf16.gmra.mxu0 %v1193
  %v1235 = vpop.f32.mrf.mxu0
  %v1236 = vadd.f32 %v107, %v1235
  %v1237 = vpop.f32.mrf.mxu0
  %v1238 = vpop.f32.mrf.mxu0
  %v1239 = vadd.f32 %v107, %v1238
  %v1240 = vpop.f32.mrf.mxu0
  %1241 = vdwg.mxu0
  %1242 = vmatprep.subr.bf16.mxu0 0
  %1243 = vmatpush1.bf16.msra.mxu0 %v280
  %1244 = vmatprep.subr.bf16.mxu0 0
  %1245 = vmatpush1.bf16.msra.mxu0 %v279
  %1246 = vmatprep.subr.bf16.mxu0 0
  %1247 = vmatpush1.bf16.msra.mxu0 %v278
  %1248 = vmatprep.subr.bf16.mxu0 0
  %1249 = vmatpush1.bf16.msra.mxu0 %v277
  %1250 = vmatprep.subr.bf16.mxu0 0
  %1251 = vmatpush1.bf16.msra.mxu0 %v276
  %1252 = vmatprep.subr.bf16.mxu0 0
  %1253 = vmatpush1.bf16.msra.mxu0 %v275
  %1254 = vmatprep.subr.bf16.mxu0 0
  %1255 = vmatpush1.bf16.msra.mxu0 %v274
  %1256 = vmatprep.subr.bf16.mxu0 0
  %1257 = vmatpush1.bf16.msra.mxu0 %v273
  %1258 = vmatprep.subr.bf16.mxu0 0
  %1259 = vmatpush2.bf16.msra.mxu0 %v288
  %1260 = vmatprep.subr.bf16.mxu0 0
  %1261 = vmatpush2.bf16.msra.mxu0 %v287
  %1262 = vmatprep.subr.bf16.mxu0 0
  %1263 = vmatpush2.bf16.msra.mxu0 %v286
  %1264 = vmatprep.subr.bf16.mxu0 0
  %1265 = vmatpush2.bf16.msra.mxu0 %v285
  %1266 = vmatprep.subr.bf16.mxu0 0
  %1267 = vmatpush2.bf16.msra.mxu0 %v284
  %1268 = vmatprep.subr.bf16.mxu0 0
  %1269 = vmatpush2.bf16.msra.mxu0 %v283
  %1270 = vmatprep.subr.bf16.mxu0 0
  %1271 = vmatpush2.bf16.msra.mxu0 %v282
  %1272 = vmatprep.subr.bf16.mxu0 0
  %1273 = vmatpush2.bf16.msra.mxu0 %v281
  %1274 = vmatprep.mubr.bf16.mxu0 %v1196
  %1275 = vmatmul.mubr.bf16.gmra.mxu0 %v1195
  %v1276 = vpop.f32.mrf.mxu0
  %v1277 = vadd.f32 %v1236, %v1276
  %v1278 = vpop.f32.mrf.mxu0
  %v1279 = vpop.f32.mrf.mxu0
  %v1280 = vadd.f32 %v1239, %v1279
  %v1281 = vpop.f32.mrf.mxu0
  %1282 = vdwg.mxu0
  %v1283 = vmax.f32 %v1277, 0.0
  %v1284 = vmax.f32 %v1280, 0.0
  %v1285 = vpack.c.bf16 %v1284, %v1283
  %v1286 = vld [vmem:[%s3] sm:$0xf]
  %v1287 = vld [vmem:[%s3 + $0x4] sm:$0xf]
  %v1288 = vld [vmem:[%s3 + $0x8] sm:$0xf]
  %v1289 = vld [vmem:[%s3 + $0xc] sm:$0xf]
  %v1290 = vld [vmem:[%s3 + $0x10] sm:$0xf]
  %v1291 = vld [vmem:[%s3 + $0x14] sm:$0xf]
  %v1292 = vld [vmem:[%s3 + $0x18] sm:$0xf]
  %v1293 = vld [vmem:[%s3 + $0x1c] sm:$0xf]
  %s1294 = scalar_lea.vmem %s3, 32
  %v1295 = vld [vmem:[%s1294] sm:$0xf]
  %v1296 = vld [vmem:[%s1294 + $0x4] sm:$0xf]
  %v1297 = vld [vmem:[%s1294 + $0x8] sm:$0xf]
  %v1298 = vld [vmem:[%s1294 + $0xc] sm:$0xf]
  %v1299 = vld [vmem:[%s1294 + $0x10] sm:$0xf]
  %v1300 = vld [vmem:[%s1294 + $0x14] sm:$0xf]
  %v1301 = vld [vmem:[%s1294 + $0x18] sm:$0xf]
  %v1302 = vld [vmem:[%s1294 + $0x1c] sm:$0xf]
  %s1303 = scalar_lea.vmem %s3, 64
  %v1304 = vld [vmem:[%s1303] sm:$0xf]
  %v1305 = vld [vmem:[%s1303 + $0x4] sm:$0xf]
  %v1306 = vld [vmem:[%s1303 + $0x8] sm:$0xf]
  %v1307 = vld [vmem:[%s1303 + $0xc] sm:$0xf]
  %v1308 = vld [vmem:[%s1303 + $0x10] sm:$0xf]
  %v1309 = vld [vmem:[%s1303 + $0x14] sm:$0xf]
  %v1310 = vld [vmem:[%s1303 + $0x18] sm:$0xf]
  %v1311 = vld [vmem:[%s1303 + $0x1c] sm:$0xf]
  %s1312 = scalar_lea.vmem %s3, 96
  %v1313 = vld [vmem:[%s1312] sm:$0xf]
  %v1314 = vld [vmem:[%s1312 + $0x4] sm:$0xf]
  %v1315 = vld [vmem:[%s1312 + $0x8] sm:$0xf]
  %v1316 = vld [vmem:[%s1312 + $0xc] sm:$0xf]
  %v1317 = vld [vmem:[%s1312 + $0x10] sm:$0xf]
  %v1318 = vld [vmem:[%s1312 + $0x14] sm:$0xf]
  %v1319 = vld [vmem:[%s1312 + $0x18] sm:$0xf]
  %v1320 = vld [vmem:[%s1312 + $0x1c] sm:$0xf]
  %s1321 = scalar_lea.vmem %s3, 128
  %v1322 = vld [vmem:[%s1321] sm:$0xf]
  %v1323 = vld [vmem:[%s1321 + $0x4] sm:$0xf]
  %v1324 = vld [vmem:[%s1321 + $0x8] sm:$0xf]
  %v1325 = vld [vmem:[%s1321 + $0xc] sm:$0xf]
  %v1326 = vld [vmem:[%s1321 + $0x10] sm:$0xf]
  %v1327 = vld [vmem:[%s1321 + $0x14] sm:$0xf]
  %v1328 = vld [vmem:[%s1321 + $0x18] sm:$0xf]
  %v1329 = vld [vmem:[%s1321 + $0x1c] sm:$0xf]
  %s1330 = scalar_lea.vmem %s3, 160
  %v1331 = vld [vmem:[%s1330] sm:$0xf]
  %v1332 = vld [vmem:[%s1330 + $0x4] sm:$0xf]
  %v1333 = vld [vmem:[%s1330 + $0x8] sm:$0xf]
  %v1334 = vld [vmem:[%s1330 + $0xc] sm:$0xf]
  %v1335 = vld [vmem:[%s1330 + $0x10] sm:$0xf]
  %v1336 = vld [vmem:[%s1330 + $0x14] sm:$0xf]
  %v1337 = vld [vmem:[%s1330 + $0x18] sm:$0xf]
  %v1338 = vld [vmem:[%s1330 + $0x1c] sm:$0xf]
  %s1339 = scalar_lea.vmem %s3, 192
  %v1340 = vld [vmem:[%s1339] sm:$0xf]
  %v1341 = vld [vmem:[%s1339 + $0x4] sm:$0xf]
  %v1342 = vld [vmem:[%s1339 + $0x8] sm:$0xf]
  %v1343 = vld [vmem:[%s1339 + $0xc] sm:$0xf]
  %v1344 = vld [vmem:[%s1339 + $0x10] sm:$0xf]
  %v1345 = vld [vmem:[%s1339 + $0x14] sm:$0xf]
  %v1346 = vld [vmem:[%s1339 + $0x18] sm:$0xf]
  %v1347 = vld [vmem:[%s1339 + $0x1c] sm:$0xf]
  %s1348 = scalar_lea.vmem %s3, 224
  %v1349 = vld [vmem:[%s1348] sm:$0xf]
  %v1350 = vld [vmem:[%s1348 + $0x4] sm:$0xf]
  %v1351 = vld [vmem:[%s1348 + $0x8] sm:$0xf]
  %v1352 = vld [vmem:[%s1348 + $0xc] sm:$0xf]
  %v1353 = vld [vmem:[%s1348 + $0x10] sm:$0xf]
  %v1354 = vld [vmem:[%s1348 + $0x14] sm:$0xf]
  %v1355 = vld [vmem:[%s1348 + $0x18] sm:$0xf]
  %v1356 = vld [vmem:[%s1348 + $0x1c] sm:$0xf]
  %s1357 = scalar_lea.vmem %s3, 256
  %v1358 = vld [vmem:[%s1357] sm:$0xf]
  %v1359 = vld [vmem:[%s1357 + $0x4] sm:$0xf]
  %v1360 = vld [vmem:[%s1357 + $0x8] sm:$0xf]
  %v1361 = vld [vmem:[%s1357 + $0xc] sm:$0xf]
  %v1362 = vld [vmem:[%s1357 + $0x10] sm:$0xf]
  %v1363 = vld [vmem:[%s1357 + $0x14] sm:$0xf]
  %v1364 = vld [vmem:[%s1357 + $0x18] sm:$0xf]
  %v1365 = vld [vmem:[%s1357 + $0x1c] sm:$0xf]
  %v1374 = vunpack.c.l.b16 %v1295
  %v1375 = vunpack.c.l.b16 %v1296
  %v1376 = vunpack.c.l.b16 %v1297
  %v1377 = vunpack.c.l.b16 %v1298
  %v1378 = vunpack.c.l.b16 %v1299
  %v1379 = vunpack.c.l.b16 %v1300
  %v1380 = vunpack.c.l.b16 %v1301
  %v1381 = vunpack.c.l.b16 %v1302
  %v1382 = vpack.c.b16 %v1375, %v1374
  %v1383 = vpack.c.b16 %v1377, %v1376
  %v1384 = vpack.c.b16 %v1379, %v1378
  %v1385 = vpack.c.b16 %v1381, %v1380
  %vm1390 = vcmask 523264
  %v1392 = vsel %vm1390, %v515, 0
  %1394 = vmatprep.subr.bf16.mxu0 0
  %1395 = vmatpush1.bf16.msra.mxu0 0
  %1396 = vmatprep.subr.bf16.mxu0 0
  %1397 = vmatpush1.bf16.msra.mxu0 0
  %1398 = vmatprep.subr.bf16.mxu0 0
  %1399 = vmatpush1.bf16.msra.mxu0 0
  %1400 = vmatprep.subr.bf16.mxu0 0
  %1401 = vmatpush1.bf16.msra.mxu0 0
  %1402 = vmatprep.subr.bf16.mxu0 0
  %1403 = vmatpush1.bf16.msra.mxu0 %v1385
  %1404 = vmatprep.subr.bf16.mxu0 0
  %1405 = vmatpush1.bf16.msra.mxu0 %v1384
  %1406 = vmatprep.subr.bf16.mxu0 0
  %1407 = vmatpush1.bf16.msra.mxu0 %v1383
  %1408 = vmatprep.subr.bf16.mxu0 0
  %1409 = vmatpush1.bf16.msra.mxu0 %v1382
  %1410 = vmatprep.subr.bf16.mxu0 0
  %1411 = vmatpush2.bf16.msra.mxu0 0
  %1412 = vmatprep.subr.bf16.mxu0 0
  %1413 = vmatpush2.bf16.msra.mxu0 0
  %1414 = vmatprep.subr.bf16.mxu0 0
  %1415 = vmatpush2.bf16.msra.mxu0 0
  %1416 = vmatprep.subr.bf16.mxu0 0
  %1417 = vmatpush2.bf16.msra.mxu0 0
  %1418 = vmatprep.subr.bf16.mxu0 0
  %1419 = vmatpush2.bf16.msra.mxu0 0
  %1420 = vmatprep.subr.bf16.mxu0 0
  %1421 = vmatpush2.bf16.msra.mxu0 0
  %1422 = vmatprep.subr.bf16.mxu0 0
  %1423 = vmatpush2.bf16.msra.mxu0 0
  %1424 = vmatprep.subr.bf16.mxu0 0
  %1425 = vmatpush2.bf16.msra.mxu0 0
  %1426 = vmatprep.mubr.bf16.mxu0 0
  %1427 = vmatmul.mubr.bf16.gmra.mxu0 %v1392
  %v1428 = vpop.f32.mrf.mxu0
  %v1429 = vadd.f32 0.0, %v1428
  %v1430 = vpop.f32.mrf.mxu0
  %v1431 = vpop.f32.mrf.mxu0
  %v1432 = vadd.f32 0.0, %v1431
  %v1433 = vpop.f32.mrf.mxu0
  %1434 = vdwg.mxu0
  %v1443 = vunpack.c.l.b16 %v1286
  %v1444 = vunpack.c.l.b16 %v1287
  %v1445 = vunpack.c.l.b16 %v1288
  %v1446 = vunpack.c.l.b16 %v1289
  %v1447 = vunpack.c.l.b16 %v1290
  %v1448 = vunpack.c.l.b16 %v1291
  %v1449 = vunpack.c.l.b16 %v1292
  %v1450 = vunpack.c.l.b16 %v1293
  %v1451 = vpack.c.b16 %v1444, %v1443
  %v1452 = vpack.c.b16 %v1446, %v1445
  %v1453 = vpack.c.b16 %v1448, %v1447
  %v1454 = vpack.c.b16 %v1450, %v1449
  %v1460 = vsel %vm1390, %v405, 0
  %1462 = vmatprep.subr.bf16.mxu0 0
  %1463 = vmatpush1.bf16.msra.mxu0 0
  %1464 = vmatprep.subr.bf16.mxu0 0
  %1465 = vmatpush1.bf16.msra.mxu0 0
  %1466 = vmatprep.subr.bf16.mxu0 0
  %1467 = vmatpush1.bf16.msra.mxu0 0
  %1468 = vmatprep.subr.bf16.mxu0 0
  %1469 = vmatpush1.bf16.msra.mxu0 0
  %1470 = vmatprep.subr.bf16.mxu0 0
  %1471 = vmatpush1.bf16.msra.mxu0 %v1454
  %1472 = vmatprep.subr.bf16.mxu0 0
  %1473 = vmatpush1.bf16.msra.mxu0 %v1453
  %1474 = vmatprep.subr.bf16.mxu0 0
  %1475 = vmatpush1.bf16.msra.mxu0 %v1452
  %1476 = vmatprep.subr.bf16.mxu0 0
  %1477 = vmatpush1.bf16.msra.mxu0 %v1451
  %1478 = vmatprep.subr.bf16.mxu0 0
  %1479 = vmatpush2.bf16.msra.mxu0 0
  %1480 = vmatprep.subr.bf16.mxu0 0
  %1481 = vmatpush2.bf16.msra.mxu0 0
  %1482 = vmatprep.subr.bf16.mxu0 0
  %1483 = vmatpush2.bf16.msra.mxu0 0
  %1484 = vmatprep.subr.bf16.mxu0 0
  %1485 = vmatpush2.bf16.msra.mxu0 0
  %1486 = vmatprep.subr.bf16.mxu0 0
  %1487 = vmatpush2.bf16.msra.mxu0 0
  %1488 = vmatprep.subr.bf16.mxu0 0
  %1489 = vmatpush2.bf16.msra.mxu0 0
  %1490 = vmatprep.subr.bf16.mxu0 0
  %1491 = vmatpush2.bf16.msra.mxu0 0
  %1492 = vmatprep.subr.bf16.mxu0 0
  %1493 = vmatpush2.bf16.msra.mxu0 0
  %1494 = vmatprep.mubr.bf16.mxu0 0
  %1495 = vmatmul.mubr.bf16.gmra.mxu0 %v1460
  %v1496 = vpop.f32.mrf.mxu0
  %v1497 = vadd.f32 %v1429, %v1496
  %v1498 = vpop.f32.mrf.mxu0
  %v1499 = vpop.f32.mrf.mxu0
  %v1500 = vadd.f32 %v1432, %v1499
  %v1501 = vpop.f32.mrf.mxu0
  %1502 = vdwg.mxu0
  %v1511 = vunpack.c.l.b16 %v1304
  %v1512 = vunpack.c.l.b16 %v1305
  %v1513 = vunpack.c.l.b16 %v1306
  %v1514 = vunpack.c.l.b16 %v1307
  %v1515 = vunpack.c.l.b16 %v1308
  %v1516 = vunpack.c.l.b16 %v1309
  %v1517 = vunpack.c.l.b16 %v1310
  %v1518 = vunpack.c.l.b16 %v1311
  %v1519 = vpack.c.b16 %v1512, %v1511
  %v1520 = vpack.c.b16 %v1514, %v1513
  %v1521 = vpack.c.b16 %v1516, %v1515
  %v1522 = vpack.c.b16 %v1518, %v1517
  %v1528 = vsel %vm1390, %v625, 0
  %1530 = vmatprep.subr.bf16.mxu0 0
  %1531 = vmatpush1.bf16.msra.mxu0 0
  %1532 = vmatprep.subr.bf16.mxu0 0
  %1533 = vmatpush1.bf16.msra.mxu0 0
  %1534 = vmatprep.subr.bf16.mxu0 0
  %1535 = vmatpush1.bf16.msra.mxu0 0
  %1536 = vmatprep.subr.bf16.mxu0 0
  %1537 = vmatpush1.bf16.msra.mxu0 0
  %1538 = vmatprep.subr.bf16.mxu0 0
  %1539 = vmatpush1.bf16.msra.mxu0 %v1522
  %1540 = vmatprep.subr.bf16.mxu0 0
  %1541 = vmatpush1.bf16.msra.mxu0 %v1521
  %1542 = vmatprep.subr.bf16.mxu0 0
  %1543 = vmatpush1.bf16.msra.mxu0 %v1520
  %1544 = vmatprep.subr.bf16.mxu0 0
  %1545 = vmatpush1.bf16.msra.mxu0 %v1519
  %1546 = vmatprep.subr.bf16.mxu0 0
  %1547 = vmatpush2.bf16.msra.mxu0 0
  %1548 = vmatprep.subr.bf16.mxu0 0
  %1549 = vmatpush2.bf16.msra.mxu0 0
  %1550 = vmatprep.subr.bf16.mxu0 0
  %1551 = vmatpush2.bf16.msra.mxu0 0
  %1552 = vmatprep.subr.bf16.mxu0 0
  %1553 = vmatpush2.bf16.msra.mxu0 0
  %1554 = vmatprep.subr.bf16.mxu0 0
  %1555 = vmatpush2.bf16.msra.mxu0 0
  %1556 = vmatprep.subr.bf16.mxu0 0
  %1557 = vmatpush2.bf16.msra.mxu0 0
  %1558 = vmatprep.subr.bf16.mxu0 0
  %1559 = vmatpush2.bf16.msra.mxu0 0
  %1560 = vmatprep.subr.bf16.mxu0 0
  %1561 = vmatpush2.bf16.msra.mxu0 0
  %1562 = vmatprep.mubr.bf16.mxu0 0
  %1563 = vmatmul.mubr.bf16.gmra.mxu0 %v1528
  %v1564 = vpop.f32.mrf.mxu0
  %v1565 = vadd.f32 0.0, %v1564
  %v1566 = vpop.f32.mrf.mxu0
  %v1567 = vpop.f32.mrf.mxu0
  %v1568 = vadd.f32 0.0, %v1567
  %v1569 = vpop.f32.mrf.mxu0
  %1570 = vdwg.mxu0
  %v1571 = vadd.f32 %v1497, %v1565
  %v1572 = vadd.f32 %v1500, %v1568
  %v1581 = vunpack.c.l.b16 %v1313
  %v1582 = vunpack.c.l.b16 %v1314
  %v1583 = vunpack.c.l.b16 %v1315
  %v1584 = vunpack.c.l.b16 %v1316
  %v1585 = vunpack.c.l.b16 %v1317
  %v1586 = vunpack.c.l.b16 %v1318
  %v1587 = vunpack.c.l.b16 %v1319
  %v1588 = vunpack.c.l.b16 %v1320
  %v1589 = vpack.c.b16 %v1582, %v1581
  %v1590 = vpack.c.b16 %v1584, %v1583
  %v1591 = vpack.c.b16 %v1586, %v1585
  %v1592 = vpack.c.b16 %v1588, %v1587
  %v1598 = vsel %vm1390, %v735, 0
  %1600 = vmatprep.subr.bf16.mxu0 0
  %1601 = vmatpush1.bf16.msra.mxu0 0
  %1602 = vmatprep.subr.bf16.mxu0 0
  %1603 = vmatpush1.bf16.msra.mxu0 0
  %1604 = vmatprep.subr.bf16.mxu0 0
  %1605 = vmatpush1.bf16.msra.mxu0 0
  %1606 = vmatprep.subr.bf16.mxu0 0
  %1607 = vmatpush1.bf16.msra.mxu0 0
  %1608 = vmatprep.subr.bf16.mxu0 0
  %1609 = vmatpush1.bf16.msra.mxu0 %v1592
  %1610 = vmatprep.subr.bf16.mxu0 0
  %1611 = vmatpush1.bf16.msra.mxu0 %v1591
  %1612 = vmatprep.subr.bf16.mxu0 0
  %1613 = vmatpush1.bf16.msra.mxu0 %v1590
  %1614 = vmatprep.subr.bf16.mxu0 0
  %1615 = vmatpush1.bf16.msra.mxu0 %v1589
  %1616 = vmatprep.subr.bf16.mxu0 0
  %1617 = vmatpush2.bf16.msra.mxu0 0
  %1618 = vmatprep.subr.bf16.mxu0 0
  %1619 = vmatpush2.bf16.msra.mxu0 0
  %1620 = vmatprep.subr.bf16.mxu0 0
  %1621 = vmatpush2.bf16.msra.mxu0 0
  %1622 = vmatprep.subr.bf16.mxu0 0
  %1623 = vmatpush2.bf16.msra.mxu0 0
  %1624 = vmatprep.subr.bf16.mxu0 0
  %1625 = vmatpush2.bf16.msra.mxu0 0
  %1626 = vmatprep.subr.bf16.mxu0 0
  %1627 = vmatpush2.bf16.msra.mxu0 0
  %1628 = vmatprep.subr.bf16.mxu0 0
  %1629 = vmatpush2.bf16.msra.mxu0 0
  %1630 = vmatprep.subr.bf16.mxu0 0
  %1631 = vmatpush2.bf16.msra.mxu0 0
  %1632 = vmatprep.mubr.bf16.mxu0 0
  %1633 = vmatmul.mubr.bf16.gmra.mxu0 %v1598
  %v1634 = vpop.f32.mrf.mxu0
  %v1635 = vadd.f32 0.0, %v1634
  %v1636 = vpop.f32.mrf.mxu0
  %v1637 = vpop.f32.mrf.mxu0
  %v1638 = vadd.f32 0.0, %v1637
  %v1639 = vpop.f32.mrf.mxu0
  %1640 = vdwg.mxu0
  %v1641 = vadd.f32 %v1571, %v1635
  %v1642 = vadd.f32 %v1572, %v1638
  %v1651 = vunpack.c.l.b16 %v1322
  %v1652 = vunpack.c.l.b16 %v1323
  %v1653 = vunpack.c.l.b16 %v1324
  %v1654 = vunpack.c.l.b16 %v1325
  %v1655 = vunpack.c.l.b16 %v1326
  %v1656 = vunpack.c.l.b16 %v1327
  %v1657 = vunpack.c.l.b16 %v1328
  %v1658 = vunpack.c.l.b16 %v1329
  %v1659 = vpack.c.b16 %v1652, %v1651
  %v1660 = vpack.c.b16 %v1654, %v1653
  %v1661 = vpack.c.b16 %v1656, %v1655
  %v1662 = vpack.c.b16 %v1658, %v1657
  %v1668 = vsel %vm1390, %v845, 0
  %1670 = vmatprep.subr.bf16.mxu0 0
  %1671 = vmatpush1.bf16.msra.mxu0 0
  %1672 = vmatprep.subr.bf16.mxu0 0
  %1673 = vmatpush1.bf16.msra.mxu0 0
  %1674 = vmatprep.subr.bf16.mxu0 0
  %1675 = vmatpush1.bf16.msra.mxu0 0
  %1676 = vmatprep.subr.bf16.mxu0 0
  %1677 = vmatpush1.bf16.msra.mxu0 0
  %1678 = vmatprep.subr.bf16.mxu0 0
  %1679 = vmatpush1.bf16.msra.mxu0 %v1662
  %1680 = vmatprep.subr.bf16.mxu0 0
  %1681 = vmatpush1.bf16.msra.mxu0 %v1661
  %1682 = vmatprep.subr.bf16.mxu0 0
  %1683 = vmatpush1.bf16.msra.mxu0 %v1660
  %1684 = vmatprep.subr.bf16.mxu0 0
  %1685 = vmatpush1.bf16.msra.mxu0 %v1659
  %1686 = vmatprep.subr.bf16.mxu0 0
  %1687 = vmatpush2.bf16.msra.mxu0 0
  %1688 = vmatprep.subr.bf16.mxu0 0
  %1689 = vmatpush2.bf16.msra.mxu0 0
  %1690 = vmatprep.subr.bf16.mxu0 0
  %1691 = vmatpush2.bf16.msra.mxu0 0
  %1692 = vmatprep.subr.bf16.mxu0 0
  %1693 = vmatpush2.bf16.msra.mxu0 0
  %1694 = vmatprep.subr.bf16.mxu0 0
  %1695 = vmatpush2.bf16.msra.mxu0 0
  %1696 = vmatprep.subr.bf16.mxu0 0
  %1697 = vmatpush2.bf16.msra.mxu0 0
  %1698 = vmatprep.subr.bf16.mxu0 0
  %1699 = vmatpush2.bf16.msra.mxu0 0
  %1700 = vmatprep.subr.bf16.mxu0 0
  %1701 = vmatpush2.bf16.msra.mxu0 0
  %1702 = vmatprep.mubr.bf16.mxu0 0
  %1703 = vmatmul.mubr.bf16.gmra.mxu0 %v1668
  %v1704 = vpop.f32.mrf.mxu0
  %v1705 = vadd.f32 0.0, %v1704
  %v1706 = vpop.f32.mrf.mxu0
  %v1707 = vpop.f32.mrf.mxu0
  %v1708 = vadd.f32 0.0, %v1707
  %v1709 = vpop.f32.mrf.mxu0
  %1710 = vdwg.mxu0
  %v1711 = vadd.f32 %v1641, %v1705
  %v1712 = vadd.f32 %v1642, %v1708
  %v1721 = vunpack.c.l.b16 %v1331
  %v1722 = vunpack.c.l.b16 %v1332
  %v1723 = vunpack.c.l.b16 %v1333
  %v1724 = vunpack.c.l.b16 %v1334
  %v1725 = vunpack.c.l.b16 %v1335
  %v1726 = vunpack.c.l.b16 %v1336
  %v1727 = vunpack.c.l.b16 %v1337
  %v1728 = vunpack.c.l.b16 %v1338
  %v1729 = vpack.c.b16 %v1722, %v1721
  %v1730 = vpack.c.b16 %v1724, %v1723
  %v1731 = vpack.c.b16 %v1726, %v1725
  %v1732 = vpack.c.b16 %v1728, %v1727
  %v1738 = vsel %vm1390, %v955, 0
  %1740 = vmatprep.subr.bf16.mxu0 0
  %1741 = vmatpush1.bf16.msra.mxu0 0
  %1742 = vmatprep.subr.bf16.mxu0 0
  %1743 = vmatpush1.bf16.msra.mxu0 0
  %1744 = vmatprep.subr.bf16.mxu0 0
  %1745 = vmatpush1.bf16.msra.mxu0 0
  %1746 = vmatprep.subr.bf16.mxu0 0
  %1747 = vmatpush1.bf16.msra.mxu0 0
  %1748 = vmatprep.subr.bf16.mxu0 0
  %1749 = vmatpush1.bf16.msra.mxu0 %v1732
  %1750 = vmatprep.subr.bf16.mxu0 0
  %1751 = vmatpush1.bf16.msra.mxu0 %v1731
  %1752 = vmatprep.subr.bf16.mxu0 0
  %1753 = vmatpush1.bf16.msra.mxu0 %v1730
  %1754 = vmatprep.subr.bf16.mxu0 0
  %1755 = vmatpush1.bf16.msra.mxu0 %v1729
  %1756 = vmatprep.subr.bf16.mxu0 0
  %1757 = vmatpush2.bf16.msra.mxu0 0
  %1758 = vmatprep.subr.bf16.mxu0 0
  %1759 = vmatpush2.bf16.msra.mxu0 0
  %1760 = vmatprep.subr.bf16.mxu0 0
  %1761 = vmatpush2.bf16.msra.mxu0 0
  %1762 = vmatprep.subr.bf16.mxu0 0
  %1763 = vmatpush2.bf16.msra.mxu0 0
  %1764 = vmatprep.subr.bf16.mxu0 0
  %1765 = vmatpush2.bf16.msra.mxu0 0
  %1766 = vmatprep.subr.bf16.mxu0 0
  %1767 = vmatpush2.bf16.msra.mxu0 0
  %1768 = vmatprep.subr.bf16.mxu0 0
  %1769 = vmatpush2.bf16.msra.mxu0 0
  %1770 = vmatprep.subr.bf16.mxu0 0
  %1771 = vmatpush2.bf16.msra.mxu0 0
  %1772 = vmatprep.mubr.bf16.mxu0 0
  %1773 = vmatmul.mubr.bf16.gmra.mxu0 %v1738
  %v1774 = vpop.f32.mrf.mxu0
  %v1775 = vadd.f32 0.0, %v1774
  %v1776 = vpop.f32.mrf.mxu0
  %v1777 = vpop.f32.mrf.mxu0
  %v1778 = vadd.f32 0.0, %v1777
  %v1779 = vpop.f32.mrf.mxu0
  %1780 = vdwg.mxu0
  %v1781 = vadd.f32 %v1711, %v1775
  %v1782 = vadd.f32 %v1712, %v1778
  %v1791 = vunpack.c.l.b16 %v1340
  %v1792 = vunpack.c.l.b16 %v1341
  %v1793 = vunpack.c.l.b16 %v1342
  %v1794 = vunpack.c.l.b16 %v1343
  %v1795 = vunpack.c.l.b16 %v1344
  %v1796 = vunpack.c.l.b16 %v1345
  %v1797 = vunpack.c.l.b16 %v1346
  %v1798 = vunpack.c.l.b16 %v1347
  %v1799 = vpack.c.b16 %v1792, %v1791
  %v1800 = vpack.c.b16 %v1794, %v1793
  %v1801 = vpack.c.b16 %v1796, %v1795
  %v1802 = vpack.c.b16 %v1798, %v1797
  %v1808 = vsel %vm1390, %v1065, 0
  %1810 = vmatprep.subr.bf16.mxu0 0
  %1811 = vmatpush1.bf16.msra.mxu0 0
  %1812 = vmatprep.subr.bf16.mxu0 0
  %1813 = vmatpush1.bf16.msra.mxu0 0
  %1814 = vmatprep.subr.bf16.mxu0 0
  %1815 = vmatpush1.bf16.msra.mxu0 0
  %1816 = vmatprep.subr.bf16.mxu0 0
  %1817 = vmatpush1.bf16.msra.mxu0 0
  %1818 = vmatprep.subr.bf16.mxu0 0
  %1819 = vmatpush1.bf16.msra.mxu0 %v1802
  %1820 = vmatprep.subr.bf16.mxu0 0
  %1821 = vmatpush1.bf16.msra.mxu0 %v1801
  %1822 = vmatprep.subr.bf16.mxu0 0
  %1823 = vmatpush1.bf16.msra.mxu0 %v1800
  %1824 = vmatprep.subr.bf16.mxu0 0
  %1825 = vmatpush1.bf16.msra.mxu0 %v1799
  %1826 = vmatprep.subr.bf16.mxu0 0
  %1827 = vmatpush2.bf16.msra.mxu0 0
  %1828 = vmatprep.subr.bf16.mxu0 0
  %1829 = vmatpush2.bf16.msra.mxu0 0
  %1830 = vmatprep.subr.bf16.mxu0 0
  %1831 = vmatpush2.bf16.msra.mxu0 0
  %1832 = vmatprep.subr.bf16.mxu0 0
  %1833 = vmatpush2.bf16.msra.mxu0 0
  %1834 = vmatprep.subr.bf16.mxu0 0
  %1835 = vmatpush2.bf16.msra.mxu0 0
  %1836 = vmatprep.subr.bf16.mxu0 0
  %1837 = vmatpush2.bf16.msra.mxu0 0
  %1838 = vmatprep.subr.bf16.mxu0 0
  %1839 = vmatpush2.bf16.msra.mxu0 0
  %1840 = vmatprep.subr.bf16.mxu0 0
  %1841 = vmatpush2.bf16.msra.mxu0 0
  %1842 = vmatprep.mubr.bf16.mxu0 0
  %1843 = vmatmul.mubr.bf16.gmra.mxu0 %v1808
  %v1844 = vpop.f32.mrf.mxu0
  %v1845 = vadd.f32 0.0, %v1844
  %v1846 = vpop.f32.mrf.mxu0
  %v1847 = vpop.f32.mrf.mxu0
  %v1848 = vadd.f32 0.0, %v1847
  %v1849 = vpop.f32.mrf.mxu0
  %1850 = vdwg.mxu0
  %v1851 = vadd.f32 %v1781, %v1845
  %v1852 = vadd.f32 %v1782, %v1848
  %v1861 = vunpack.c.l.b16 %v1349
  %v1862 = vunpack.c.l.b16 %v1350
  %v1863 = vunpack.c.l.b16 %v1351
  %v1864 = vunpack.c.l.b16 %v1352
  %v1865 = vunpack.c.l.b16 %v1353
  %v1866 = vunpack.c.l.b16 %v1354
  %v1867 = vunpack.c.l.b16 %v1355
  %v1868 = vunpack.c.l.b16 %v1356
  %v1869 = vpack.c.b16 %v1862, %v1861
  %v1870 = vpack.c.b16 %v1864, %v1863
  %v1871 = vpack.c.b16 %v1866, %v1865
  %v1872 = vpack.c.b16 %v1868, %v1867
  %v1878 = vsel %vm1390, %v1175, 0
  %1880 = vmatprep.subr.bf16.mxu0 0
  %1881 = vmatpush1.bf16.msra.mxu0 0
  %1882 = vmatprep.subr.bf16.mxu0 0
  %1883 = vmatpush1.bf16.msra.mxu0 0
  %1884 = vmatprep.subr.bf16.mxu0 0
  %1885 = vmatpush1.bf16.msra.mxu0 0
  %1886 = vmatprep.subr.bf16.mxu0 0
  %1887 = vmatpush1.bf16.msra.mxu0 0
  %1888 = vmatprep.subr.bf16.mxu0 0
  %1889 = vmatpush1.bf16.msra.mxu0 %v1872
  %1890 = vmatprep.subr.bf16.mxu0 0
  %1891 = vmatpush1.bf16.msra.mxu0 %v1871
  %1892 = vmatprep.subr.bf16.mxu0 0
  %1893 = vmatpush1.bf16.msra.mxu0 %v1870
  %1894 = vmatprep.subr.bf16.mxu0 0
  %1895 = vmatpush1.bf16.msra.mxu0 %v1869
  %1896 = vmatprep.subr.bf16.mxu0 0
  %1897 = vmatpush2.bf16.msra.mxu0 0
  %1898 = vmatprep.subr.bf16.mxu0 0
  %1899 = vmatpush2.bf16.msra.mxu0 0
  %1900 = vmatprep.subr.bf16.mxu0 0
  %1901 = vmatpush2.bf16.msra.mxu0 0
  %1902 = vmatprep.subr.bf16.mxu0 0
  %1903 = vmatpush2.bf16.msra.mxu0 0
  %1904 = vmatprep.subr.bf16.mxu0 0
  %1905 = vmatpush2.bf16.msra.mxu0 0
  %1906 = vmatprep.subr.bf16.mxu0 0
  %1907 = vmatpush2.bf16.msra.mxu0 0
  %1908 = vmatprep.subr.bf16.mxu0 0
  %1909 = vmatpush2.bf16.msra.mxu0 0
  %1910 = vmatprep.subr.bf16.mxu0 0
  %1911 = vmatpush2.bf16.msra.mxu0 0
  %1912 = vmatprep.mubr.bf16.mxu0 0
  %1913 = vmatmul.mubr.bf16.gmra.mxu0 %v1878
  %v1914 = vpop.f32.mrf.mxu0
  %v1915 = vadd.f32 0.0, %v1914
  %v1916 = vpop.f32.mrf.mxu0
  %v1917 = vpop.f32.mrf.mxu0
  %v1918 = vadd.f32 0.0, %v1917
  %v1919 = vpop.f32.mrf.mxu0
  %1920 = vdwg.mxu0
  %v1921 = vadd.f32 %v1851, %v1915
  %v1922 = vadd.f32 %v1852, %v1918
  %v1931 = vunpack.c.l.b16 %v1358
  %v1932 = vunpack.c.l.b16 %v1359
  %v1933 = vunpack.c.l.b16 %v1360
  %v1934 = vunpack.c.l.b16 %v1361
  %v1935 = vunpack.c.l.b16 %v1362
  %v1936 = vunpack.c.l.b16 %v1363
  %v1937 = vunpack.c.l.b16 %v1364
  %v1938 = vunpack.c.l.b16 %v1365
  %v1939 = vpack.c.b16 %v1932, %v1931
  %v1940 = vpack.c.b16 %v1934, %v1933
  %v1941 = vpack.c.b16 %v1936, %v1935
  %v1942 = vpack.c.b16 %v1938, %v1937
  %v1948 = vsel %vm1390, %v1285, 0
  %1950 = vmatprep.subr.bf16.mxu0 0
  %1951 = vmatpush1.bf16.msra.mxu0 0
  %1952 = vmatprep.subr.bf16.mxu0 0
  %1953 = vmatpush1.bf16.msra.mxu0 0
  %1954 = vmatprep.subr.bf16.mxu0 0
  %1955 = vmatpush1.bf16.msra.mxu0 0
  %1956 = vmatprep.subr.bf16.mxu0 0
  %1957 = vmatpush1.bf16.msra.mxu0 0
  %1958 = vmatprep.subr.bf16.mxu0 0
  %1959 = vmatpush1.bf16.msra.mxu0 %v1942
  %1960 = vmatprep.subr.bf16.mxu0 0
  %1961 = vmatpush1.bf16.msra.mxu0 %v1941
  %1962 = vmatprep.subr.bf16.mxu0 0
  %1963 = vmatpush1.bf16.msra.mxu0 %v1940
  %1964 = vmatprep.subr.bf16.mxu0 0
  %1965 = vmatpush1.bf16.msra.mxu0 %v1939
  %1966 = vmatprep.subr.bf16.mxu0 0
  %1967 = vmatpush2.bf16.msra.mxu0 0
  %1968 = vmatprep.subr.bf16.mxu0 0
  %1969 = vmatpush2.bf16.msra.mxu0 0
  %1970 = vmatprep.subr.bf16.mxu0 0
  %1971 = vmatpush2.bf16.msra.mxu0 0
  %1972 = vmatprep.subr.bf16.mxu0 0
  %1973 = vmatpush2.bf16.msra.mxu0 0
  %1974 = vmatprep.subr.bf16.mxu0 0
  %1975 = vmatpush2.bf16.msra.mxu0 0
  %1976 = vmatprep.subr.bf16.mxu0 0
  %1977 = vmatpush2.bf16.msra.mxu0 0
  %1978 = vmatprep.subr.bf16.mxu0 0
  %1979 = vmatpush2.bf16.msra.mxu0 0
  %1980 = vmatprep.subr.bf16.mxu0 0
  %1981 = vmatpush2.bf16.msra.mxu0 0
  %1982 = vmatprep.mubr.bf16.mxu0 0
  %1983 = vmatmul.mubr.bf16.gmra.mxu0 %v1948
  %v1984 = vpop.f32.mrf.mxu0
  %v1985 = vadd.f32 0.0, %v1984
  %v1986 = vpop.f32.mrf.mxu0
  %v1987 = vpop.f32.mrf.mxu0
  %v1988 = vadd.f32 0.0, %v1987
  %v1989 = vpop.f32.mrf.mxu0
  %1990 = vdwg.mxu0
  %v1991 = vadd.f32 %v1921, %v1985
  %v1992 = vadd.f32 %v1922, %v1988
  %v1994 = vlaneseq
  %v1995 = vshrl.u32 %v1994, 7
  %v1996 = vsub.s32 0, %v1995
  %v1997 = vrot.slane %v98, %v1996
  %v1999 = vadd.f32 %v1991, %v1997
  %v2000 = vadd.f32 %v1992, %v1997
  %v2001 = vmax.f32 %v1999, 0.0
  %v2002 = vmax.f32 %v2000, 0.0
  %v2003 = vpack.c.bf16 %v2002, %v2001
  %v2004 = vld [vmem:[%s5] sm:$0xff]
  %v2005 = vld [vmem:[%s5 + $0x8] sm:$0xff]
  %v2006 = vld [vmem:[%s5 + $0x10] sm:$0xff]
  %v2007 = vld [vmem:[%s5 + $0x18] sm:$0xff]
  %v2008 = vld [vmem:[%s5 + $0x20] sm:$0xff]
  %v2009 = vld [vmem:[%s5 + $0x28] sm:$0xff]
  %v2010 = vld [vmem:[%s5 + $0x30] sm:$0xff]
  %v2011 = vld [vmem:[%s5 + $0x38] sm:$0xff]
  %v2012 = vld [vmem:[%s5 + $0x40] sm:$0xff]
  %v2013 = vld [vmem:[%s5 + $0x48] sm:$0xff]
  %v2014 = vld [vmem:[%s5 + $0x50] sm:$0xff]
  %v2015 = vld [vmem:[%s5 + $0x58] sm:$0xff]
  %v2016 = vld [vmem:[%s5 + $0x60] sm:$0xff]
  %v2017 = vld [vmem:[%s5 + $0x68] sm:$0xff]
  %v2018 = vld [vmem:[%s5 + $0x70] sm:$0xff]
  %v2019 = vld [vmem:[%s5 + $0x78] sm:$0xff]
  %v2020 = vld [vmem:[%s6] sm:$0xf]
  %v2022 = vlaneseq
  %v2023 = vshrl.u32 %v2022, 7
  %v2024 = vsub.s32 0, %v2023
  %v2025 = vrot.slane %v2020, %v2024
  %v2026 = vlaneseq
  %v2027 = vshrl.u32 %v2026, 7
  %v2028 = vsub.s32 1, %v2027
  %v2029 = vrot.slane %v2020, %v2028
  %v2030 = vlaneseq
  %v2031 = vshrl.u32 %v2030, 7
  %v2032 = vsub.s32 2, %v2031
  %v2033 = vrot.slane %v2020, %v2032
  %v2034 = vlaneseq
  %v2035 = vshrl.u32 %v2034, 7
  %v2036 = vsub.s32 3, %v2035
  %v2037 = vrot.slane %v2020, %v2036
  %v2058 = vunpack.c.l.b16 %v2004
  %v2059 = vunpack.c.h.b16 %v2004
  %v2060 = vunpack.c.l.b16 %v2005
  %v2061 = vunpack.c.h.b16 %v2005
  %v2062 = vunpack.c.l.b16 %v2006
  %v2063 = vunpack.c.h.b16 %v2006
  %v2064 = vunpack.c.l.b16 %v2007
  %v2065 = vunpack.c.h.b16 %v2007
  %v2066 = vunpack.c.l.b16 %v2008
  %v2067 = vunpack.c.h.b16 %v2008
  %v2068 = vunpack.c.l.b16 %v2009
  %v2069 = vunpack.c.h.b16 %v2009
  %v2070 = vunpack.c.l.b16 %v2010
  %v2071 = vunpack.c.h.b16 %v2010
  %v2072 = vunpack.c.l.b16 %v2011
  %v2073 = vunpack.c.h.b16 %v2011
  %v2074 = vunpack.c.l.b16 %v2012
  %v2075 = vunpack.c.h.b16 %v2012
  %v2076 = vunpack.c.l.b16 %v2013
  %v2077 = vunpack.c.h.b16 %v2013
  %v2078 = vunpack.c.l.b16 %v2014
  %v2079 = vunpack.c.h.b16 %v2014
  %v2080 = vunpack.c.l.b16 %v2015
  %v2081 = vunpack.c.h.b16 %v2015
  %v2082 = vunpack.c.l.b16 %v2016
  %v2083 = vunpack.c.h.b16 %v2016
  %v2084 = vunpack.c.l.b16 %v2017
  %v2085 = vunpack.c.h.b16 %v2017
  %v2086 = vunpack.c.l.b16 %v2018
  %v2087 = vunpack.c.h.b16 %v2018
  %v2088 = vunpack.c.l.b16 %v2019
  %v2089 = vunpack.c.h.b16 %v2019
  %v2090 = vpack.c.b16 %v2062, %v2058
  %v2091 = vpack.c.b16 %v2063, %v2059
  %v2092 = vpack.c.b16 %v2064, %v2060
  %v2093 = vpack.c.b16 %v2065, %v2061
  %v2094 = vpack.c.b16 %v2070, %v2066
  %v2095 = vpack.c.b16 %v2071, %v2067
  %v2096 = vpack.c.b16 %v2072, %v2068
  %v2097 = vpack.c.b16 %v2073, %v2069
  %v2098 = vpack.c.b16 %v2078, %v2074
  %v2099 = vpack.c.b16 %v2079, %v2075
  %v2100 = vpack.c.b16 %v2080, %v2076
  %v2101 = vpack.c.b16 %v2081, %v2077
  %v2102 = vpack.c.b16 %v2086, %v2082
  %v2103 = vpack.c.b16 %v2087, %v2083
  %v2104 = vpack.c.b16 %v2088, %v2084
  %v2105 = vpack.c.b16 %v2089, %v2085
  %v2123 = vsel %vm1390, %v2003, 0
  %2125 = vmatprep.subr.bf16.mxu0 0
  %2126 = vmatpush1.bf16.msra.mxu0 0
  %2127 = vmatprep.subr.bf16.mxu0 0
  %2128 = vmatpush1.bf16.msra.mxu0 0
  %2129 = vmatprep.subr.bf16.mxu0 0
  %2130 = vmatpush1.bf16.msra.mxu0 0
  %2131 = vmatprep.subr.bf16.mxu0 0
  %2132 = vmatpush1.bf16.msra.mxu0 0
  %2133 = vmatprep.subr.bf16.mxu0 %v2103
  %2134 = vmatpush1.bf16.msra.mxu0 %v2102
  %2135 = vmatprep.subr.bf16.mxu0 %v2099
  %2136 = vmatpush1.bf16.msra.mxu0 %v2098
  %2137 = vmatprep.subr.bf16.mxu0 %v2095
  %2138 = vmatpush1.bf16.msra.mxu0 %v2094
  %2139 = vmatprep.subr.bf16.mxu0 %v2091
  %2140 = vmatpush1.bf16.msra.mxu0 %v2090
  %2141 = vmatprep.subr.bf16.mxu0 0
  %2142 = vmatpush2.bf16.msra.mxu0 0
  %2143 = vmatprep.subr.bf16.mxu0 0
  %2144 = vmatpush2.bf16.msra.mxu0 0
  %2145 = vmatprep.subr.bf16.mxu0 0
  %2146 = vmatpush2.bf16.msra.mxu0 0
  %2147 = vmatprep.subr.bf16.mxu0 0
  %2148 = vmatpush2.bf16.msra.mxu0 0
  %2149 = vmatprep.subr.bf16.mxu0 0
  %2150 = vmatpush2.bf16.msra.mxu0 0
  %2151 = vmatprep.subr.bf16.mxu0 0
  %2152 = vmatpush2.bf16.msra.mxu0 0
  %2153 = vmatprep.subr.bf16.mxu0 0
  %2154 = vmatpush2.bf16.msra.mxu0 0
  %2155 = vmatprep.subr.bf16.mxu0 0
  %2156 = vmatpush2.bf16.msra.mxu0 0
  %2157 = vmatprep.mubr.bf16.mxu0 0
  %2158 = vmatmul.mubr.bf16.gmra.mxu0 %v2123
  %v2159 = vpop.f32.mrf.mxu0
  %v2160 = vadd.f32 %v2025, %v2159
  %v2161 = vpop.f32.mrf.mxu0
  %v2162 = vadd.f32 %v2029, %v2161
  %v2163 = vpop.f32.mrf.mxu0
  %v2164 = vadd.f32 %v2025, %v2163
  %v2165 = vpop.f32.mrf.mxu0
  %v2166 = vadd.f32 %v2029, %v2165
  %2167 = vdwg.mxu0
  %2168 = vmatprep.subr.bf16.mxu0 0
  %2169 = vmatpush1.bf16.msra.mxu0 0
  %2170 = vmatprep.subr.bf16.mxu0 0
  %2171 = vmatpush1.bf16.msra.mxu0 0
  %2172 = vmatprep.subr.bf16.mxu0 0
  %2173 = vmatpush1.bf16.msra.mxu0 0
  %2174 = vmatprep.subr.bf16.mxu0 0
  %2175 = vmatpush1.bf16.msra.mxu0 0
  %2176 = vmatprep.subr.bf16.mxu0 %v2105
  %2177 = vmatpush1.bf16.msra.mxu0 %v2104
  %2178 = vmatprep.subr.bf16.mxu0 %v2101
  %2179 = vmatpush1.bf16.msra.mxu0 %v2100
  %2180 = vmatprep.subr.bf16.mxu0 %v2097
  %2181 = vmatpush1.bf16.msra.mxu0 %v2096
  %2182 = vmatprep.subr.bf16.mxu0 %v2093
  %2183 = vmatpush1.bf16.msra.mxu0 %v2092
  %2184 = vmatprep.subr.bf16.mxu0 0
  %2185 = vmatpush2.bf16.msra.mxu0 0
  %2186 = vmatprep.subr.bf16.mxu0 0
  %2187 = vmatpush2.bf16.msra.mxu0 0
  %2188 = vmatprep.subr.bf16.mxu0 0
  %2189 = vmatpush2.bf16.msra.mxu0 0
  %2190 = vmatprep.subr.bf16.mxu0 0
  %2191 = vmatpush2.bf16.msra.mxu0 0
  %2192 = vmatprep.subr.bf16.mxu0 0
  %2193 = vmatpush2.bf16.msra.mxu0 0
  %2194 = vmatprep.subr.bf16.mxu0 0
  %2195 = vmatpush2.bf16.msra.mxu0 0
  %2196 = vmatprep.subr.bf16.mxu0 0
  %2197 = vmatpush2.bf16.msra.mxu0 0
  %2198 = vmatprep.subr.bf16.mxu0 0
  %2199 = vmatpush2.bf16.msra.mxu0 0
  %2200 = vmatprep.mubr.bf16.mxu0 0
  %2201 = vmatmul.mubr.bf16.gmra.mxu0 %v2123
  %v2202 = vpop.f32.mrf.mxu0
  %v2203 = vadd.f32 %v2033, %v2202
  %v2204 = vpop.f32.mrf.mxu0
  %v2205 = vadd.f32 %v2037, %v2204
  %v2206 = vpop.f32.mrf.mxu0
  %v2207 = vadd.f32 %v2033, %v2206
  %v2208 = vpop.f32.mrf.mxu0
  %v2209 = vadd.f32 %v2037, %v2208
  %2210 = vdwg.mxu0
  %v2211 = vmax.f32 %v2160, 0.0
  %v2212 = vmax.f32 %v2162, 0.0
  %v2213 = vmax.f32 %v2203, 0.0
  %v2214 = vmax.f32 %v2205, 0.0
  %v2215 = vmax.f32 %v2164, 0.0
  %v2216 = vmax.f32 %v2166, 0.0
  %v2217 = vmax.f32 %v2207, 0.0
  %v2218 = vmax.f32 %v2209, 0.0
  %v2219 = vpack.c.bf16 %v2215, %v2211
  %v2220 = vpack.c.bf16 %v2216, %v2212
  %v2221 = vpack.c.bf16 %v2217, %v2213
  %v2222 = vpack.c.bf16 %v2218, %v2214
  %v2223 = vld [vmem:[%s7] sm:$0xf]
  %v2224 = vld [vmem:[%s7 + $0x4] sm:$0xf]
  %v2225 = vld [vmem:[%s7 + $0x8] sm:$0xf]
  %v2226 = vld [vmem:[%s7 + $0xc] sm:$0xf]
  %v2227 = vld [vmem:[%s7 + $0x10] sm:$0xf]
  %v2228 = vld [vmem:[%s7 + $0x14] sm:$0xf]
  %v2229 = vld [vmem:[%s7 + $0x18] sm:$0xf]
  %v2230 = vld [vmem:[%s7 + $0x1c] sm:$0xf]
  %v2231 = vld [vmem:[%s7 + $0x20] sm:$0xf]
  %v2232 = vld [vmem:[%s7 + $0x24] sm:$0xf]
  %v2233 = vld [vmem:[%s7 + $0x28] sm:$0xf]
  %v2234 = vld [vmem:[%s7 + $0x2c] sm:$0xf]
  %v2235 = vld [vmem:[%s7 + $0x30] sm:$0xf]
  %v2236 = vld [vmem:[%s7 + $0x34] sm:$0xf]
  %v2237 = vld [vmem:[%s7 + $0x38] sm:$0xf]
  %v2238 = vld [vmem:[%s7 + $0x3c] sm:$0xf]
  %v2239 = vld [vmem:[%s7 + $0x40] sm:$0xf]
  %v2240 = vld [vmem:[%s7 + $0x44] sm:$0xf]
  %v2241 = vld [vmem:[%s7 + $0x48] sm:$0xf]
  %v2242 = vld [vmem:[%s7 + $0x4c] sm:$0xf]
  %v2243 = vld [vmem:[%s7 + $0x50] sm:$0xf]
  %v2244 = vld [vmem:[%s7 + $0x54] sm:$0xf]
  %v2245 = vld [vmem:[%s7 + $0x58] sm:$0xf]
  %v2246 = vld [vmem:[%s7 + $0x5c] sm:$0xf]
  %v2247 = vld [vmem:[%s7 + $0x60] sm:$0xf]
  %v2248 = vld [vmem:[%s7 + $0x64] sm:$0xf]
  %v2249 = vld [vmem:[%s7 + $0x68] sm:$0xf]
  %v2250 = vld [vmem:[%s7 + $0x6c] sm:$0xf]
  %v2251 = vld [vmem:[%s7 + $0x70] sm:$0xf]
  %v2252 = vld [vmem:[%s7 + $0x74] sm:$0xf]
  %v2253 = vld [vmem:[%s7 + $0x78] sm:$0xf]
  %v2254 = vld [vmem:[%s7 + $0x7c] sm:$0xf]
  %v2255 = vld [vmem:[%s7 + $0x80] sm:$0xf]
  %v2256 = vld [vmem:[%s7 + $0x84] sm:$0xf]
  %v2257 = vld [vmem:[%s7 + $0x88] sm:$0xf]
  %v2258 = vld [vmem:[%s7 + $0x8c] sm:$0xf]
  %v2259 = vld [vmem:[%s7 + $0x90] sm:$0xf]
  %v2260 = vld [vmem:[%s7 + $0x94] sm:$0xf]
  %v2261 = vld [vmem:[%s7 + $0x98] sm:$0xf]
  %v2262 = vld [vmem:[%s7 + $0x9c] sm:$0xf]
  %v2263 = vld [vmem:[%s7 + $0xa0] sm:$0xf]
  %v2264 = vld [vmem:[%s7 + $0xa4] sm:$0xf]
  %v2265 = vld [vmem:[%s7 + $0xa8] sm:$0xf]
  %v2266 = vld [vmem:[%s7 + $0xac] sm:$0xf]
  %v2267 = vld [vmem:[%s7 + $0xb0] sm:$0xf]
  %v2268 = vld [vmem:[%s7 + $0xb4] sm:$0xf]
  %v2269 = vld [vmem:[%s7 + $0xb8] sm:$0xf]
  %v2270 = vld [vmem:[%s7 + $0xbc] sm:$0xf]
  %v2271 = vld [vmem:[%s7 + $0xc0] sm:$0xf]
  %v2272 = vld [vmem:[%s7 + $0xc4] sm:$0xf]
  %v2273 = vld [vmem:[%s7 + $0xc8] sm:$0xf]
  %v2274 = vld [vmem:[%s7 + $0xcc] sm:$0xf]
  %v2275 = vld [vmem:[%s7 + $0xd0] sm:$0xf]
  %v2276 = vld [vmem:[%s7 + $0xd4] sm:$0xf]
  %v2277 = vld [vmem:[%s7 + $0xd8] sm:$0xf]
  %v2278 = vld [vmem:[%s7 + $0xdc] sm:$0xf]
  %v2279 = vld [vmem:[%s7 + $0xe0] sm:$0xf]
  %v2280 = vld [vmem:[%s7 + $0xe4] sm:$0xf]
  %v2281 = vld [vmem:[%s7 + $0xe8] sm:$0xf]
  %v2282 = vld [vmem:[%s7 + $0xec] sm:$0xf]
  %v2283 = vld [vmem:[%s7 + $0xf0] sm:$0xf]
  %v2284 = vld [vmem:[%s7 + $0xf4] sm:$0xf]
  %v2285 = vld [vmem:[%s7 + $0xf8] sm:$0xf]
  %v2286 = vld [vmem:[%s7 + $0xfc] sm:$0xf]
  %v2287 = vld [vmem:[%s8] sm:$0x1]
  %v2289 = vlaneseq
  %v2290 = vshrl.u32 %v2289, 7
  %v2291 = vsub.s32 0, %v2290
  %v2292 = vrot.slane %v2287, %v2291
  %v2358 = vunpack.c.l.b16 %v2223
  %v2359 = vunpack.c.l.b16 %v2224
  %v2360 = vunpack.c.l.b16 %v2225
  %v2361 = vunpack.c.l.b16 %v2226
  %v2362 = vunpack.c.l.b16 %v2227
  %v2363 = vunpack.c.l.b16 %v2228
  %v2364 = vunpack.c.l.b16 %v2229
  %v2365 = vunpack.c.l.b16 %v2230
  %v2366 = vunpack.c.l.b16 %v2231
  %v2367 = vunpack.c.l.b16 %v2232
  %v2368 = vunpack.c.l.b16 %v2233
  %v2369 = vunpack.c.l.b16 %v2234
  %v2370 = vunpack.c.l.b16 %v2235
  %v2371 = vunpack.c.l.b16 %v2236
  %v2372 = vunpack.c.l.b16 %v2237
  %v2373 = vunpack.c.l.b16 %v2238
  %v2374 = vunpack.c.l.b16 %v2239
  %v2375 = vunpack.c.l.b16 %v2240
  %v2376 = vunpack.c.l.b16 %v2241
  %v2377 = vunpack.c.l.b16 %v2242
  %v2378 = vunpack.c.l.b16 %v2243
  %v2379 = vunpack.c.l.b16 %v2244
  %v2380 = vunpack.c.l.b16 %v2245
  %v2381 = vunpack.c.l.b16 %v2246
  %v2382 = vunpack.c.l.b16 %v2247
  %v2383 = vunpack.c.l.b16 %v2248
  %v2384 = vunpack.c.l.b16 %v2249
  %v2385 = vunpack.c.l.b16 %v2250
  %v2386 = vunpack.c.l.b16 %v2251
  %v2387 = vunpack.c.l.b16 %v2252
  %v2388 = vunpack.c.l.b16 %v2253
  %v2389 = vunpack.c.l.b16 %v2254
  %v2390 = vunpack.c.l.b16 %v2255
  %v2391 = vunpack.c.l.b16 %v2256
  %v2392 = vunpack.c.l.b16 %v2257
  %v2393 = vunpack.c.l.b16 %v2258
  %v2394 = vunpack.c.l.b16 %v2259
  %v2395 = vunpack.c.l.b16 %v2260
  %v2396 = vunpack.c.l.b16 %v2261
  %v2397 = vunpack.c.l.b16 %v2262
  %v2398 = vunpack.c.l.b16 %v2263
  %v2399 = vunpack.c.l.b16 %v2264
  %v2400 = vunpack.c.l.b16 %v2265
  %v2401 = vunpack.c.l.b16 %v2266
  %v2402 = vunpack.c.l.b16 %v2267
  %v2403 = vunpack.c.l.b16 %v2268
  %v2404 = vunpack.c.l.b16 %v2269
  %v2405 = vunpack.c.l.b16 %v2270
  %v2406 = vunpack.c.l.b16 %v2271
  %v2407 = vunpack.c.l.b16 %v2272
  %v2408 = vunpack.c.l.b16 %v2273
  %v2409 = vunpack.c.l.b16 %v2274
  %v2410 = vunpack.c.l.b16 %v2275
  %v2411 = vunpack.c.l.b16 %v2276
  %v2412 = vunpack.c.l.b16 %v2277
  %v2413 = vunpack.c.l.b16 %v2278
  %v2414 = vunpack.c.l.b16 %v2279
  %v2415 = vunpack.c.l.b16 %v2280
  %v2416 = vunpack.c.l.b16 %v2281
  %v2417 = vunpack.c.l.b16 %v2282
  %v2418 = vunpack.c.l.b16 %v2283
  %v2419 = vunpack.c.l.b16 %v2284
  %v2420 = vunpack.c.l.b16 %v2285
  %v2421 = vunpack.c.l.b16 %v2286
  %v2422 = vpack.c.b16 %v2359, %v2358
  %v2423 = vpack.c.b16 %v2361, %v2360
  %v2424 = vpack.c.b16 %v2363, %v2362
  %v2425 = vpack.c.b16 %v2365, %v2364
  %v2426 = vpack.c.b16 %v2367, %v2366
  %v2427 = vpack.c.b16 %v2369, %v2368
  %v2428 = vpack.c.b16 %v2371, %v2370
  %v2429 = vpack.c.b16 %v2373, %v2372
  %v2430 = vpack.c.b16 %v2375, %v2374
  %v2431 = vpack.c.b16 %v2377, %v2376
  %v2432 = vpack.c.b16 %v2379, %v2378
  %v2433 = vpack.c.b16 %v2381, %v2380
  %v2434 = vpack.c.b16 %v2383, %v2382
  %v2435 = vpack.c.b16 %v2385, %v2384
  %v2436 = vpack.c.b16 %v2387, %v2386
  %v2437 = vpack.c.b16 %v2389, %v2388
  %v2438 = vpack.c.b16 %v2391, %v2390
  %v2439 = vpack.c.b16 %v2393, %v2392
  %v2440 = vpack.c.b16 %v2395, %v2394
  %v2441 = vpack.c.b16 %v2397, %v2396
  %v2442 = vpack.c.b16 %v2399, %v2398
  %v2443 = vpack.c.b16 %v2401, %v2400
  %v2444 = vpack.c.b16 %v2403, %v2402
  %v2445 = vpack.c.b16 %v2405, %v2404
  %v2446 = vpack.c.b16 %v2407, %v2406
  %v2447 = vpack.c.b16 %v2409, %v2408
  %v2448 = vpack.c.b16 %v2411, %v2410
  %v2449 = vpack.c.b16 %v2413, %v2412
  %v2450 = vpack.c.b16 %v2415, %v2414
  %v2451 = vpack.c.b16 %v2417, %v2416
  %v2452 = vpack.c.b16 %v2419, %v2418
  %v2453 = vpack.c.b16 %v2421, %v2420
  %2486 = vmatprep.subr.bf16.mxu0 0
  %2487 = vmatpush1.bf16.msra.mxu0 %v2429
  %2488 = vmatprep.subr.bf16.mxu0 0
  %2489 = vmatpush1.bf16.msra.mxu0 %v2428
  %2490 = vmatprep.subr.bf16.mxu0 0
  %2491 = vmatpush1.bf16.msra.mxu0 %v2427
  %2492 = vmatprep.subr.bf16.mxu0 0
  %2493 = vmatpush1.bf16.msra.mxu0 %v2426
  %2494 = vmatprep.subr.bf16.mxu0 0
  %2495 = vmatpush1.bf16.msra.mxu0 %v2425
  %2496 = vmatprep.subr.bf16.mxu0 0
  %2497 = vmatpush1.bf16.msra.mxu0 %v2424
  %2498 = vmatprep.subr.bf16.mxu0 0
  %2499 = vmatpush1.bf16.msra.mxu0 %v2423
  %2500 = vmatprep.subr.bf16.mxu0 0
  %2501 = vmatpush1.bf16.msra.mxu0 %v2422
  %2502 = vmatprep.subr.bf16.mxu0 0
  %2503 = vmatpush2.bf16.msra.mxu0 %v2437
  %2504 = vmatprep.subr.bf16.mxu0 0
  %2505 = vmatpush2.bf16.msra.mxu0 %v2436
  %2506 = vmatprep.subr.bf16.mxu0 0
  %2507 = vmatpush2.bf16.msra.mxu0 %v2435
  %2508 = vmatprep.subr.bf16.mxu0 0
  %2509 = vmatpush2.bf16.msra.mxu0 %v2434
  %2510 = vmatprep.subr.bf16.mxu0 0
  %2511 = vmatpush2.bf16.msra.mxu0 %v2433
  %2512 = vmatprep.subr.bf16.mxu0 0
  %2513 = vmatpush2.bf16.msra.mxu0 %v2432
  %2514 = vmatprep.subr.bf16.mxu0 0
  %2515 = vmatpush2.bf16.msra.mxu0 %v2431
  %2516 = vmatprep.subr.bf16.mxu0 0
  %2517 = vmatpush2.bf16.msra.mxu0 %v2430
  %2518 = vmatprep.mubr.bf16.mxu0 %v2220
  %2519 = vmatmul.mubr.bf16.gmra.mxu0 %v2219
  %v2520 = vpop.f32.mrf.mxu0
  %v2521 = vadd.f32 %v2292, %v2520
  %v2522 = vpop.f32.mrf.mxu0
  %v2523 = vpop.f32.mrf.mxu0
  %v2524 = vadd.f32 %v2292, %v2523
  %v2525 = vpop.f32.mrf.mxu0
  %2526 = vdwg.mxu0
  %2527 = vmatprep.subr.bf16.mxu0 0
  %2528 = vmatpush1.bf16.msra.mxu0 %v2445
  %2529 = vmatprep.subr.bf16.mxu0 0
  %2530 = vmatpush1.bf16.msra.mxu0 %v2444
  %2531 = vmatprep.subr.bf16.mxu0 0
  %2532 = vmatpush1.bf16.msra.mxu0 %v2443
  %2533 = vmatprep.subr.bf16.mxu0 0
  %2534 = vmatpush1.bf16.msra.mxu0 %v2442
  %2535 = vmatprep.subr.bf16.mxu0 0
  %2536 = vmatpush1.bf16.msra.mxu0 %v2441
  %2537 = vmatprep.subr.bf16.mxu0 0
  %2538 = vmatpush1.bf16.msra.mxu0 %v2440
  %2539 = vmatprep.subr.bf16.mxu0 0
  %2540 = vmatpush1.bf16.msra.mxu0 %v2439
  %2541 = vmatprep.subr.bf16.mxu0 0
  %2542 = vmatpush1.bf16.msra.mxu0 %v2438
  %2543 = vmatprep.subr.bf16.mxu0 0
  %2544 = vmatpush2.bf16.msra.mxu0 %v2453
  %2545 = vmatprep.subr.bf16.mxu0 0
  %2546 = vmatpush2.bf16.msra.mxu0 %v2452
  %2547 = vmatprep.subr.bf16.mxu0 0
  %2548 = vmatpush2.bf16.msra.mxu0 %v2451
  %2549 = vmatprep.subr.bf16.mxu0 0
  %2550 = vmatpush2.bf16.msra.mxu0 %v2450
  %2551 = vmatprep.subr.bf16.mxu0 0
  %2552 = vmatpush2.bf16.msra.mxu0 %v2449
  %2553 = vmatprep.subr.bf16.mxu0 0
  %2554 = vmatpush2.bf16.msra.mxu0 %v2448
  %2555 = vmatprep.subr.bf16.mxu0 0
  %2556 = vmatpush2.bf16.msra.mxu0 %v2447
  %2557 = vmatprep.subr.bf16.mxu0 0
  %2558 = vmatpush2.bf16.msra.mxu0 %v2446
  %2559 = vmatprep.mubr.bf16.mxu0 %v2222
  %2560 = vmatmul.mubr.bf16.gmra.mxu0 %v2221
  %v2561 = vpop.f32.mrf.mxu0
  %v2562 = vadd.f32 %v2521, %v2561
  %v2563 = vpop.f32.mrf.mxu0
  %v2564 = vpop.f32.mrf.mxu0
  %v2565 = vadd.f32 %v2524, %v2564
  %v2566 = vpop.f32.mrf.mxu0
  %2567 = vdwg.mxu0
  %2568 = vst [vmem:[%s9] sm:$0xff] %v2562
  %2569 = vst [vmem:[%s9 + $0x8] sm:$0xff] %v2565
  // Predicated region
  $region38: #{dqn_forward.3} parent=0 // pred_check
    _
  $region39: #{dqn_forward.3} parent=0 // pred_check_branch
    %2571 = sbr.rel (0) target = $region41
  $region40: #{dqn_forward.3} parent=0 // pred_region
    _
  $region41: #{dqn_forward.3} parent=0 // pred_fallthru
    _
  // Predicated region
  $region42: #{dqn_forward.3} parent=0 // pred_check
    _
  $region43: #{dqn_forward.3} parent=0 // pred_check_branch
    %2573 = sbr.rel (0) target = $region45
  $region44: #{dqn_forward.3} parent=0 // pred_region
    _
  $region45: #{dqn_forward.3} parent=0 // pred_fallthru
    _

</llo_original>
